<compile_context>
chip_gen: v7x
topology: tpu7x:2x2x1
jax: 0.10.0
libtpu: 0.0.40
codegen_flags: <defaults>
</compile_context>

<pallas_src>
import numpy as np

import jax
import jax.numpy as jnp
from jax.experimental import pallas as pl
from jax.experimental.pallas import tpu as pltpu


NUM_LAYERS = 4


# ---------------------------------------------------------------------------
# Fused kernel: 4x (conv 3x3 s2 p1 + bias + LeakyReLU + BN affine) + head
# ---------------------------------------------------------------------------
def _fused_discriminator_kernel(x_ref, *refs):
    """refs = [R_0, M_0, A_0, ..., R_3, M_3, A_3, w_head, b_head, out]."""
    out_ref = refs[-1]
    b_head_ref = refs[-2]
    w_head_ref = refs[-3]

    a = x_ref[0]                                     # (H, W*Cin) f32, this image
    for l in range(NUM_LAYERS):
        r_ref = refs[3 * l]                          # (3, Ho, H)       f32 (0/1)
        m_ref = refs[3 * l + 1]                      # (3, W*Cin, Wo*Cout) bf16
        aff_ref = refs[3 * l + 2]                    # (3, 1, Wo*Cout)  f32
        ho = r_ref.shape[1]
        wc_out = m_ref.shape[2]

        acc = jnp.zeros((ho, wc_out), jnp.float32)
        for di in range(3):                          # 3x3 conv == 3 matmul pairs
            t = jnp.dot(r_ref[di], a, preferred_element_type=jnp.float32)
            acc = acc + jnp.dot(t.astype(jnp.bfloat16), m_ref[di],
                                preferred_element_type=jnp.float32)

        z = acc + aff_ref[0]                         # conv bias
        z = jnp.where(z >= 0.0, z, 0.2 * z)          # LeakyReLU(0.2); Dropout2d(eval)=id
        a = z * aff_ref[1] + aff_ref[2]              # eval-mode BatchNorm affine

    # Linear(feat -> 1) + Sigmoid as VPU multiply + reduction (1 output lane).
    prod = a * w_head_ref[...]                       # (ds, ds*128)
    logit = jnp.sum(prod, axis=1, keepdims=True)     # (ds, 1)
    logit = jnp.sum(logit, axis=0, keepdims=True)    # (1, 1)
    logit = logit + b_head_ref[...]
    out_ref[0] = 1.0 / (1.0 + jnp.exp(-logit))       # Sigmoid


# ---------------------------------------------------------------------------
# Forward wrapper: one pallas_call, grid over batch
# ---------------------------------------------------------------------------
def discriminator_forward(img_nchw, params):
    layers, w_head, b_head = params
    n, c, h, w = img_nchw.shape
    # NCHW -> (N, H, W*C): row-major NHWC slab, lane index = w*C + c
    x = jnp.transpose(img_nchw, (0, 2, 3, 1)).reshape(n, h, w * c)
    x = x.astype(jnp.float32)

    flat_params = []
    for (r_mat, m_mat, aff) in layers:
        flat_params += [r_mat, m_mat, aff]
    flat_params += [w_head, b_head]

    def _const_spec(arr):
        nd = arr.ndim
        return pl.BlockSpec(arr.shape, lambda b, _nd=nd: (0,) * _nd)

    in_specs = [pl.BlockSpec((1, h, w * c), lambda b: (b, 0, 0))]
    in_specs += [_const_spec(p) for p in flat_params]

    out = pl.pallas_call(
        _fused_discriminator_kernel,
        out_shape=jax.ShapeDtypeStruct((n, 1, 1), jnp.float32),
        grid=(n,),
        in_specs=in_specs,
        out_specs=pl.BlockSpec((1, 1, 1), lambda b: (b, 0, 0)),
        compiler_params=pltpu.CompilerParams(
            dimension_semantics=("parallel",)),
    )(x, *flat_params)
    return out[:, 0, :]                              # (N, 1)


# ---------------------------------------------------------------------------
# Deterministic parameter construction (shapes follow the PyTorch __init__)
# ---------------------------------------------------------------------------
def init_params(key, img_shape):
    c_in, h_img, w_img = img_shape
    cfg = [(c_in, 16, False), (16, 32, True), (32, 64, True), (64, 128, True)]
    keys = jax.random.split(key, 4 * len(cfg) + 2)

    layers = []
    raw_convs = []
    h, w = h_img, w_img
    ki = 0
    for cin, cout, bn in cfg:
        w_conv = jax.random.normal(keys[ki], (cout, cin, 3, 3), jnp.float32) * 0.05
        ki += 1
        b_conv = jax.random.normal(keys[ki], (cout,), jnp.float32) * 0.05
        ki += 1
        if bn:
            gamma = 1.0 + 0.1 * jax.random.normal(keys[ki], (cout,), jnp.float32)
            ki += 1
            beta = 0.1 * jax.random.normal(keys[ki], (cout,), jnp.float32)
            ki += 1
            eps = 0.8                      # nn.BatchNorm2d(out_feat, 0.8) -> eps = 0.8
            scale = gamma / jnp.sqrt(1.0 + eps)     # running_var = 1
            shift = beta                            # running_mean = 0
        else:
            ki += 2
            scale = jnp.ones((cout,), jnp.float32)
            shift = jnp.zeros((cout,), jnp.float32)
        raw_convs.append((w_conv, b_conv, scale, shift))

        ho, wo = h // 2, w // 2

        # R_di[o, h_] = 1  iff  h_ == 2*o + di - 1   (stride 2, pad 1 along H)
        r_np = np.zeros((3, ho, h), np.float32)
        for di in range(3):
            for o in range(ho):
                hh = 2 * o + di - 1
                if 0 <= hh < h:
                    r_np[di, o, hh] = 1.0

        # S[w_, u, dj] = 1  iff  w_ == 2*u + dj - 1  (stride 2, pad 1 along W)
        s_np = np.zeros((w, wo, 3), np.float32)
        for dj in range(3):
            for u in range(wo):
                ww = 2 * u + dj - 1
                if 0 <= ww < w:
                    s_np[ww, u, dj] = 1.0

        # M[di, w_*Cin+ci, u*Cout+co] = sum_dj S[w_, u, dj] * W[co, ci, di, dj]
        m_mat = jnp.einsum('wud,oied->ewiuo', jnp.asarray(s_np), w_conv)
        m_mat = m_mat.reshape(3, w * cin, wo * cout).astype(jnp.bfloat16)

        aff = jnp.stack([jnp.tile(b_conv, wo),
                         jnp.tile(scale, wo),
                         jnp.tile(shift, wo)]).reshape(3, 1, wo * cout)

        layers.append((jnp.asarray(r_np), m_mat, aff))
        h, w = ho, wo

    # adv head: Linear(128*ds*ds -> 1) + Sigmoid.  Fold the NCHW flatten
    # permutation into the weight so the kernel consumes the NHWC-ordered
    # (ho, wo*128) activation directly.
    ds_h, ds_w = h, w
    feat = 128 * ds_h * ds_w
    w_lin = jax.random.normal(keys[ki], (feat, 1), jnp.float32) * 0.05
    ki += 1
    b_lin = jax.random.normal(keys[ki], (1,), jnp.float32) * 0.05

    perm = np.zeros((ds_h, ds_w * 128), np.int32)
    for o in range(ds_h):
        for u in range(ds_w):
            for co in range(128):
                perm[o, u * 128 + co] = co * ds_h * ds_w + o * ds_w + u
    w_head = w_lin[:, 0][jnp.asarray(perm)]          # (ds_h, ds_w*128)
    b_head = b_lin.reshape(1, 1)

    kernel_params = (layers, w_head, b_head)
    raw_params = dict(convs=raw_convs, w_lin=w_lin, b_lin=b_lin)
    return kernel_params, raw_params


# ---------------------------------------------------------------------------
# Pure-JAX f32 reference (for correctness checking only)
# ---------------------------------------------------------------------------
def _reference_forward(img, raw):
    x = img.astype(jnp.float32)
    for (w_conv, b_conv, scale, shift) in raw["convs"]:
        x = jax.lax.conv_general_dilated(
            x, w_conv, window_strides=(2, 2), padding=((1, 1), (1, 1)),
            dimension_numbers=("NCHW", "OIHW", "NCHW"))
        x = x + b_conv[None, :, None, None]
        x = jnp.where(x >= 0, x, 0.2 * x)
        x = x * scale[None, :, None, None] + shift[None, :, None, None]
    flat = x.reshape(x.shape[0], -1)                 # NCHW flatten, as in PyTorch
    z = flat @ raw["w_lin"] + raw["b_lin"]
    return jax.nn.sigmoid(z)


if __name__ == "__main__":
    img_shape = (4, 16, 16)          # (C, H, W); 16 // 2**4 == 1 -> head sees 128 features
    batch = 2

    key = jax.random.PRNGKey(0)
    k_img, k_params = jax.random.split(key)
    img = jax.random.normal(k_img, (batch,) + img_shape, jnp.float32)

    kernel_params, raw_params = init_params(k_params, img_shape)

    forward = jax.jit(discriminator_forward)
    validity = forward(img, kernel_params)
    validity = jax.block_until_ready(validity)

    assert validity.shape == (batch, 1)
    assert bool(jnp.all((validity >= 0.0) & (validity <= 1.0)))

    ref = _reference_forward(img, raw_params)
    assert bool(jnp.allclose(validity, ref, atol=2e-2)), (validity, ref)

    print("KERNEL_OK")
</pallas_src>

<mosaic_0001>
module attributes {stable_mosaic.version = 11 : i64} {
  func.func @_fused_discriminator_kernel(%arg0: i32, %arg1: memref<1x16x64xf32, #tpu.memory_space<vmem>>, %arg2: memref<3x8x16xf32, #tpu.memory_space<vmem>>, %arg3: memref<3x64x128xbf16, #tpu.memory_space<vmem>>, %arg4: memref<3x1x128xf32, #tpu.memory_space<vmem>>, %arg5: memref<3x4x8xf32, #tpu.memory_space<vmem>>, %arg6: memref<3x128x128xbf16, #tpu.memory_space<vmem>>, %arg7: memref<3x1x128xf32, #tpu.memory_space<vmem>>, %arg8: memref<3x2x4xf32, #tpu.memory_space<vmem>>, %arg9: memref<3x128x128xbf16, #tpu.memory_space<vmem>>, %arg10: memref<3x1x128xf32, #tpu.memory_space<vmem>>, %arg11: memref<3x1x2xf32, #tpu.memory_space<vmem>>, %arg12: memref<3x128x128xbf16, #tpu.memory_space<vmem>>, %arg13: memref<3x1x128xf32, #tpu.memory_space<vmem>>, %arg14: memref<1x128xf32, #tpu.memory_space<vmem>>, %arg15: memref<1x1xf32, #tpu.memory_space<vmem>>, %arg16: memref<1x1x1xf32, #tpu.memory_space<vmem>>) attributes {dimension_semantics = [#tpu.dimension_semantics<parallel>], iteration_bounds = array<i64: 2>, scalar_prefetch = 0 : i64, scratch_operands = 0 : i64, tpu.core_type = #tpu.core_type<tc>, window_params = [{transform_indices = @transform_0, window_bounds = array<i64: 1, 16, 64>}, {pipeline_mode = #tpu.pipeline_mode<synchronous>, transform_indices = @transform_1, window_bounds = array<i64: 3, 8, 16>}, {pipeline_mode = #tpu.pipeline_mode<synchronous>, transform_indices = @transform_2, window_bounds = array<i64: 3, 64, 128>}, {pipeline_mode = #tpu.pipeline_mode<synchronous>, transform_indices = @transform_3, window_bounds = array<i64: 3, 1, 128>}, {pipeline_mode = #tpu.pipeline_mode<synchronous>, transform_indices = @transform_4, window_bounds = array<i64: 3, 4, 8>}, {pipeline_mode = #tpu.pipeline_mode<synchronous>, transform_indices = @transform_5, window_bounds = array<i64: 3, 128, 128>}, {pipeline_mode = #tpu.pipeline_mode<synchronous>, transform_indices = @transform_6, window_bounds = array<i64: 3, 1, 128>}, {pipeline_mode = #tpu.pipeline_mode<synchronous>, transform_indices = @transform_7, window_bounds = array<i64: 3, 2, 4>}, {pipeline_mode = #tpu.pipeline_mode<synchronous>, transform_indices = @transform_8, window_bounds = array<i64: 3, 128, 128>}, {pipeline_mode = #tpu.pipeline_mode<synchronous>, transform_indices = @transform_9, window_bounds = array<i64: 3, 1, 128>}, {pipeline_mode = #tpu.pipeline_mode<synchronous>, transform_indices = @transform_10, window_bounds = array<i64: 3, 1, 2>}, {pipeline_mode = #tpu.pipeline_mode<synchronous>, transform_indices = @transform_11, window_bounds = array<i64: 3, 128, 128>}, {pipeline_mode = #tpu.pipeline_mode<synchronous>, transform_indices = @transform_12, window_bounds = array<i64: 3, 1, 128>}, {pipeline_mode = #tpu.pipeline_mode<synchronous>, transform_indices = @transform_13, window_bounds = array<i64: 1, 128>}, {pipeline_mode = #tpu.pipeline_mode<synchronous>, transform_indices = @transform_14, window_bounds = array<i64: 1, 1>}, {transform_indices = @transform_15, window_bounds = array<i64: 1, 1, 1>}]} {
    %c0 = arith.constant 0 : index
    %c0_0 = arith.constant 0 : index
    %c0_1 = arith.constant 0 : index
    %0 = vector.load %arg1[%c0, %c0_0, %c0_1] : memref<1x16x64xf32, #tpu.memory_space<vmem>>, vector<1x16x64xf32>
    %1 = vector.shape_cast %0 : vector<1x16x64xf32> to vector<16x64xf32>
    %cst = arith.constant 0.000000e+00 : f32
    %2 = vector.broadcast %cst : f32 to vector<8x128xf32>
    %c0_2 = arith.constant 0 : index
    %c0_3 = arith.constant 0 : index
    %c0_4 = arith.constant 0 : index
    %3 = vector.load %arg2[%c0_2, %c0_3, %c0_4] : memref<3x8x16xf32, #tpu.memory_space<vmem>>, vector<1x8x16xf32>
    %4 = vector.shape_cast %3 : vector<1x8x16xf32> to vector<8x16xf32>
    %cst_5 = arith.constant dense<0.000000e+00> : vector<8x64xf32>
    %5 = tpu.matmul %4, %1, %cst_5 {dimension_numbers = #tpu.dot_dimension_numbers<[1], [0], [0], [1], [0, 0, 1, 1], [], []>} : vector<8x16xf32>, vector<16x64xf32>, vector<8x64xf32> -> vector<8x64xf32>
    %6 = arith.truncf %5 : vector<8x64xf32> to vector<8x64xbf16>
    %c0_6 = arith.constant 0 : index
    %c0_7 = arith.constant 0 : index
    %c0_8 = arith.constant 0 : index
    %7 = vector.load %arg3[%c0_6, %c0_7, %c0_8] : memref<3x64x128xbf16, #tpu.memory_space<vmem>>, vector<1x64x128xbf16>
    %8 = vector.shape_cast %7 : vector<1x64x128xbf16> to vector<64x128xbf16>
    %cst_9 = arith.constant dense<0.000000e+00> : vector<8x128xf32>
    %9 = tpu.matmul %6, %8, %cst_9 {dimension_numbers = #tpu.dot_dimension_numbers<[1], [0], [0], [1], [0, 0, 1, 1], [], []>} : vector<8x64xbf16>, vector<64x128xbf16>, vector<8x128xf32> -> vector<8x128xf32>
    %10 = arith.addf %2, %9 : vector<8x128xf32>
    %c1 = arith.constant 1 : index
    %c0_10 = arith.constant 0 : index
    %c0_11 = arith.constant 0 : index
    %11 = vector.load %arg2[%c1, %c0_10, %c0_11] : memref<3x8x16xf32, #tpu.memory_space<vmem>>, vector<1x8x16xf32>
    %12 = vector.shape_cast %11 : vector<1x8x16xf32> to vector<8x16xf32>
    %cst_12 = arith.constant dense<0.000000e+00> : vector<8x64xf32>
    %13 = tpu.matmul %12, %1, %cst_12 {dimension_numbers = #tpu.dot_dimension_numbers<[1], [0], [0], [1], [0, 0, 1, 1], [], []>} : vector<8x16xf32>, vector<16x64xf32>, vector<8x64xf32> -> vector<8x64xf32>
    %14 = arith.truncf %13 : vector<8x64xf32> to vector<8x64xbf16>
    %c1_13 = arith.constant 1 : index
    %c0_14 = arith.constant 0 : index
    %c0_15 = arith.constant 0 : index
    %15 = vector.load %arg3[%c1_13, %c0_14, %c0_15] : memref<3x64x128xbf16, #tpu.memory_space<vmem>>, vector<1x64x128xbf16>
    %16 = vector.shape_cast %15 : vector<1x64x128xbf16> to vector<64x128xbf16>
    %cst_16 = arith.constant dense<0.000000e+00> : vector<8x128xf32>
    %17 = tpu.matmul %14, %16, %cst_16 {dimension_numbers = #tpu.dot_dimension_numbers<[1], [0], [0], [1], [0, 0, 1, 1], [], []>} : vector<8x64xbf16>, vector<64x128xbf16>, vector<8x128xf32> -> vector<8x128xf32>
    %18 = arith.addf %10, %17 : vector<8x128xf32>
    %c2 = arith.constant 2 : index
    %c0_17 = arith.constant 0 : index
    %c0_18 = arith.constant 0 : index
    %19 = vector.load %arg2[%c2, %c0_17, %c0_18] : memref<3x8x16xf32, #tpu.memory_space<vmem>>, vector<1x8x16xf32>
    %20 = vector.shape_cast %19 : vector<1x8x16xf32> to vector<8x16xf32>
    %cst_19 = arith.constant dense<0.000000e+00> : vector<8x64xf32>
    %21 = tpu.matmul %20, %1, %cst_19 {dimension_numbers = #tpu.dot_dimension_numbers<[1], [0], [0], [1], [0, 0, 1, 1], [], []>} : vector<8x16xf32>, vector<16x64xf32>, vector<8x64xf32> -> vector<8x64xf32>
    %22 = arith.truncf %21 : vector<8x64xf32> to vector<8x64xbf16>
    %c2_20 = arith.constant 2 : index
    %c0_21 = arith.constant 0 : index
    %c0_22 = arith.constant 0 : index
    %23 = vector.load %arg3[%c2_20, %c0_21, %c0_22] : memref<3x64x128xbf16, #tpu.memory_space<vmem>>, vector<1x64x128xbf16>
    %24 = vector.shape_cast %23 : vector<1x64x128xbf16> to vector<64x128xbf16>
    %cst_23 = arith.constant dense<0.000000e+00> : vector<8x128xf32>
    %25 = tpu.matmul %22, %24, %cst_23 {dimension_numbers = #tpu.dot_dimension_numbers<[1], [0], [0], [1], [0, 0, 1, 1], [], []>} : vector<8x64xbf16>, vector<64x128xbf16>, vector<8x128xf32> -> vector<8x128xf32>
    %26 = arith.addf %18, %25 : vector<8x128xf32>
    %c0_24 = arith.constant 0 : index
    %c0_25 = arith.constant 0 : index
    %c0_26 = arith.constant 0 : index
    %27 = vector.load %arg4[%c0_24, %c0_25, %c0_26] : memref<3x1x128xf32, #tpu.memory_space<vmem>>, vector<1x1x128xf32>
    %28 = vector.shape_cast %27 : vector<1x1x128xf32> to vector<1x128xf32>
    %29 = vector.broadcast %28 : vector<1x128xf32> to vector<8x128xf32>
    %30 = arith.addf %26, %29 : vector<8x128xf32>
    %cst_27 = arith.constant 0.000000e+00 : f32
    %31 = vector.broadcast %cst_27 : f32 to vector<8x128xf32>
    %32 = arith.cmpf oge, %30, %31 : vector<8x128xf32>
    %cst_28 = arith.constant 2.000000e-01 : f32
    %33 = vector.broadcast %cst_28 : f32 to vector<8x128xf32>
    %34 = arith.mulf %33, %30 : vector<8x128xf32>
    %35 = arith.select %32, %30, %34 : vector<8x128xi1>, vector<8x128xf32>
    %c1_29 = arith.constant 1 : index
    %c0_30 = arith.constant 0 : index
    %c0_31 = arith.constant 0 : index
    %36 = vector.load %arg4[%c1_29, %c0_30, %c0_31] : memref<3x1x128xf32, #tpu.memory_space<vmem>>, vector<1x1x128xf32>
    %37 = vector.shape_cast %36 : vector<1x1x128xf32> to vector<1x128xf32>
    %38 = vector.broadcast %37 : vector<1x128xf32> to vector<8x128xf32>
    %39 = arith.mulf %35, %38 : vector<8x128xf32>
    %c2_32 = arith.constant 2 : index
    %c0_33 = arith.constant 0 : index
    %c0_34 = arith.constant 0 : index
    %40 = vector.load %arg4[%c2_32, %c0_33, %c0_34] : memref<3x1x128xf32, #tpu.memory_space<vmem>>, vector<1x1x128xf32>
    %41 = vector.shape_cast %40 : vector<1x1x128xf32> to vector<1x128xf32>
    %42 = vector.broadcast %41 : vector<1x128xf32> to vector<8x128xf32>
    %43 = arith.addf %39, %42 : vector<8x128xf32>
    %cst_35 = arith.constant 0.000000e+00 : f32
    %44 = vector.broadcast %cst_35 : f32 to vector<4x128xf32>
    %c0_36 = arith.constant 0 : index
    %c0_37 = arith.constant 0 : index
    %c0_38 = arith.constant 0 : index
    %45 = vector.load %arg5[%c0_36, %c0_37, %c0_38] : memref<3x4x8xf32, #tpu.memory_space<vmem>>, vector<1x4x8xf32>
    %46 = vector.shape_cast %45 : vector<1x4x8xf32> to vector<4x8xf32>
    %cst_39 = arith.constant dense<0.000000e+00> : vector<4x128xf32>
    %47 = tpu.matmul %46, %43, %cst_39 {dimension_numbers = #tpu.dot_dimension_numbers<[1], [0], [0], [1], [0, 0, 1, 1], [], []>} : vector<4x8xf32>, vector<8x128xf32>, vector<4x128xf32> -> vector<4x128xf32>
    %48 = arith.truncf %47 : vector<4x128xf32> to vector<4x128xbf16>
    %c0_40 = arith.constant 0 : index
    %c0_41 = arith.constant 0 : index
    %c0_42 = arith.constant 0 : index
    %49 = vector.load %arg6[%c0_40, %c0_41, %c0_42] : memref<3x128x128xbf16, #tpu.memory_space<vmem>>, vector<1x128x128xbf16>
    %50 = vector.shape_cast %49 : vector<1x128x128xbf16> to vector<128x128xbf16>
    %cst_43 = arith.constant dense<0.000000e+00> : vector<4x128xf32>
    %51 = tpu.matmul %48, %50, %cst_43 {dimension_numbers = #tpu.dot_dimension_numbers<[1], [0], [0], [1], [0, 0, 1, 1], [], []>} : vector<4x128xbf16>, vector<128x128xbf16>, vector<4x128xf32> -> vector<4x128xf32>
    %52 = arith.addf %44, %51 : vector<4x128xf32>
    %c1_44 = arith.constant 1 : index
    %c0_45 = arith.constant 0 : index
    %c0_46 = arith.constant 0 : index
    %53 = vector.load %arg5[%c1_44, %c0_45, %c0_46] : memref<3x4x8xf32, #tpu.memory_space<vmem>>, vector<1x4x8xf32>
    %54 = vector.shape_cast %53 : vector<1x4x8xf32> to vector<4x8xf32>
    %cst_47 = arith.constant dense<0.000000e+00> : vector<4x128xf32>
    %55 = tpu.matmul %54, %43, %cst_47 {dimension_numbers = #tpu.dot_dimension_numbers<[1], [0], [0], [1], [0, 0, 1, 1], [], []>} : vector<4x8xf32>, vector<8x128xf32>, vector<4x128xf32> -> vector<4x128xf32>
    %56 = arith.truncf %55 : vector<4x128xf32> to vector<4x128xbf16>
    %c1_48 = arith.constant 1 : index
    %c0_49 = arith.constant 0 : index
    %c0_50 = arith.constant 0 : index
    %57 = vector.load %arg6[%c1_48, %c0_49, %c0_50] : memref<3x128x128xbf16, #tpu.memory_space<vmem>>, vector<1x128x128xbf16>
    %58 = vector.shape_cast %57 : vector<1x128x128xbf16> to vector<128x128xbf16>
    %cst_51 = arith.constant dense<0.000000e+00> : vector<4x128xf32>
    %59 = tpu.matmul %56, %58, %cst_51 {dimension_numbers = #tpu.dot_dimension_numbers<[1], [0], [0], [1], [0, 0, 1, 1], [], []>} : vector<4x128xbf16>, vector<128x128xbf16>, vector<4x128xf32> -> vector<4x128xf32>
    %60 = arith.addf %52, %59 : vector<4x128xf32>
    %c2_52 = arith.constant 2 : index
    %c0_53 = arith.constant 0 : index
    %c0_54 = arith.constant 0 : index
    %61 = vector.load %arg5[%c2_52, %c0_53, %c0_54] : memref<3x4x8xf32, #tpu.memory_space<vmem>>, vector<1x4x8xf32>
    %62 = vector.shape_cast %61 : vector<1x4x8xf32> to vector<4x8xf32>
    %cst_55 = arith.constant dense<0.000000e+00> : vector<4x128xf32>
    %63 = tpu.matmul %62, %43, %cst_55 {dimension_numbers = #tpu.dot_dimension_numbers<[1], [0], [0], [1], [0, 0, 1, 1], [], []>} : vector<4x8xf32>, vector<8x128xf32>, vector<4x128xf32> -> vector<4x128xf32>
    %64 = arith.truncf %63 : vector<4x128xf32> to vector<4x128xbf16>
    %c2_56 = arith.constant 2 : index
    %c0_57 = arith.constant 0 : index
    %c0_58 = arith.constant 0 : index
    %65 = vector.load %arg6[%c2_56, %c0_57, %c0_58] : memref<3x128x128xbf16, #tpu.memory_space<vmem>>, vector<1x128x128xbf16>
    %66 = vector.shape_cast %65 : vector<1x128x128xbf16> to vector<128x128xbf16>
    %cst_59 = arith.constant dense<0.000000e+00> : vector<4x128xf32>
    %67 = tpu.matmul %64, %66, %cst_59 {dimension_numbers = #tpu.dot_dimension_numbers<[1], [0], [0], [1], [0, 0, 1, 1], [], []>} : vector<4x128xbf16>, vector<128x128xbf16>, vector<4x128xf32> -> vector<4x128xf32>
    %68 = arith.addf %60, %67 : vector<4x128xf32>
    %c0_60 = arith.constant 0 : index
    %c0_61 = arith.constant 0 : index
    %c0_62 = arith.constant 0 : index
    %69 = vector.load %arg7[%c0_60, %c0_61, %c0_62] : memref<3x1x128xf32, #tpu.memory_space<vmem>>, vector<1x1x128xf32>
    %70 = vector.shape_cast %69 : vector<1x1x128xf32> to vector<1x128xf32>
    %71 = vector.broadcast %70 : vector<1x128xf32> to vector<4x128xf32>
    %72 = arith.addf %68, %71 : vector<4x128xf32>
    %cst_63 = arith.constant 0.000000e+00 : f32
    %73 = vector.broadcast %cst_63 : f32 to vector<4x128xf32>
    %74 = arith.cmpf oge, %72, %73 : vector<4x128xf32>
    %cst_64 = arith.constant 2.000000e-01 : f32
    %75 = vector.broadcast %cst_64 : f32 to vector<4x128xf32>
    %76 = arith.mulf %75, %72 : vector<4x128xf32>
    %77 = arith.select %74, %72, %76 : vector<4x128xi1>, vector<4x128xf32>
    %c1_65 = arith.constant 1 : index
    %c0_66 = arith.constant 0 : index
    %c0_67 = arith.constant 0 : index
    %78 = vector.load %arg7[%c1_65, %c0_66, %c0_67] : memref<3x1x128xf32, #tpu.memory_space<vmem>>, vector<1x1x128xf32>
    %79 = vector.shape_cast %78 : vector<1x1x128xf32> to vector<1x128xf32>
    %80 = vector.broadcast %79 : vector<1x128xf32> to vector<4x128xf32>
    %81 = arith.mulf %77, %80 : vector<4x128xf32>
    %c2_68 = arith.constant 2 : index
    %c0_69 = arith.constant 0 : index
    %c0_70 = arith.constant 0 : index
    %82 = vector.load %arg7[%c2_68, %c0_69, %c0_70] : memref<3x1x128xf32, #tpu.memory_space<vmem>>, vector<1x1x128xf32>
    %83 = vector.shape_cast %82 : vector<1x1x128xf32> to vector<1x128xf32>
    %84 = vector.broadcast %83 : vector<1x128xf32> to vector<4x128xf32>
    %85 = arith.addf %81, %84 : vector<4x128xf32>
    %cst_71 = arith.constant 0.000000e+00 : f32
    %86 = vector.broadcast %cst_71 : f32 to vector<2x128xf32>
    %c0_72 = arith.constant 0 : index
    %c0_73 = arith.constant 0 : index
    %c0_74 = arith.constant 0 : index
    %87 = vector.load %arg8[%c0_72, %c0_73, %c0_74] : memref<3x2x4xf32, #tpu.memory_space<vmem>>, vector<1x2x4xf32>
    %88 = vector.shape_cast %87 : vector<1x2x4xf32> to vector<2x4xf32>
    %cst_75 = arith.constant dense<0.000000e+00> : vector<2x128xf32>
    %89 = tpu.matmul %88, %85, %cst_75 {dimension_numbers = #tpu.dot_dimension_numbers<[1], [0], [0], [1], [0, 0, 1, 1], [], []>} : vector<2x4xf32>, vector<4x128xf32>, vector<2x128xf32> -> vector<2x128xf32>
    %90 = arith.truncf %89 : vector<2x128xf32> to vector<2x128xbf16>
    %c0_76 = arith.constant 0 : index
    %c0_77 = arith.constant 0 : index
    %c0_78 = arith.constant 0 : index
    %91 = vector.load %arg9[%c0_76, %c0_77, %c0_78] : memref<3x128x128xbf16, #tpu.memory_space<vmem>>, vector<1x128x128xbf16>
    %92 = vector.shape_cast %91 : vector<1x128x128xbf16> to vector<128x128xbf16>
    %cst_79 = arith.constant dense<0.000000e+00> : vector<2x128xf32>
    %93 = tpu.matmul %90, %92, %cst_79 {dimension_numbers = #tpu.dot_dimension_numbers<[1], [0], [0], [1], [0, 0, 1, 1], [], []>} : vector<2x128xbf16>, vector<128x128xbf16>, vector<2x128xf32> -> vector<2x128xf32>
    %94 = arith.addf %86, %93 : vector<2x128xf32>
    %c1_80 = arith.constant 1 : index
    %c0_81 = arith.constant 0 : index
    %c0_82 = arith.constant 0 : index
    %95 = vector.load %arg8[%c1_80, %c0_81, %c0_82] : memref<3x2x4xf32, #tpu.memory_space<vmem>>, vector<1x2x4xf32>
    %96 = vector.shape_cast %95 : vector<1x2x4xf32> to vector<2x4xf32>
    %cst_83 = arith.constant dense<0.000000e+00> : vector<2x128xf32>
    %97 = tpu.matmul %96, %85, %cst_83 {dimension_numbers = #tpu.dot_dimension_numbers<[1], [0], [0], [1], [0, 0, 1, 1], [], []>} : vector<2x4xf32>, vector<4x128xf32>, vector<2x128xf32> -> vector<2x128xf32>
    %98 = arith.truncf %97 : vector<2x128xf32> to vector<2x128xbf16>
    %c1_84 = arith.constant 1 : index
    %c0_85 = arith.constant 0 : index
    %c0_86 = arith.constant 0 : index
    %99 = vector.load %arg9[%c1_84, %c0_85, %c0_86] : memref<3x128x128xbf16, #tpu.memory_space<vmem>>, vector<1x128x128xbf16>
    %100 = vector.shape_cast %99 : vector<1x128x128xbf16> to vector<128x128xbf16>
    %cst_87 = arith.constant dense<0.000000e+00> : vector<2x128xf32>
    %101 = tpu.matmul %98, %100, %cst_87 {dimension_numbers = #tpu.dot_dimension_numbers<[1], [0], [0], [1], [0, 0, 1, 1], [], []>} : vector<2x128xbf16>, vector<128x128xbf16>, vector<2x128xf32> -> vector<2x128xf32>
    %102 = arith.addf %94, %101 : vector<2x128xf32>
    %c2_88 = arith.constant 2 : index
    %c0_89 = arith.constant 0 : index
    %c0_90 = arith.constant 0 : index
    %103 = vector.load %arg8[%c2_88, %c0_89, %c0_90] : memref<3x2x4xf32, #tpu.memory_space<vmem>>, vector<1x2x4xf32>
    %104 = vector.shape_cast %103 : vector<1x2x4xf32> to vector<2x4xf32>
    %cst_91 = arith.constant dense<0.000000e+00> : vector<2x128xf32>
    %105 = tpu.matmul %104, %85, %cst_91 {dimension_numbers = #tpu.dot_dimension_numbers<[1], [0], [0], [1], [0, 0, 1, 1], [], []>} : vector<2x4xf32>, vector<4x128xf32>, vector<2x128xf32> -> vector<2x128xf32>
    %106 = arith.truncf %105 : vector<2x128xf32> to vector<2x128xbf16>
    %c2_92 = arith.constant 2 : index
    %c0_93 = arith.constant 0 : index
    %c0_94 = arith.constant 0 : index
    %107 = vector.load %arg9[%c2_92, %c0_93, %c0_94] : memref<3x128x128xbf16, #tpu.memory_space<vmem>>, vector<1x128x128xbf16>
    %108 = vector.shape_cast %107 : vector<1x128x128xbf16> to vector<128x128xbf16>
    %cst_95 = arith.constant dense<0.000000e+00> : vector<2x128xf32>
    %109 = tpu.matmul %106, %108, %cst_95 {dimension_numbers = #tpu.dot_dimension_numbers<[1], [0], [0], [1], [0, 0, 1, 1], [], []>} : vector<2x128xbf16>, vector<128x128xbf16>, vector<2x128xf32> -> vector<2x128xf32>
    %110 = arith.addf %102, %109 : vector<2x128xf32>
    %c0_96 = arith.constant 0 : index
    %c0_97 = arith.constant 0 : index
    %c0_98 = arith.constant 0 : index
    %111 = vector.load %arg10[%c0_96, %c0_97, %c0_98] : memref<3x1x128xf32, #tpu.memory_space<vmem>>, vector<1x1x128xf32>
    %112 = vector.shape_cast %111 : vector<1x1x128xf32> to vector<1x128xf32>
    %113 = vector.broadcast %112 : vector<1x128xf32> to vector<2x128xf32>
    %114 = arith.addf %110, %113 : vector<2x128xf32>
    %cst_99 = arith.constant 0.000000e+00 : f32
    %115 = vector.broadcast %cst_99 : f32 to vector<2x128xf32>
    %116 = arith.cmpf oge, %114, %115 : vector<2x128xf32>
    %cst_100 = arith.constant 2.000000e-01 : f32
    %117 = vector.broadcast %cst_100 : f32 to vector<2x128xf32>
    %118 = arith.mulf %117, %114 : vector<2x128xf32>
    %119 = arith.select %116, %114, %118 : vector<2x128xi1>, vector<2x128xf32>
    %c1_101 = arith.constant 1 : index
    %c0_102 = arith.constant 0 : index
    %c0_103 = arith.constant 0 : index
    %120 = vector.load %arg10[%c1_101, %c0_102, %c0_103] : memref<3x1x128xf32, #tpu.memory_space<vmem>>, vector<1x1x128xf32>
    %121 = vector.shape_cast %120 : vector<1x1x128xf32> to vector<1x128xf32>
    %122 = vector.broadcast %121 : vector<1x128xf32> to vector<2x128xf32>
    %123 = arith.mulf %119, %122 : vector<2x128xf32>
    %c2_104 = arith.constant 2 : index
    %c0_105 = arith.constant 0 : index
    %c0_106 = arith.constant 0 : index
    %124 = vector.load %arg10[%c2_104, %c0_105, %c0_106] : memref<3x1x128xf32, #tpu.memory_space<vmem>>, vector<1x1x128xf32>
    %125 = vector.shape_cast %124 : vector<1x1x128xf32> to vector<1x128xf32>
    %126 = vector.broadcast %125 : vector<1x128xf32> to vector<2x128xf32>
    %127 = arith.addf %123, %126 : vector<2x128xf32>
    %cst_107 = arith.constant 0.000000e+00 : f32
    %128 = vector.broadcast %cst_107 : f32 to vector<1x128xf32>
    %c0_108 = arith.constant 0 : index
    %c0_109 = arith.constant 0 : index
    %c0_110 = arith.constant 0 : index
    %129 = vector.load %arg11[%c0_108, %c0_109, %c0_110] : memref<3x1x2xf32, #tpu.memory_space<vmem>>, vector<1x1x2xf32>
    %130 = vector.shape_cast %129 : vector<1x1x2xf32> to vector<1x2xf32>
    %cst_111 = arith.constant dense<0.000000e+00> : vector<1x128xf32>
    %131 = tpu.matmul %130, %127, %cst_111 {dimension_numbers = #tpu.dot_dimension_numbers<[1], [0], [0], [1], [0, 0, 1, 1], [], []>} : vector<1x2xf32>, vector<2x128xf32>, vector<1x128xf32> -> vector<1x128xf32>
    %132 = arith.truncf %131 : vector<1x128xf32> to vector<1x128xbf16>
    %c0_112 = arith.constant 0 : index
    %c0_113 = arith.constant 0 : index
    %c0_114 = arith.constant 0 : index
    %133 = vector.load %arg12[%c0_112, %c0_113, %c0_114] : memref<3x128x128xbf16, #tpu.memory_space<vmem>>, vector<1x128x128xbf16>
    %134 = vector.shape_cast %133 : vector<1x128x128xbf16> to vector<128x128xbf16>
    %cst_115 = arith.constant dense<0.000000e+00> : vector<1x128xf32>
    %135 = tpu.matmul %132, %134, %cst_115 {dimension_numbers = #tpu.dot_dimension_numbers<[1], [0], [0], [1], [0, 0, 1, 1], [], []>} : vector<1x128xbf16>, vector<128x128xbf16>, vector<1x128xf32> -> vector<1x128xf32>
    %136 = arith.addf %128, %135 : vector<1x128xf32>
    %c1_116 = arith.constant 1 : index
    %c0_117 = arith.constant 0 : index
    %c0_118 = arith.constant 0 : index
    %137 = vector.load %arg11[%c1_116, %c0_117, %c0_118] : memref<3x1x2xf32, #tpu.memory_space<vmem>>, vector<1x1x2xf32>
    %138 = vector.shape_cast %137 : vector<1x1x2xf32> to vector<1x2xf32>
    %cst_119 = arith.constant dense<0.000000e+00> : vector<1x128xf32>
    %139 = tpu.matmul %138, %127, %cst_119 {dimension_numbers = #tpu.dot_dimension_numbers<[1], [0], [0], [1], [0, 0, 1, 1], [], []>} : vector<1x2xf32>, vector<2x128xf32>, vector<1x128xf32> -> vector<1x128xf32>
    %140 = arith.truncf %139 : vector<1x128xf32> to vector<1x128xbf16>
    %c1_120 = arith.constant 1 : index
    %c0_121 = arith.constant 0 : index
    %c0_122 = arith.constant 0 : index
    %141 = vector.load %arg12[%c1_120, %c0_121, %c0_122] : memref<3x128x128xbf16, #tpu.memory_space<vmem>>, vector<1x128x128xbf16>
    %142 = vector.shape_cast %141 : vector<1x128x128xbf16> to vector<128x128xbf16>
    %cst_123 = arith.constant dense<0.000000e+00> : vector<1x128xf32>
    %143 = tpu.matmul %140, %142, %cst_123 {dimension_numbers = #tpu.dot_dimension_numbers<[1], [0], [0], [1], [0, 0, 1, 1], [], []>} : vector<1x128xbf16>, vector<128x128xbf16>, vector<1x128xf32> -> vector<1x128xf32>
    %144 = arith.addf %136, %143 : vector<1x128xf32>
    %c2_124 = arith.constant 2 : index
    %c0_125 = arith.constant 0 : index
    %c0_126 = arith.constant 0 : index
    %145 = vector.load %arg11[%c2_124, %c0_125, %c0_126] : memref<3x1x2xf32, #tpu.memory_space<vmem>>, vector<1x1x2xf32>
    %146 = vector.shape_cast %145 : vector<1x1x2xf32> to vector<1x2xf32>
    %cst_127 = arith.constant dense<0.000000e+00> : vector<1x128xf32>
    %147 = tpu.matmul %146, %127, %cst_127 {dimension_numbers = #tpu.dot_dimension_numbers<[1], [0], [0], [1], [0, 0, 1, 1], [], []>} : vector<1x2xf32>, vector<2x128xf32>, vector<1x128xf32> -> vector<1x128xf32>
    %148 = arith.truncf %147 : vector<1x128xf32> to vector<1x128xbf16>
    %c2_128 = arith.constant 2 : index
    %c0_129 = arith.constant 0 : index
    %c0_130 = arith.constant 0 : index
    %149 = vector.load %arg12[%c2_128, %c0_129, %c0_130] : memref<3x128x128xbf16, #tpu.memory_space<vmem>>, vector<1x128x128xbf16>
    %150 = vector.shape_cast %149 : vector<1x128x128xbf16> to vector<128x128xbf16>
    %cst_131 = arith.constant dense<0.000000e+00> : vector<1x128xf32>
    %151 = tpu.matmul %148, %150, %cst_131 {dimension_numbers = #tpu.dot_dimension_numbers<[1], [0], [0], [1], [0, 0, 1, 1], [], []>} : vector<1x128xbf16>, vector<128x128xbf16>, vector<1x128xf32> -> vector<1x128xf32>
    %152 = arith.addf %144, %151 : vector<1x128xf32>
    %c0_132 = arith.constant 0 : index
    %c0_133 = arith.constant 0 : index
    %c0_134 = arith.constant 0 : index
    %153 = vector.load %arg13[%c0_132, %c0_133, %c0_134] : memref<3x1x128xf32, #tpu.memory_space<vmem>>, vector<1x1x128xf32>
    %154 = vector.shape_cast %153 : vector<1x1x128xf32> to vector<1x128xf32>
    %155 = arith.addf %152, %154 : vector<1x128xf32>
    %cst_135 = arith.constant 0.000000e+00 : f32
    %156 = vector.broadcast %cst_135 : f32 to vector<1x128xf32>
    %157 = arith.cmpf oge, %155, %156 : vector<1x128xf32>
    %cst_136 = arith.constant 2.000000e-01 : f32
    %158 = vector.broadcast %cst_136 : f32 to vector<1x128xf32>
    %159 = arith.mulf %158, %155 : vector<1x128xf32>
    %160 = arith.select %157, %155, %159 : vector<1x128xi1>, vector<1x128xf32>
    %c1_137 = arith.constant 1 : index
    %c0_138 = arith.constant 0 : index
    %c0_139 = arith.constant 0 : index
    %161 = vector.load %arg13[%c1_137, %c0_138, %c0_139] : memref<3x1x128xf32, #tpu.memory_space<vmem>>, vector<1x1x128xf32>
    %162 = vector.shape_cast %161 : vector<1x1x128xf32> to vector<1x128xf32>
    %163 = arith.mulf %160, %162 : vector<1x128xf32>
    %c2_140 = arith.constant 2 : index
    %c0_141 = arith.constant 0 : index
    %c0_142 = arith.constant 0 : index
    %164 = vector.load %arg13[%c2_140, %c0_141, %c0_142] : memref<3x1x128xf32, #tpu.memory_space<vmem>>, vector<1x1x128xf32>
    %165 = vector.shape_cast %164 : vector<1x1x128xf32> to vector<1x128xf32>
    %166 = arith.addf %163, %165 : vector<1x128xf32>
    %c0_143 = arith.constant 0 : index
    %c0_144 = arith.constant 0 : index
    %167 = vector.load %arg14[%c0_143, %c0_144] : memref<1x128xf32, #tpu.memory_space<vmem>>, vector<1x128xf32>
    %168 = arith.mulf %166, %167 : vector<1x128xf32>
    %cst_145 = arith.constant dense<0.000000e+00> : vector<1xf32>
    %169 = vector.multi_reduction <add>, %168, %cst_145 [1] : vector<1x128xf32> to vector<1xf32>
    %170 = vector.shape_cast %169 : vector<1xf32> to vector<1x1xf32>
    %cst_146 = arith.constant dense<0.000000e+00> : vector<1xf32>
    %171 = vector.multi_reduction <add>, %170, %cst_146 [0] : vector<1x1xf32> to vector<1xf32>
    %172 = vector.shape_cast %171 : vector<1xf32> to vector<1x1xf32>
    %c0_147 = arith.constant 0 : index
    %c0_148 = arith.constant 0 : index
    %173 = vector.load %arg15[%c0_147, %c0_148] : memref<1x1xf32, #tpu.memory_space<vmem>>, vector<1x1xf32>
    %174 = arith.addf %172, %173 : vector<1x1xf32>
    %cst_149 = arith.constant 0.000000e+00 : f32
    %175 = vector.broadcast %cst_149 : f32 to vector<1x1xf32>
    %176 = arith.subf %175, %174 : vector<1x1xf32>
    %177 = math.exp %176 : vector<1x1xf32>
    %cst_150 = arith.constant 1.000000e+00 : f32
    %178 = vector.broadcast %cst_150 : f32 to vector<1x1xf32>
    %179 = arith.addf %178, %177 : vector<1x1xf32>
    %cst_151 = arith.constant 1.000000e+00 : f32
    %180 = vector.broadcast %cst_151 : f32 to vector<1x1xf32>
    %181 = arith.divf %180, %179 : vector<1x1xf32>
    %c0_152 = arith.constant 0 : index
    %c0_153 = arith.constant 0 : index
    %c0_154 = arith.constant 0 : index
    %182 = vector.load %arg16[%c0_152, %c0_153, %c0_154] : memref<1x1x1xf32, #tpu.memory_space<vmem>>, vector<1x1x1xf32>
    %183 = vector.shape_cast %182 : vector<1x1x1xf32> to vector<1x1xf32>
    %184 = vector.shape_cast %181 : vector<1x1xf32> to vector<1x1x1xf32>
    tpu.vector_store %arg16[%c0_152, %c0_153, %c0_154], %184 {strides = array<i32>} : memref<1x1x1xf32, #tpu.memory_space<vmem>>, vector<1x1x1xf32>,
    return
  }
  func.func @transform_0(%arg0: i32) -> (i32, i32, i32) {
    %c0_i32 = arith.constant 0 : i32
    %c0_i32_0 = arith.constant 0 : i32
    %c0_i32_1 = arith.constant 0 : i32
    return %arg0, %c0_i32, %c0_i32_0 : i32, i32, i32
  }
  func.func @transform_1(%arg0: i32) -> (i32, i32, i32) {
    %c0_i32 = arith.constant 0 : i32
    %c0_i32_0 = arith.constant 0 : i32
    %c0_i32_1 = arith.constant 0 : i32
    %c0_i32_2 = arith.constant 0 : i32
    return %c0_i32, %c0_i32_0, %c0_i32_1 : i32, i32, i32
  }
  func.func @transform_2(%arg0: i32) -> (i32, i32, i32) {
    %c0_i32 = arith.constant 0 : i32
    %c0_i32_0 = arith.constant 0 : i32
    %c0_i32_1 = arith.constant 0 : i32
    %c0_i32_2 = arith.constant 0 : i32
    return %c0_i32, %c0_i32_0, %c0_i32_1 : i32, i32, i32
  }
  func.func @transform_3(%arg0: i32) -> (i32, i32, i32) {
    %c0_i32 = arith.constant 0 : i32
    %c0_i32_0 = arith.constant 0 : i32
    %c0_i32_1 = arith.constant 0 : i32
    %c0_i32_2 = arith.constant 0 : i32
    return %c0_i32, %c0_i32_0, %c0_i32_1 : i32, i32, i32
  }
  func.func @transform_4(%arg0: i32) -> (i32, i32, i32) {
    %c0_i32 = arith.constant 0 : i32
    %c0_i32_0 = arith.constant 0 : i32
    %c0_i32_1 = arith.constant 0 : i32
    %c0_i32_2 = arith.constant 0 : i32
    return %c0_i32, %c0_i32_0, %c0_i32_1 : i32, i32, i32
  }
  func.func @transform_5(%arg0: i32) -> (i32, i32, i32) {
    %c0_i32 = arith.constant 0 : i32
    %c0_i32_0 = arith.constant 0 : i32
    %c0_i32_1 = arith.constant 0 : i32
    %c0_i32_2 = arith.constant 0 : i32
    return %c0_i32, %c0_i32_0, %c0_i32_1 : i32, i32, i32
  }
  func.func @transform_6(%arg0: i32) -> (i32, i32, i32) {
    %c0_i32 = arith.constant 0 : i32
    %c0_i32_0 = arith.constant 0 : i32
    %c0_i32_1 = arith.constant 0 : i32
    %c0_i32_2 = arith.constant 0 : i32
    return %c0_i32, %c0_i32_0, %c0_i32_1 : i32, i32, i32
  }
  func.func @transform_7(%arg0: i32) -> (i32, i32, i32) {
    %c0_i32 = arith.constant 0 : i32
    %c0_i32_0 = arith.constant 0 : i32
    %c0_i32_1 = arith.constant 0 : i32
    %c0_i32_2 = arith.constant 0 : i32
    return %c0_i32, %c0_i32_0, %c0_i32_1 : i32, i32, i32
  }
  func.func @transform_8(%arg0: i32) -> (i32, i32, i32) {
    %c0_i32 = arith.constant 0 : i32
    %c0_i32_0 = arith.constant 0 : i32
    %c0_i32_1 = arith.constant 0 : i32
    %c0_i32_2 = arith.constant 0 : i32
    return %c0_i32, %c0_i32_0, %c0_i32_1 : i32, i32, i32
  }
  func.func @transform_9(%arg0: i32) -> (i32, i32, i32) {
    %c0_i32 = arith.constant 0 : i32
    %c0_i32_0 = arith.constant 0 : i32
    %c0_i32_1 = arith.constant 0 : i32
    %c0_i32_2 = arith.constant 0 : i32
    return %c0_i32, %c0_i32_0, %c0_i32_1 : i32, i32, i32
  }
  func.func @transform_10(%arg0: i32) -> (i32, i32, i32) {
    %c0_i32 = arith.constant 0 : i32
    %c0_i32_0 = arith.constant 0 : i32
    %c0_i32_1 = arith.constant 0 : i32
    %c0_i32_2 = arith.constant 0 : i32
    return %c0_i32, %c0_i32_0, %c0_i32_1 : i32, i32, i32
  }
  func.func @transform_11(%arg0: i32) -> (i32, i32, i32) {
    %c0_i32 = arith.constant 0 : i32
    %c0_i32_0 = arith.constant 0 : i32
    %c0_i32_1 = arith.constant 0 : i32
    %c0_i32_2 = arith.constant 0 : i32
    return %c0_i32, %c0_i32_0, %c0_i32_1 : i32, i32, i32
  }
  func.func @transform_12(%arg0: i32) -> (i32, i32, i32) {
    %c0_i32 = arith.constant 0 : i32
    %c0_i32_0 = arith.constant 0 : i32
    %c0_i32_1 = arith.constant 0 : i32
    %c0_i32_2 = arith.constant 0 : i32
    return %c0_i32, %c0_i32_0, %c0_i32_1 : i32, i32, i32
  }
  func.func @transform_13(%arg0: i32) -> (i32, i32) {
    %c0_i32 = arith.constant 0 : i32
    %c0_i32_0 = arith.constant 0 : i32
    %c0_i32_1 = arith.constant 0 : i32
    return %c0_i32, %c0_i32_0 : i32, i32
  }
  func.func @transform_14(%arg0: i32) -> (i32, i32) {
    %c0_i32 = arith.constant 0 : i32
    %c0_i32_0 = arith.constant 0 : i32
    %c0_i32_1 = arith.constant 0 : i32
    return %c0_i32, %c0_i32_0 : i32, i32
  }
  func.func @transform_15(%arg0: i32) -> (i32, i32, i32) {
    %c0_i32 = arith.constant 0 : i32
    %c0_i32_0 = arith.constant 0 : i32
    %c0_i32_1 = arith.constant 0 : i32
    return %arg0, %c0_i32, %c0_i32_0 : i32, i32, i32
  }
}

</mosaic_0001>

<llo_original>
// kernel: discriminator_forward.1
$region0: #{discriminator_forward.1}
  #allocation0 [shape = 'u32[]', space=smem, size = 0x4, offset = 0x4, fixed_abs, tag = 'smem constant byte address 0x4 - core index']
  #allocation1 [shape = 'u32[144,128]{1,0:T(1,128)}', space=vmem, size = 0x12000, scoped, tag = 'internal scratch']
  #allocation2 [shape = 'f32[1,1]{1,0:T(1,128)S(1)}', space=vmem, size = 0x200, scoped, tag = 'scoped memory for discriminator_forward.1']
  %s0 = inlined_call_operand.vmem [shape: f32[2,16,64], index: 0, kind: input, shape index: {}]
  %s1 = inlined_call_operand.vmem [shape: f32[3,8,16], index: 1, kind: input, shape index: {}]
  %s2 = inlined_call_operand.hbm [shape: bf16[3,64,128], index: 2, kind: input, shape index: {}]
  %s3 = inlined_call_operand.vmem [shape: f32[3,1,128], index: 3, kind: input, shape index: {}]
  %s4 = inlined_call_operand.vmem [shape: f32[3,4,8], index: 4, kind: input, shape index: {}]
  %s5 = inlined_call_operand.vmem [shape: bf16[3,128,128], index: 5, kind: input, shape index: {}]
  %s6 = inlined_call_operand.vmem [shape: f32[3,1,128], index: 6, kind: input, shape index: {}]
  %s7 = inlined_call_operand.vmem [shape: f32[3,2,4], index: 7, kind: input, shape index: {}]
  %s8 = inlined_call_operand.vmem [shape: bf16[3,128,128], index: 8, kind: input, shape index: {}]
  %s9 = inlined_call_operand.vmem [shape: f32[3,1,128], index: 9, kind: input, shape index: {}]
  %s10 = inlined_call_operand.vmem [shape: f32[3,1,2], index: 10, kind: input, shape index: {}]
  %s11 = inlined_call_operand.hbm [shape: bf16[3,128,128], index: 11, kind: input, shape index: {}]
  %s12 = inlined_call_operand.hbm [shape: f32[3,1,128], index: 12, kind: input, shape index: {}]
  %s13 = inlined_call_operand.vmem [shape: f32[1,128], index: 13, kind: input, shape index: {}]
  %s14 = inlined_call_operand.<no memory space> [shape: f32[1,1], index: 14, kind: input, shape index: {}]
  %s15 = inlined_call_operand.vmem [shape: f32[2,1,1], index: 15, kind: output, shape index: {}]
  %s16 = sld [smem:[#allocation0]]
  $region105: #{discriminator_forward.1} parent=0
    _
  %s18 = ssub.s32 1, %s16
  %s19 = scalar_select 0, %s18, %s16
  %v20 = vstv %s14
  %21 = vst [vmem:[#allocation2] sm:$0x1] %v20
  $region1: #{discriminator_forward.1} parent=0
    #allocation3 [shape = 'u8[49152]{0}', space=vmem, size = 0xc000, scoped, tag = 'input window, operand 2, single buffered']
    #allocation4 [shape = 's32[2]{0}', space=sflag, size = 0x8, scoped, tag = 'scoped memory for discriminator_forward.1']
    #allocation5 [shape = 'u8[98304]{0}', space=vmem, size = 0x18000, scoped, tag = 'input window, operand 11, single buffered']
    #allocation6 [shape = 's32[1]{0}', space=sflag, size = 0x4, scoped, tag = 'scoped memory for discriminator_forward.1']
    #allocation7 [shape = 'u8[1536]{0}', space=vmem, size = 0x800, scoped, tag = 'input window, operand 12, single buffered']
    %22 = vsyncpa [#allocation4], 0
    %23 = vsyncpa [#allocation6], 0
    loop: start=0, step=1, limit=4
    $region2: #{discriminator_forward.1} parent=1 // loop_pre_header
      _
    $region3: #{discriminator_forward.1} parent=1 // loop_header
      %s25 = sphi 0, %s29
      %p26 = scmp.ge.s32.totalorder %s25, 4
      %s35 = sphi 0, %s37
      %s38 = sphi 0, %s35
      %s39 = sphi 0, %s38
      %s55 = sphi 0, %s39
      %s59 = sphi 0, %s59
      %s61 = sphi 0, %s59
      %s62 = sphi 0, %s61
      %s76 = sphi 0, %s62
      %s80 = sphi 0, %s80
      %s82 = sphi 0, %s80
      %s83 = sphi 0, %s82
      %s97 = sphi 0, %s83
      %s101 = sphi 0, %s101
      %s103 = sphi 0, %s101
      %s104 = sphi 0, %s103
      %s118 = sphi 0, %s104
      %s122 = sphi 0, %s122
      %s124 = sphi 0, %s122
      %s125 = sphi 0, %s124
      %s139 = sphi 0, %s125
      %s143 = sphi 0, %s143
      %s145 = sphi 0, %s143
      %s146 = sphi 0, %s145
      %s160 = sphi 0, %s146
      %s164 = sphi 0, %s164
      %s166 = sphi 0, %s164
      %s167 = sphi 0, %s166
      %s181 = sphi 0, %s167
      %s185 = sphi 0, %s185
      %s187 = sphi 0, %s185
      %s188 = sphi 0, %s187
      %s202 = sphi 0, %s188
      %s206 = sphi 0, %s206
      %s208 = sphi 0, %s206
      %s209 = sphi 0, %s208
      %s223 = sphi 0, %s209
      %s227 = sphi 0, %s227
      %s229 = sphi 0, %s227
      %s230 = sphi 0, %s229
      %s244 = sphi 0, %s230
      %s248 = sphi 0, %s248
      %s250 = sphi 0, %s248
      %s251 = sphi 0, %s250
      %s265 = sphi 0, %s251
      %s269 = sphi 0, %s269
      %s271 = sphi 0, %s269
      %s272 = sphi 0, %s271
      %s286 = sphi 0, %s272
      %s290 = sphi 0, %s290
      %s292 = sphi 0, %s290
      %s293 = sphi 0, %s292
      %s307 = sphi 0, %s293
      %s311 = sphi 0, %s311
      %s313 = sphi 0, %s311
      %s314 = sphi 0, %s313
      %s328 = sphi 0, %s314
      %s332 = sphi 0, %s332
      %s334 = sphi 0, %s332
      %s335 = sphi 0, %s334
      %s349 = sphi 0, %s335
      %s355 = sphi 0, %s357
      %s358 = sphi 0, %s355
      %s359 = sphi 0, %s358
      %s375 = sphi 0, %s359
    $region4: #{discriminator_forward.1} parent=1 // loop_header_branch
      %28 = sbr.rel (%p26) target = $region8
    $region5: #{discriminator_forward.1} parent=1 // loop_body
      %s30 = ssub.s32 %s25, 1
      %s31 = ssub.s32 %s25, 2
      %s32 = sadd.s32 %s25, 1
      %s33 = ssub.s32 %s25, %s32
      %p34 = scmp.eq.s32.totalorder %s33, 0
      %s36 = sadd.s32 %s35, 1
      %s37 = scalar_select %p34, %s35, %s36
      %p40 = pneg %p34
      %p41 = scmp.eq.s32.totalorder %s25, 1
      %p42 = por %p40, %p41
      %p43 = scmp.ne.s32.totalorder %s35, %s38
      %p44 = scmp.eq.s32.totalorder %s25, 0
      %p45 = por %p43, %p44
      %p46 = scmp.ne.s32.totalorder %s35, %s38
      %p47 = scmp.eq.s32.totalorder %s30, 1
      %p48 = por %p46, %p47
      %p49 = scmp.ne.s32.totalorder %s38, %s39
      %p50 = scmp.eq.s32.totalorder %s30, 0
      %p51 = por %p49, %p50
      %p52 = scmp.ne.s32.totalorder %s38, %s39
      %p53 = scmp.eq.s32.totalorder %s31, 1
      %p54 = por %p52, %p53
      %p56 = scmp.ne.s32.totalorder %s39, %s55
      %p57 = scmp.eq.s32.totalorder %s31, 0
      %p58 = por %p56, %p57
      %s60 = sadd.s32 %s59, 1
      %p63 = scmp.eq.s32.totalorder %s25, 1
      %p64 = scmp.ne.s32.totalorder %s59, %s61
      %p65 = scmp.eq.s32.totalorder %s25, 0
      %p66 = por %p64, %p65
      %p67 = scmp.ne.s32.totalorder %s59, %s61
      %p68 = scmp.eq.s32.totalorder %s30, 1
      %p69 = por %p67, %p68
      %p70 = scmp.ne.s32.totalorder %s61, %s62
      %p71 = scmp.eq.s32.totalorder %s30, 0
      %p72 = por %p70, %p71
      %p73 = scmp.ne.s32.totalorder %s61, %s62
      %p74 = scmp.eq.s32.totalorder %s31, 1
      %p75 = por %p73, %p74
      %p77 = scmp.ne.s32.totalorder %s62, %s76
      %p78 = scmp.eq.s32.totalorder %s31, 0
      %p79 = por %p77, %p78
      %s81 = sadd.s32 %s80, 1
      %p84 = scmp.eq.s32.totalorder %s25, 1
      %p85 = scmp.ne.s32.totalorder %s80, %s82
      %p86 = scmp.eq.s32.totalorder %s25, 0
      %p87 = por %p85, %p86
      %p88 = scmp.ne.s32.totalorder %s80, %s82
      %p89 = scmp.eq.s32.totalorder %s30, 1
      %p90 = por %p88, %p89
      %p91 = scmp.ne.s32.totalorder %s82, %s83
      %p92 = scmp.eq.s32.totalorder %s30, 0
      %p93 = por %p91, %p92
      %p94 = scmp.ne.s32.totalorder %s82, %s83
      %p95 = scmp.eq.s32.totalorder %s31, 1
      %p96 = por %p94, %p95
      %p98 = scmp.ne.s32.totalorder %s83, %s97
      %p99 = scmp.eq.s32.totalorder %s31, 0
      %p100 = por %p98, %p99
      %s102 = sadd.s32 %s101, 1
      %p105 = scmp.eq.s32.totalorder %s25, 1
      %p106 = scmp.ne.s32.totalorder %s101, %s103
      %p107 = scmp.eq.s32.totalorder %s25, 0
      %p108 = por %p106, %p107
      %p109 = scmp.ne.s32.totalorder %s101, %s103
      %p110 = scmp.eq.s32.totalorder %s30, 1
      %p111 = por %p109, %p110
      %p112 = scmp.ne.s32.totalorder %s103, %s104
      %p113 = scmp.eq.s32.totalorder %s30, 0
      %p114 = por %p112, %p113
      %p115 = scmp.ne.s32.totalorder %s103, %s104
      %p116 = scmp.eq.s32.totalorder %s31, 1
      %p117 = por %p115, %p116
      %p119 = scmp.ne.s32.totalorder %s104, %s118
      %p120 = scmp.eq.s32.totalorder %s31, 0
      %p121 = por %p119, %p120
      %s123 = sadd.s32 %s122, 1
      %p126 = scmp.eq.s32.totalorder %s25, 1
      %p127 = scmp.ne.s32.totalorder %s122, %s124
      %p128 = scmp.eq.s32.totalorder %s25, 0
      %p129 = por %p127, %p128
      %p130 = scmp.ne.s32.totalorder %s122, %s124
      %p131 = scmp.eq.s32.totalorder %s30, 1
      %p132 = por %p130, %p131
      %p133 = scmp.ne.s32.totalorder %s124, %s125
      %p134 = scmp.eq.s32.totalorder %s30, 0
      %p135 = por %p133, %p134
      %p136 = scmp.ne.s32.totalorder %s124, %s125
      %p137 = scmp.eq.s32.totalorder %s31, 1
      %p138 = por %p136, %p137
      %p140 = scmp.ne.s32.totalorder %s125, %s139
      %p141 = scmp.eq.s32.totalorder %s31, 0
      %p142 = por %p140, %p141
      %s144 = sadd.s32 %s143, 1
      %p147 = scmp.eq.s32.totalorder %s25, 1
      %p148 = scmp.ne.s32.totalorder %s143, %s145
      %p149 = scmp.eq.s32.totalorder %s25, 0
      %p150 = por %p148, %p149
      %p151 = scmp.ne.s32.totalorder %s143, %s145
      %p152 = scmp.eq.s32.totalorder %s30, 1
      %p153 = por %p151, %p152
      %p154 = scmp.ne.s32.totalorder %s145, %s146
      %p155 = scmp.eq.s32.totalorder %s30, 0
      %p156 = por %p154, %p155
      %p157 = scmp.ne.s32.totalorder %s145, %s146
      %p158 = scmp.eq.s32.totalorder %s31, 1
      %p159 = por %p157, %p158
      %p161 = scmp.ne.s32.totalorder %s146, %s160
      %p162 = scmp.eq.s32.totalorder %s31, 0
      %p163 = por %p161, %p162
      %s165 = sadd.s32 %s164, 1
      %p168 = scmp.eq.s32.totalorder %s25, 1
      %p169 = scmp.ne.s32.totalorder %s164, %s166
      %p170 = scmp.eq.s32.totalorder %s25, 0
      %p171 = por %p169, %p170
      %p172 = scmp.ne.s32.totalorder %s164, %s166
      %p173 = scmp.eq.s32.totalorder %s30, 1
      %p174 = por %p172, %p173
      %p175 = scmp.ne.s32.totalorder %s166, %s167
      %p176 = scmp.eq.s32.totalorder %s30, 0
      %p177 = por %p175, %p176
      %p178 = scmp.ne.s32.totalorder %s166, %s167
      %p179 = scmp.eq.s32.totalorder %s31, 1
      %p180 = por %p178, %p179
      %p182 = scmp.ne.s32.totalorder %s167, %s181
      %p183 = scmp.eq.s32.totalorder %s31, 0
      %p184 = por %p182, %p183
      %s186 = sadd.s32 %s185, 1
      %p189 = scmp.eq.s32.totalorder %s25, 1
      %p190 = scmp.ne.s32.totalorder %s185, %s187
      %p191 = scmp.eq.s32.totalorder %s25, 0
      %p192 = por %p190, %p191
      %p193 = scmp.ne.s32.totalorder %s185, %s187
      %p194 = scmp.eq.s32.totalorder %s30, 1
      %p195 = por %p193, %p194
      %p196 = scmp.ne.s32.totalorder %s187, %s188
      %p197 = scmp.eq.s32.totalorder %s30, 0
      %p198 = por %p196, %p197
      %p199 = scmp.ne.s32.totalorder %s187, %s188
      %p200 = scmp.eq.s32.totalorder %s31, 1
      %p201 = por %p199, %p200
      %p203 = scmp.ne.s32.totalorder %s188, %s202
      %p204 = scmp.eq.s32.totalorder %s31, 0
      %p205 = por %p203, %p204
      %s207 = sadd.s32 %s206, 1
      %p210 = scmp.eq.s32.totalorder %s25, 1
      %p211 = scmp.ne.s32.totalorder %s206, %s208
      %p212 = scmp.eq.s32.totalorder %s25, 0
      %p213 = por %p211, %p212
      %p214 = scmp.ne.s32.totalorder %s206, %s208
      %p215 = scmp.eq.s32.totalorder %s30, 1
      %p216 = por %p214, %p215
      %p217 = scmp.ne.s32.totalorder %s208, %s209
      %p218 = scmp.eq.s32.totalorder %s30, 0
      %p219 = por %p217, %p218
      %p220 = scmp.ne.s32.totalorder %s208, %s209
      %p221 = scmp.eq.s32.totalorder %s31, 1
      %p222 = por %p220, %p221
      %p224 = scmp.ne.s32.totalorder %s209, %s223
      %p225 = scmp.eq.s32.totalorder %s31, 0
      %p226 = por %p224, %p225
      %s228 = sadd.s32 %s227, 1
      %p231 = scmp.eq.s32.totalorder %s25, 1
      %p232 = scmp.ne.s32.totalorder %s227, %s229
      %p233 = scmp.eq.s32.totalorder %s25, 0
      %p234 = por %p232, %p233
      %p235 = scmp.ne.s32.totalorder %s227, %s229
      %p236 = scmp.eq.s32.totalorder %s30, 1
      %p237 = por %p235, %p236
      %p238 = scmp.ne.s32.totalorder %s229, %s230
      %p239 = scmp.eq.s32.totalorder %s30, 0
      %p240 = por %p238, %p239
      %p241 = scmp.ne.s32.totalorder %s229, %s230
      %p242 = scmp.eq.s32.totalorder %s31, 1
      %p243 = por %p241, %p242
      %p245 = scmp.ne.s32.totalorder %s230, %s244
      %p246 = scmp.eq.s32.totalorder %s31, 0
      %p247 = por %p245, %p246
      %s249 = sadd.s32 %s248, 1
      %p252 = scmp.eq.s32.totalorder %s25, 1
      %p253 = scmp.ne.s32.totalorder %s248, %s250
      %p254 = scmp.eq.s32.totalorder %s25, 0
      %p255 = por %p253, %p254
      %p256 = scmp.ne.s32.totalorder %s248, %s250
      %p257 = scmp.eq.s32.totalorder %s30, 1
      %p258 = por %p256, %p257
      %p259 = scmp.ne.s32.totalorder %s250, %s251
      %p260 = scmp.eq.s32.totalorder %s30, 0
      %p261 = por %p259, %p260
      %p262 = scmp.ne.s32.totalorder %s250, %s251
      %p263 = scmp.eq.s32.totalorder %s31, 1
      %p264 = por %p262, %p263
      %p266 = scmp.ne.s32.totalorder %s251, %s265
      %p267 = scmp.eq.s32.totalorder %s31, 0
      %p268 = por %p266, %p267
      %s270 = sadd.s32 %s269, 1
      %p273 = scmp.eq.s32.totalorder %s25, 1
      %p274 = scmp.ne.s32.totalorder %s269, %s271
      %p275 = scmp.eq.s32.totalorder %s25, 0
      %p276 = por %p274, %p275
      %p277 = scmp.ne.s32.totalorder %s269, %s271
      %p278 = scmp.eq.s32.totalorder %s30, 1
      %p279 = por %p277, %p278
      %p280 = scmp.ne.s32.totalorder %s271, %s272
      %p281 = scmp.eq.s32.totalorder %s30, 0
      %p282 = por %p280, %p281
      %p283 = scmp.ne.s32.totalorder %s271, %s272
      %p284 = scmp.eq.s32.totalorder %s31, 1
      %p285 = por %p283, %p284
      %p287 = scmp.ne.s32.totalorder %s272, %s286
      %p288 = scmp.eq.s32.totalorder %s31, 0
      %p289 = por %p287, %p288
      %s291 = sadd.s32 %s290, 1
      %p294 = scmp.eq.s32.totalorder %s25, 1
      %p295 = scmp.ne.s32.totalorder %s290, %s292
      %p296 = scmp.eq.s32.totalorder %s25, 0
      %p297 = por %p295, %p296
      %p298 = scmp.ne.s32.totalorder %s290, %s292
      %p299 = scmp.eq.s32.totalorder %s30, 1
      %p300 = por %p298, %p299
      %p301 = scmp.ne.s32.totalorder %s292, %s293
      %p302 = scmp.eq.s32.totalorder %s30, 0
      %p303 = por %p301, %p302
      %p304 = scmp.ne.s32.totalorder %s292, %s293
      %p305 = scmp.eq.s32.totalorder %s31, 1
      %p306 = por %p304, %p305
      %p308 = scmp.ne.s32.totalorder %s293, %s307
      %p309 = scmp.eq.s32.totalorder %s31, 0
      %p310 = por %p308, %p309
      %s312 = sadd.s32 %s311, 1
      %p315 = scmp.eq.s32.totalorder %s25, 1
      %p316 = scmp.ne.s32.totalorder %s311, %s313
      %p317 = scmp.eq.s32.totalorder %s25, 0
      %p318 = por %p316, %p317
      %p319 = scmp.ne.s32.totalorder %s311, %s313
      %p320 = scmp.eq.s32.totalorder %s30, 1
      %p321 = por %p319, %p320
      %p322 = scmp.ne.s32.totalorder %s313, %s314
      %p323 = scmp.eq.s32.totalorder %s30, 0
      %p324 = por %p322, %p323
      %p325 = scmp.ne.s32.totalorder %s313, %s314
      %p326 = scmp.eq.s32.totalorder %s31, 1
      %p327 = por %p325, %p326
      %p329 = scmp.ne.s32.totalorder %s314, %s328
      %p330 = scmp.eq.s32.totalorder %s31, 0
      %p331 = por %p329, %p330
      %s333 = sadd.s32 %s332, 1
      %p336 = scmp.eq.s32.totalorder %s25, 1
      %p337 = scmp.ne.s32.totalorder %s332, %s334
      %p338 = scmp.eq.s32.totalorder %s25, 0
      %p339 = por %p337, %p338
      %p340 = scmp.ne.s32.totalorder %s332, %s334
      %p341 = scmp.eq.s32.totalorder %s30, 1
      %p342 = por %p340, %p341
      %p343 = scmp.ne.s32.totalorder %s334, %s335
      %p344 = scmp.eq.s32.totalorder %s30, 0
      %p345 = por %p343, %p344
      %p346 = scmp.ne.s32.totalorder %s334, %s335
      %p347 = scmp.eq.s32.totalorder %s31, 1
      %p348 = por %p346, %p347
      %p350 = scmp.ne.s32.totalorder %s335, %s349
      %p351 = scmp.eq.s32.totalorder %s31, 0
      %p352 = por %p350, %p351
      %s353 = ssub.s32 %s25, %s32
      %p354 = scmp.eq.s32.totalorder %s353, 0
      %s356 = sadd.s32 %s355, 1
      %s357 = scalar_select %p354, %s355, %s356
      %p360 = pneg %p354
      %p361 = scmp.eq.s32.totalorder %s25, 1
      %p362 = por %p360, %p361
      %p363 = scmp.ne.s32.totalorder %s355, %s358
      %p364 = scmp.eq.s32.totalorder %s25, 0
      %p365 = por %p363, %p364
      %p366 = scmp.ne.s32.totalorder %s355, %s358
      %p367 = scmp.eq.s32.totalorder %s30, 1
      %p368 = por %p366, %p367
      %p369 = scmp.ne.s32.totalorder %s358, %s359
      %p370 = scmp.eq.s32.totalorder %s30, 0
      %p371 = por %p369, %p370
      %p372 = scmp.ne.s32.totalorder %s358, %s359
      %p373 = scmp.eq.s32.totalorder %s31, 1
      %p374 = por %p372, %p373
      %p376 = scmp.ne.s32.totalorder %s359, %s375
      %p377 = scmp.eq.s32.totalorder %s31, 0
      %p378 = por %p376, %p377
      %p379 = scmp.le.s32.totalorder 1, %s25
      %p380 = scmp.lt.s32.totalorder %s25, 3
      %p381 = pnand %p379, %p380
      %p382 = pneg %p381
      // Predicated region
      $region9: #{discriminator_forward.1} parent=5 // pred_check
        _
      $region10: #{discriminator_forward.1} parent=5 // pred_check_branch
        %384 = sbr.rel (%p381) target = $region12
      $region11: #{discriminator_forward.1} parent=5 // pred_region
        %s385 = ssub.s32 %s25, 1
        // Predicated region
        $region13: #{discriminator_forward.1} parent=11 // pred_check
          %p386 = pneg %p72
        $region14: #{discriminator_forward.1} parent=11 // pred_check_branch
          %388 = sbr.rel (%p386) target = $region16
        $region15: #{discriminator_forward.1} parent=11 // pred_region
          _
        $region16: #{discriminator_forward.1} parent=11 // pred_fallthru
          _
        // Predicated region
        $region17: #{discriminator_forward.1} parent=11 // pred_check
          %p389 = pneg %p93
        $region18: #{discriminator_forward.1} parent=11 // pred_check_branch
          %391 = sbr.rel (%p389) target = $region20
        $region19: #{discriminator_forward.1} parent=11 // pred_region
          %s393 = ssub.s32 1536, 1536
          %394 = vsyncadd [#allocation4], %s393
          %s395 = sshll.u32 [#allocation3], 4
          %s396 = int_to_ptr.vmem [resolvable:$true] %s395
          %401 = dma.hbm_to_vmem [thread:$0]  %s2, 1536, %s396, [#allocation4], 64, 64, 4
        $region20: #{discriminator_forward.1} parent=11 // pred_fallthru
          _
        // Predicated region
        $region21: #{discriminator_forward.1} parent=11 // pred_check
          %p402 = pneg %p114
        $region22: #{discriminator_forward.1} parent=11 // pred_check_branch
          %404 = sbr.rel (%p402) target = $region24
        $region23: #{discriminator_forward.1} parent=11 // pred_region
          _
        $region24: #{discriminator_forward.1} parent=11 // pred_fallthru
          _
        // Predicated region
        $region25: #{discriminator_forward.1} parent=11 // pred_check
          %p405 = pneg %p135
        $region26: #{discriminator_forward.1} parent=11 // pred_check_branch
          %407 = sbr.rel (%p405) target = $region28
        $region27: #{discriminator_forward.1} parent=11 // pred_region
          _
        $region28: #{discriminator_forward.1} parent=11 // pred_fallthru
          _
        // Predicated region
        $region29: #{discriminator_forward.1} parent=11 // pred_check
          %p408 = pneg %p156
        $region30: #{discriminator_forward.1} parent=11 // pred_check_branch
          %410 = sbr.rel (%p408) target = $region32
        $region31: #{discriminator_forward.1} parent=11 // pred_region
          _
        $region32: #{discriminator_forward.1} parent=11 // pred_fallthru
          _
        // Predicated region
        $region33: #{discriminator_forward.1} parent=11 // pred_check
          %p411 = pneg %p177
        $region34: #{discriminator_forward.1} parent=11 // pred_check_branch
          %413 = sbr.rel (%p411) target = $region36
        $region35: #{discriminator_forward.1} parent=11 // pred_region
          _
        $region36: #{discriminator_forward.1} parent=11 // pred_fallthru
          _
        // Predicated region
        $region37: #{discriminator_forward.1} parent=11 // pred_check
          %p414 = pneg %p198
        $region38: #{discriminator_forward.1} parent=11 // pred_check_branch
          %416 = sbr.rel (%p414) target = $region40
        $region39: #{discriminator_forward.1} parent=11 // pred_region
          _
        $region40: #{discriminator_forward.1} parent=11 // pred_fallthru
          _
        // Predicated region
        $region41: #{discriminator_forward.1} parent=11 // pred_check
          %p417 = pneg %p219
        $region42: #{discriminator_forward.1} parent=11 // pred_check_branch
          %419 = sbr.rel (%p417) target = $region44
        $region43: #{discriminator_forward.1} parent=11 // pred_region
          _
        $region44: #{discriminator_forward.1} parent=11 // pred_fallthru
          _
        // Predicated region
        $region45: #{discriminator_forward.1} parent=11 // pred_check
          %p420 = pneg %p240
        $region46: #{discriminator_forward.1} parent=11 // pred_check_branch
          %422 = sbr.rel (%p420) target = $region48
        $region47: #{discriminator_forward.1} parent=11 // pred_region
          _
        $region48: #{discriminator_forward.1} parent=11 // pred_fallthru
          _
        // Predicated region
        $region49: #{discriminator_forward.1} parent=11 // pred_check
          %p423 = pneg %p261
        $region50: #{discriminator_forward.1} parent=11 // pred_check_branch
          %425 = sbr.rel (%p423) target = $region52
        $region51: #{discriminator_forward.1} parent=11 // pred_region
          _
        $region52: #{discriminator_forward.1} parent=11 // pred_fallthru
          _
        // Predicated region
        $region53: #{discriminator_forward.1} parent=11 // pred_check
          %p426 = pneg %p282
        $region54: #{discriminator_forward.1} parent=11 // pred_check_branch
          %428 = sbr.rel (%p426) target = $region56
        $region55: #{discriminator_forward.1} parent=11 // pred_region
          %s430 = ssub.s32 3072, 3072
          %431 = vsyncadd [#allocation6], %s430
          %s432 = sshll.u32 [#allocation5], 4
          %s433 = int_to_ptr.vmem [resolvable:$true] %s432
          %438 = dma.hbm_to_vmem [thread:$0]  %s11, 3072, %s433, [#allocation6], 64, 64, 4
        $region56: #{discriminator_forward.1} parent=11 // pred_fallthru
          _
        // Predicated region
        $region57: #{discriminator_forward.1} parent=11 // pred_check
          %p439 = pneg %p303
        $region58: #{discriminator_forward.1} parent=11 // pred_check_branch
          %441 = sbr.rel (%p439) target = $region60
        $region59: #{discriminator_forward.1} parent=11 // pred_region
          %s443 = ssub.s32 48, 48
          %444 = vsyncadd [#allocation6], %s443
          %s445 = sshll.u32 [#allocation7], 4
          %s446 = int_to_ptr.vmem [resolvable:$true] %s445
          %451 = dma.hbm_to_vmem [thread:$0]  %s12, 48, %s446, [#allocation6], 16, 16, 1
        $region60: #{discriminator_forward.1} parent=11 // pred_fallthru
          _
        // Predicated region
        $region61: #{discriminator_forward.1} parent=11 // pred_check
          %p452 = pneg %p324
        $region62: #{discriminator_forward.1} parent=11 // pred_check_branch
          %454 = sbr.rel (%p452) target = $region64
        $region63: #{discriminator_forward.1} parent=11 // pred_region
          _
        $region64: #{discriminator_forward.1} parent=11 // pred_fallthru
          _
        // Predicated region
        $region65: #{discriminator_forward.1} parent=11 // pred_check
          %p455 = pneg %p345
        $region66: #{discriminator_forward.1} parent=11 // pred_check_branch
          %457 = sbr.rel (%p455) target = $region68
        $region67: #{discriminator_forward.1} parent=11 // pred_region
          _
        $region68: #{discriminator_forward.1} parent=11 // pred_fallthru
          _
      $region12: #{discriminator_forward.1} parent=5 // pred_fallthru
        _
      %p458 = scmp.lt.s32.totalorder %s25, 2
      // Predicated region
      $region69: #{discriminator_forward.1} parent=5 // pred_check
        %p459 = pneg %p458
      $region70: #{discriminator_forward.1} parent=5 // pred_check_branch
        %461 = sbr.rel (%p459) target = $region72
      $region71: #{discriminator_forward.1} parent=5 // pred_region
        // Predicated region
        $region73: #{discriminator_forward.1} parent=71 // pred_check
          %p462 = pneg %p45
        $region74: #{discriminator_forward.1} parent=71 // pred_check_branch
          %464 = sbr.rel (%p462) target = $region76
        $region75: #{discriminator_forward.1} parent=71 // pred_region
          %p465 = scmp.lt.s32.totalorder %s25, 1
          %s466 = scalar_select %p465, %s25, 1
          %s467 = smul.addr %s466, 2
          %s468 = smul.addr %s467, 8
          %s469 = scalar_lea.vmem %s0, %s468
        $region76: #{discriminator_forward.1} parent=71 // pred_fallthru
          _
      $region72: #{discriminator_forward.1} parent=5 // pred_fallthru
        _
      %p470 = scmp.le.s32.totalorder 1, %s25
      %p471 = scmp.lt.s32.totalorder %s25, 3
      %p472 = pnand %p470, %p471
      %p473 = pneg %p472
      // Predicated region
      $region77: #{discriminator_forward.1} parent=5 // pred_check
        _
      $region78: #{discriminator_forward.1} parent=5 // pred_check_branch
        %475 = sbr.rel (%p472) target = $region80
      $region79: #{discriminator_forward.1} parent=5 // pred_region
        %s476 = ssub.s32 %s25, 1
        // Predicated region
        $region81: #{discriminator_forward.1} parent=79 // pred_check
          %p477 = pneg %p93
        $region82: #{discriminator_forward.1} parent=79 // pred_check_branch
          %479 = sbr.rel (%p477) target = $region84
        $region83: #{discriminator_forward.1} parent=79 // pred_region
          %480 = dma.done [#allocation4], 1536
        $region84: #{discriminator_forward.1} parent=79 // pred_fallthru
          _
        // Predicated region
        $region85: #{discriminator_forward.1} parent=79 // pred_check
          %p481 = pneg %p282
        $region86: #{discriminator_forward.1} parent=79 // pred_check_branch
          %483 = sbr.rel (%p481) target = $region88
        $region87: #{discriminator_forward.1} parent=79 // pred_region
          %484 = dma.done [#allocation6], 3072
        $region88: #{discriminator_forward.1} parent=79 // pred_fallthru
          _
        // Predicated region
        $region89: #{discriminator_forward.1} parent=79 // pred_check
          %p485 = pneg %p303
        $region90: #{discriminator_forward.1} parent=79 // pred_check_branch
          %487 = sbr.rel (%p485) target = $region92
        $region91: #{discriminator_forward.1} parent=79 // pred_region
          %488 = dma.done [#allocation6], 48
        $region92: #{discriminator_forward.1} parent=79 // pred_fallthru
          _
        %p489 = scmp.lt.s32.totalorder %s30, 1
        %s490 = scalar_select %p489, %s30, 1
        %s491 = smul.addr %s490, 2
        %s492 = smul.addr %s491, 8
        %s493 = scalar_lea.vmem %s0, %s492
        %p494 = pneg %p51
        %p495 = pneg %p48
        %p496 = pneg %p72
        %p497 = pneg %p69
        %p498 = pneg %p93
        %p499 = pneg %p90
        %p500 = pneg %p114
        %p501 = pneg %p111
        %p502 = pneg %p135
        %p503 = pneg %p132
        %p504 = pneg %p156
        %p505 = pneg %p153
        %p506 = pneg %p177
        %p507 = pneg %p174
        %p508 = pneg %p198
        %p509 = pneg %p195
        %p510 = pneg %p219
        %p511 = pneg %p216
        %p512 = pneg %p240
        %p513 = pneg %p237
        %p514 = pneg %p261
        %p515 = pneg %p258
        %p516 = pneg %p282
        %p517 = pneg %p279
        %p518 = pneg %p303
        %p519 = pneg %p300
        %p520 = pneg %p324
        %p521 = pneg %p321
        %p522 = pneg %p345
        %p523 = pneg %p342
        %p524 = pneg %p371
        %p525 = pneg %p368
        %p526 = scmp.lt.s32.totalorder %s30, 1
        %s527 = scalar_select %p526, %s30, 1
        %s528 = scalar_lea.vmem %s15, %s527
        %p529 = scmp.lt.s32.totalorder %s30, 1
        %s530 = scalar_select %p529, %s30, 1
        %s531 = smul.addr %s530, 2
        %s532 = smul.addr %s531, 8
        %s533 = scalar_lea.vmem %s0, %s532
        %p534 = scmp.lt.s32.totalorder %s30, 1
        %s535 = scalar_select %p534, %s30, 1
        %s536 = scalar_lea.vmem %s15, %s535
        %v538 = vld [vmem:[%s533] sm:$0xff]
        %v539 = vld [vmem:[%s533 + $0x8] sm:$0xff]
        %v540 = vld [vmem:[%s1] sm:$0xff]
        %vm541 = vcmask 130048
        %v543 = vsel %vm541, %v540, 0
        %545 = vmatprep.subr.mxu0 0.0
        %546 = vmatpush1.msra.mxu0 %v538
        %547 = vmatprep.subr.mxu0 0.0
        %548 = vmatpush1.msra.mxu0 %v539
        %549 = vmatprep.subr.mxu0 0.0
        %550 = vmatpush1.msra.mxu0 0.0
        %551 = vmatprep.subr.mxu0 0.0
        %552 = vmatpush1.msra.mxu0 0.0
        %553 = vmatprep.subr.mxu0 0.0
        %554 = vmatpush1.msra.mxu0 0.0
        %555 = vmatprep.subr.mxu0 0.0
        %556 = vmatpush1.msra.mxu0 0.0
        %557 = vmatprep.subr.mxu0 0.0
        %558 = vmatpush1.msra.mxu0 0.0
        %559 = vmatprep.subr.mxu0 0.0
        %560 = vmatpush1.msra.mxu0 0.0
        %561 = vmatprep.subr.mxu0 0.0
        %562 = vmatpush1.msra.mxu0 0.0
        %563 = vmatprep.subr.mxu0 0.0
        %564 = vmatpush1.msra.mxu0 0.0
        %565 = vmatprep.subr.mxu0 0.0
        %566 = vmatpush1.msra.mxu0 0.0
        %567 = vmatprep.subr.mxu0 0.0
        %568 = vmatpush1.msra.mxu0 0.0
        %569 = vmatprep.subr.mxu0 0.0
        %570 = vmatpush1.msra.mxu0 0.0
        %571 = vmatprep.subr.mxu0 0.0
        %572 = vmatpush1.msra.mxu0 0.0
        %573 = vmatprep.subr.mxu0 0.0
        %574 = vmatpush1.msra.mxu0 0.0
        %575 = vmatprep.subr.mxu0 0.0
        %576 = vmatpush1.msra.mxu0 0.0
        %577 = vmatprep.subr.mxu0 0.0
        %578 = vmatpush1.msra.mxu0 0.0
        %579 = vmatprep.subr.mxu0 0.0
        %580 = vmatpush1.msra.mxu0 0.0
        %581 = vmatprep.subr.mxu0 0.0
        %582 = vmatpush1.msra.mxu0 0.0
        %583 = vmatprep.subr.mxu0 0.0
        %584 = vmatpush1.msra.mxu0 0.0
        %585 = vmatprep.subr.mxu0 0.0
        %586 = vmatpush1.msra.mxu0 0.0
        %587 = vmatprep.subr.mxu0 0.0
        %588 = vmatpush1.msra.mxu0 0.0
        %589 = vmatprep.subr.mxu0 0.0
        %590 = vmatpush1.msra.mxu0 0.0
        %591 = vmatprep.subr.mxu0 0.0
        %592 = vmatpush1.msra.mxu0 0.0
        %593 = vmatprep.subr.mxu0 0.0
        %594 = vmatpush1.msra.mxu0 0.0
        %595 = vmatprep.subr.mxu0 0.0
        %596 = vmatpush1.msra.mxu0 0.0
        %597 = vmatprep.subr.mxu0 0.0
        %598 = vmatpush1.msra.mxu0 0.0
        %599 = vmatprep.subr.mxu0 0.0
        %600 = vmatpush1.msra.mxu0 0.0
        %601 = vmatprep.subr.mxu0 0.0
        %602 = vmatpush1.msra.mxu0 0.0
        %603 = vmatprep.subr.mxu0 0.0
        %604 = vmatpush1.msra.mxu0 0.0
        %605 = vmatprep.subr.mxu0 0.0
        %606 = vmatpush1.msra.mxu0 0.0
        %607 = vmatprep.subr.mxu0 0.0
        %608 = vmatpush1.msra.mxu0 0.0
        %609 = vmatprep.mubr.f32.mxu0 0.0
        %610 = vmatmul.mubr.f32.gmra.mrb[0].mxu0 %v543
        %v611 = vpop.f32.mrb[0].mxu0
        %v612 = vadd.f32 0.0, %v611
        %v613 = vpop.f32.mrb[0].mxu0
        %614 = vdwg.mxu0
        %v615 = vpack.c.bf16 %v612, %v612
        %v616 = vld [vmem:[#allocation3] sm:$0xf]
        %v617 = vld [vmem:[#allocation3 + $0x4] sm:$0xf]
        %v618 = vld [vmem:[#allocation3 + $0x8] sm:$0xf]
        %v619 = vld [vmem:[#allocation3 + $0xc] sm:$0xf]
        %v620 = vld [vmem:[#allocation3 + $0x10] sm:$0xf]
        %v621 = vld [vmem:[#allocation3 + $0x14] sm:$0xf]
        %v622 = vld [vmem:[#allocation3 + $0x18] sm:$0xf]
        %v623 = vld [vmem:[#allocation3 + $0x1c] sm:$0xf]
        %s624 = scalar_lea.vmem %s1, 8
        %v625 = vld [vmem:[%s624] sm:$0xff]
        %v627 = vsel %vm541, %v625, 0
        %629 = vmatprep.subr.mxu0 0.0
        %630 = vmatpush1.msra.mxu0 %v538
        %631 = vmatprep.subr.mxu0 0.0
        %632 = vmatpush1.msra.mxu0 %v539
        %633 = vmatprep.subr.mxu0 0.0
        %634 = vmatpush1.msra.mxu0 0.0
        %635 = vmatprep.subr.mxu0 0.0
        %636 = vmatpush1.msra.mxu0 0.0
        %637 = vmatprep.subr.mxu0 0.0
        %638 = vmatpush1.msra.mxu0 0.0
        %639 = vmatprep.subr.mxu0 0.0
        %640 = vmatpush1.msra.mxu0 0.0
        %641 = vmatprep.subr.mxu0 0.0
        %642 = vmatpush1.msra.mxu0 0.0
        %643 = vmatprep.subr.mxu0 0.0
        %644 = vmatpush1.msra.mxu0 0.0
        %645 = vmatprep.subr.mxu0 0.0
        %646 = vmatpush1.msra.mxu0 0.0
        %647 = vmatprep.subr.mxu0 0.0
        %648 = vmatpush1.msra.mxu0 0.0
        %649 = vmatprep.subr.mxu0 0.0
        %650 = vmatpush1.msra.mxu0 0.0
        %651 = vmatprep.subr.mxu0 0.0
        %652 = vmatpush1.msra.mxu0 0.0
        %653 = vmatprep.subr.mxu0 0.0
        %654 = vmatpush1.msra.mxu0 0.0
        %655 = vmatprep.subr.mxu0 0.0
        %656 = vmatpush1.msra.mxu0 0.0
        %657 = vmatprep.subr.mxu0 0.0
        %658 = vmatpush1.msra.mxu0 0.0
        %659 = vmatprep.subr.mxu0 0.0
        %660 = vmatpush1.msra.mxu0 0.0
        %661 = vmatprep.subr.mxu0 0.0
        %662 = vmatpush1.msra.mxu0 0.0
        %663 = vmatprep.subr.mxu0 0.0
        %664 = vmatpush1.msra.mxu0 0.0
        %665 = vmatprep.subr.mxu0 0.0
        %666 = vmatpush1.msra.mxu0 0.0
        %667 = vmatprep.subr.mxu0 0.0
        %668 = vmatpush1.msra.mxu0 0.0
        %669 = vmatprep.subr.mxu0 0.0
        %670 = vmatpush1.msra.mxu0 0.0
        %671 = vmatprep.subr.mxu0 0.0
        %672 = vmatpush1.msra.mxu0 0.0
        %673 = vmatprep.subr.mxu0 0.0
        %674 = vmatpush1.msra.mxu0 0.0
        %675 = vmatprep.subr.mxu0 0.0
        %676 = vmatpush1.msra.mxu0 0.0
        %677 = vmatprep.subr.mxu0 0.0
        %678 = vmatpush1.msra.mxu0 0.0
        %679 = vmatprep.subr.mxu0 0.0
        %680 = vmatpush1.msra.mxu0 0.0
        %681 = vmatprep.subr.mxu0 0.0
        %682 = vmatpush1.msra.mxu0 0.0
        %683 = vmatprep.subr.mxu0 0.0
        %684 = vmatpush1.msra.mxu0 0.0
        %685 = vmatprep.subr.mxu0 0.0
        %686 = vmatpush1.msra.mxu0 0.0
        %687 = vmatprep.subr.mxu0 0.0
        %688 = vmatpush1.msra.mxu0 0.0
        %689 = vmatprep.subr.mxu0 0.0
        %690 = vmatpush1.msra.mxu0 0.0
        %691 = vmatprep.subr.mxu0 0.0
        %692 = vmatpush1.msra.mxu0 0.0
        %693 = vmatprep.mubr.f32.mxu0 0.0
        %694 = vmatmul.mubr.f32.gmra.mrb[0].mxu0 %v627
        %v695 = vpop.f32.mrb[0].mxu0
        %v696 = vadd.f32 0.0, %v695
        %v697 = vpop.f32.mrb[0].mxu0
        %698 = vdwg.mxu0
        %v699 = vpack.c.bf16 %v696, %v696
        %s700 = scalar_lea.vmem [#allocation3], 32
        %v701 = vld [vmem:[%s700] sm:$0xf]
        %v702 = vld [vmem:[%s700 + $0x4] sm:$0xf]
        %v703 = vld [vmem:[%s700 + $0x8] sm:$0xf]
        %v704 = vld [vmem:[%s700 + $0xc] sm:$0xf]
        %v705 = vld [vmem:[%s700 + $0x10] sm:$0xf]
        %v706 = vld [vmem:[%s700 + $0x14] sm:$0xf]
        %v707 = vld [vmem:[%s700 + $0x18] sm:$0xf]
        %v708 = vld [vmem:[%s700 + $0x1c] sm:$0xf]
        %v717 = vunpack.c.l.b16 %v701
        %v718 = vunpack.c.l.b16 %v702
        %v719 = vunpack.c.l.b16 %v703
        %v720 = vunpack.c.l.b16 %v704
        %v721 = vunpack.c.l.b16 %v705
        %v722 = vunpack.c.l.b16 %v706
        %v723 = vunpack.c.l.b16 %v707
        %v724 = vunpack.c.l.b16 %v708
        %v725 = vpack.c.b16 %v718, %v717
        %v726 = vpack.c.b16 %v720, %v719
        %v727 = vpack.c.b16 %v722, %v721
        %v728 = vpack.c.b16 %v724, %v723
        %vm733 = vcmask 523264
        %v735 = vsel %vm733, %v699, 0
        %737 = vmatprep.subr.bf16.mxu0 0
        %738 = vmatpush1.bf16.msra.mxu0 %v725
        %739 = vmatprep.subr.bf16.mxu0 0
        %740 = vmatpush1.bf16.msra.mxu0 %v726
        %741 = vmatprep.subr.bf16.mxu0 0
        %742 = vmatpush1.bf16.msra.mxu0 %v727
        %743 = vmatprep.subr.bf16.mxu0 0
        %744 = vmatpush1.bf16.msra.mxu0 %v728
        %745 = vmatprep.subr.bf16.mxu0 0
        %746 = vmatpush1.bf16.msra.mxu0 0
        %747 = vmatprep.subr.bf16.mxu0 0
        %748 = vmatpush1.bf16.msra.mxu0 0
        %749 = vmatprep.subr.bf16.mxu0 0
        %750 = vmatpush1.bf16.msra.mxu0 0
        %751 = vmatprep.subr.bf16.mxu0 0
        %752 = vmatpush1.bf16.msra.mxu0 0
        %753 = vmatprep.subr.bf16.mxu0 0
        %754 = vmatpush1.bf16.msra.mxu0 0
        %755 = vmatprep.subr.bf16.mxu0 0
        %756 = vmatpush1.bf16.msra.mxu0 0
        %757 = vmatprep.subr.bf16.mxu0 0
        %758 = vmatpush1.bf16.msra.mxu0 0
        %759 = vmatprep.subr.bf16.mxu0 0
        %760 = vmatpush1.bf16.msra.mxu0 0
        %761 = vmatprep.subr.bf16.mxu0 0
        %762 = vmatpush1.bf16.msra.mxu0 0
        %763 = vmatprep.subr.bf16.mxu0 0
        %764 = vmatpush1.bf16.msra.mxu0 0
        %765 = vmatprep.subr.bf16.mxu0 0
        %766 = vmatpush1.bf16.msra.mxu0 0
        %767 = vmatprep.subr.bf16.mxu0 0
        %768 = vmatpush1.bf16.msra.mxu0 0
        %769 = vmatprep.mubr.bf16.mxu0 0
        %770 = vmatmul.mubr.bf16.gmra.mrb[0].mxu0 %v735
        %v771 = vpop.f32.mrb[0].mxu0
        %v772 = vadd.f32 0.0, %v771
        %v773 = vpop.f32.mrb[0].mxu0
        %v774 = vpop.f32.mrb[0].mxu0
        %v775 = vpop.f32.mrb[0].mxu0
        %776 = vdwg.mxu0
        %v785 = vunpack.c.l.b16 %v616
        %v786 = vunpack.c.l.b16 %v617
        %v787 = vunpack.c.l.b16 %v618
        %v788 = vunpack.c.l.b16 %v619
        %v789 = vunpack.c.l.b16 %v620
        %v790 = vunpack.c.l.b16 %v621
        %v791 = vunpack.c.l.b16 %v622
        %v792 = vunpack.c.l.b16 %v623
        %v793 = vpack.c.b16 %v786, %v785
        %v794 = vpack.c.b16 %v788, %v787
        %v795 = vpack.c.b16 %v790, %v789
        %v796 = vpack.c.b16 %v792, %v791
        %v802 = vsel %vm733, %v615, 0
        %804 = vmatprep.subr.bf16.mxu0 0
        %805 = vmatpush1.bf16.msra.mxu0 %v793
        %806 = vmatprep.subr.bf16.mxu0 0
        %807 = vmatpush1.bf16.msra.mxu0 %v794
        %808 = vmatprep.subr.bf16.mxu0 0
        %809 = vmatpush1.bf16.msra.mxu0 %v795
        %810 = vmatprep.subr.bf16.mxu0 0
        %811 = vmatpush1.bf16.msra.mxu0 %v796
        %812 = vmatprep.subr.bf16.mxu0 0
        %813 = vmatpush1.bf16.msra.mxu0 0
        %814 = vmatprep.subr.bf16.mxu0 0
        %815 = vmatpush1.bf16.msra.mxu0 0
        %816 = vmatprep.subr.bf16.mxu0 0
        %817 = vmatpush1.bf16.msra.mxu0 0
        %818 = vmatprep.subr.bf16.mxu0 0
        %819 = vmatpush1.bf16.msra.mxu0 0
        %820 = vmatprep.subr.bf16.mxu0 0
        %821 = vmatpush1.bf16.msra.mxu0 0
        %822 = vmatprep.subr.bf16.mxu0 0
        %823 = vmatpush1.bf16.msra.mxu0 0
        %824 = vmatprep.subr.bf16.mxu0 0
        %825 = vmatpush1.bf16.msra.mxu0 0
        %826 = vmatprep.subr.bf16.mxu0 0
        %827 = vmatpush1.bf16.msra.mxu0 0
        %828 = vmatprep.subr.bf16.mxu0 0
        %829 = vmatpush1.bf16.msra.mxu0 0
        %830 = vmatprep.subr.bf16.mxu0 0
        %831 = vmatpush1.bf16.msra.mxu0 0
        %832 = vmatprep.subr.bf16.mxu0 0
        %833 = vmatpush1.bf16.msra.mxu0 0
        %834 = vmatprep.subr.bf16.mxu0 0
        %835 = vmatpush1.bf16.msra.mxu0 0
        %836 = vmatprep.mubr.bf16.mxu0 0
        %837 = vmatmul.mubr.bf16.gmra.mrb[0].mxu0 %v802
        %v838 = vpop.f32.mrb[0].mxu0
        %v839 = vadd.f32 %v772, %v838
        %v840 = vpop.f32.mrb[0].mxu0
        %v841 = vpop.f32.mrb[0].mxu0
        %v842 = vpop.f32.mrb[0].mxu0
        %843 = vdwg.mxu0
        %s844 = scalar_lea.vmem %s1, 16
        %v845 = vld [vmem:[%s844] sm:$0xff]
        %v847 = vsel %vm541, %v845, 0
        %849 = vmatprep.subr.mxu0 0.0
        %850 = vmatpush1.msra.mxu0 %v538
        %851 = vmatprep.subr.mxu0 0.0
        %852 = vmatpush1.msra.mxu0 %v539
        %853 = vmatprep.subr.mxu0 0.0
        %854 = vmatpush1.msra.mxu0 0.0
        %855 = vmatprep.subr.mxu0 0.0
        %856 = vmatpush1.msra.mxu0 0.0
        %857 = vmatprep.subr.mxu0 0.0
        %858 = vmatpush1.msra.mxu0 0.0
        %859 = vmatprep.subr.mxu0 0.0
        %860 = vmatpush1.msra.mxu0 0.0
        %861 = vmatprep.subr.mxu0 0.0
        %862 = vmatpush1.msra.mxu0 0.0
        %863 = vmatprep.subr.mxu0 0.0
        %864 = vmatpush1.msra.mxu0 0.0
        %865 = vmatprep.subr.mxu0 0.0
        %866 = vmatpush1.msra.mxu0 0.0
        %867 = vmatprep.subr.mxu0 0.0
        %868 = vmatpush1.msra.mxu0 0.0
        %869 = vmatprep.subr.mxu0 0.0
        %870 = vmatpush1.msra.mxu0 0.0
        %871 = vmatprep.subr.mxu0 0.0
        %872 = vmatpush1.msra.mxu0 0.0
        %873 = vmatprep.subr.mxu0 0.0
        %874 = vmatpush1.msra.mxu0 0.0
        %875 = vmatprep.subr.mxu0 0.0
        %876 = vmatpush1.msra.mxu0 0.0
        %877 = vmatprep.subr.mxu0 0.0
        %878 = vmatpush1.msra.mxu0 0.0
        %879 = vmatprep.subr.mxu0 0.0
        %880 = vmatpush1.msra.mxu0 0.0
        %881 = vmatprep.subr.mxu0 0.0
        %882 = vmatpush1.msra.mxu0 0.0
        %883 = vmatprep.subr.mxu0 0.0
        %884 = vmatpush1.msra.mxu0 0.0
        %885 = vmatprep.subr.mxu0 0.0
        %886 = vmatpush1.msra.mxu0 0.0
        %887 = vmatprep.subr.mxu0 0.0
        %888 = vmatpush1.msra.mxu0 0.0
        %889 = vmatprep.subr.mxu0 0.0
        %890 = vmatpush1.msra.mxu0 0.0
        %891 = vmatprep.subr.mxu0 0.0
        %892 = vmatpush1.msra.mxu0 0.0
        %893 = vmatprep.subr.mxu0 0.0
        %894 = vmatpush1.msra.mxu0 0.0
        %895 = vmatprep.subr.mxu0 0.0
        %896 = vmatpush1.msra.mxu0 0.0
        %897 = vmatprep.subr.mxu0 0.0
        %898 = vmatpush1.msra.mxu0 0.0
        %899 = vmatprep.subr.mxu0 0.0
        %900 = vmatpush1.msra.mxu0 0.0
        %901 = vmatprep.subr.mxu0 0.0
        %902 = vmatpush1.msra.mxu0 0.0
        %903 = vmatprep.subr.mxu0 0.0
        %904 = vmatpush1.msra.mxu0 0.0
        %905 = vmatprep.subr.mxu0 0.0
        %906 = vmatpush1.msra.mxu0 0.0
        %907 = vmatprep.subr.mxu0 0.0
        %908 = vmatpush1.msra.mxu0 0.0
        %909 = vmatprep.subr.mxu0 0.0
        %910 = vmatpush1.msra.mxu0 0.0
        %911 = vmatprep.subr.mxu0 0.0
        %912 = vmatpush1.msra.mxu0 0.0
        %913 = vmatprep.mubr.f32.mxu0 0.0
        %914 = vmatmul.mubr.f32.gmra.mrb[0].mxu0 %v847
        %v915 = vpop.f32.mrb[0].mxu0
        %v916 = vadd.f32 0.0, %v915
        %v917 = vpop.f32.mrb[0].mxu0
        %918 = vdwg.mxu0
        %v919 = vpack.c.bf16 %v916, %v916
        %s920 = scalar_lea.vmem [#allocation3], 64
        %v921 = vld [vmem:[%s920] sm:$0xf]
        %v922 = vld [vmem:[%s920 + $0x4] sm:$0xf]
        %v923 = vld [vmem:[%s920 + $0x8] sm:$0xf]
        %v924 = vld [vmem:[%s920 + $0xc] sm:$0xf]
        %v925 = vld [vmem:[%s920 + $0x10] sm:$0xf]
        %v926 = vld [vmem:[%s920 + $0x14] sm:$0xf]
        %v927 = vld [vmem:[%s920 + $0x18] sm:$0xf]
        %v928 = vld [vmem:[%s920 + $0x1c] sm:$0xf]
        %v937 = vunpack.c.l.b16 %v921
        %v938 = vunpack.c.l.b16 %v922
        %v939 = vunpack.c.l.b16 %v923
        %v940 = vunpack.c.l.b16 %v924
        %v941 = vunpack.c.l.b16 %v925
        %v942 = vunpack.c.l.b16 %v926
        %v943 = vunpack.c.l.b16 %v927
        %v944 = vunpack.c.l.b16 %v928
        %v945 = vpack.c.b16 %v938, %v937
        %v946 = vpack.c.b16 %v940, %v939
        %v947 = vpack.c.b16 %v942, %v941
        %v948 = vpack.c.b16 %v944, %v943
        %v954 = vsel %vm733, %v919, 0
        %956 = vmatprep.subr.bf16.mxu0 0
        %957 = vmatpush1.bf16.msra.mxu0 %v945
        %958 = vmatprep.subr.bf16.mxu0 0
        %959 = vmatpush1.bf16.msra.mxu0 %v946
        %960 = vmatprep.subr.bf16.mxu0 0
        %961 = vmatpush1.bf16.msra.mxu0 %v947
        %962 = vmatprep.subr.bf16.mxu0 0
        %963 = vmatpush1.bf16.msra.mxu0 %v948
        %964 = vmatprep.subr.bf16.mxu0 0
        %965 = vmatpush1.bf16.msra.mxu0 0
        %966 = vmatprep.subr.bf16.mxu0 0
        %967 = vmatpush1.bf16.msra.mxu0 0
        %968 = vmatprep.subr.bf16.mxu0 0
        %969 = vmatpush1.bf16.msra.mxu0 0
        %970 = vmatprep.subr.bf16.mxu0 0
        %971 = vmatpush1.bf16.msra.mxu0 0
        %972 = vmatprep.subr.bf16.mxu0 0
        %973 = vmatpush1.bf16.msra.mxu0 0
        %974 = vmatprep.subr.bf16.mxu0 0
        %975 = vmatpush1.bf16.msra.mxu0 0
        %976 = vmatprep.subr.bf16.mxu0 0
        %977 = vmatpush1.bf16.msra.mxu0 0
        %978 = vmatprep.subr.bf16.mxu0 0
        %979 = vmatpush1.bf16.msra.mxu0 0
        %980 = vmatprep.subr.bf16.mxu0 0
        %981 = vmatpush1.bf16.msra.mxu0 0
        %982 = vmatprep.subr.bf16.mxu0 0
        %983 = vmatpush1.bf16.msra.mxu0 0
        %984 = vmatprep.subr.bf16.mxu0 0
        %985 = vmatpush1.bf16.msra.mxu0 0
        %986 = vmatprep.subr.bf16.mxu0 0
        %987 = vmatpush1.bf16.msra.mxu0 0
        %988 = vmatprep.mubr.bf16.mxu0 0
        %989 = vmatmul.mubr.bf16.gmra.mrb[0].mxu0 %v954
        %v990 = vpop.f32.mrb[0].mxu0
        %v991 = vadd.f32 0.0, %v990
        %v992 = vpop.f32.mrb[0].mxu0
        %v993 = vpop.f32.mrb[0].mxu0
        %v994 = vpop.f32.mrb[0].mxu0
        %995 = vdwg.mxu0
        %v996 = vadd.f32 %v839, %v991
        %v997 = vld [vmem:[%s3] sm:$0x1]
        %v999 = vlaneseq
        %v1000 = vshrl.u32 %v999, 7
        %v1001 = vsub.s32 0, %v1000
        %v1002 = vrot.slane %v997, %v1001
        %v1004 = vadd.f32 %v996, %v1002
        %vm1005 = vcmp.ge.f32.partialorder %v1004, 0.0
        %v1006 = vmul.f32 %v1004, 0.2
        %v1007 = vsel %vm1005, %v1004, %v1006
        %s1008 = scalar_lea.vmem %s3, 1
        %v1009 = vld [vmem:[%s1008] sm:$0x1]
        %v1011 = vlaneseq
        %v1012 = vshrl.u32 %v1011, 7
        %v1013 = vsub.s32 0, %v1012
        %v1014 = vrot.slane %v1009, %v1013
        %v1016 = vmul.f32 %v1007, %v1014
        %s1017 = scalar_lea.vmem %s3, 2
        %v1018 = vld [vmem:[%s1017] sm:$0x1]
        %v1020 = vlaneseq
        %v1021 = vshrl.u32 %v1020, 7
        %v1022 = vsub.s32 0, %v1021
        %v1023 = vrot.slane %v1018, %v1022
        %v1025 = vadd.f32 %v1016, %v1023
        %v1026 = vld [vmem:[%s4] sm:$0xf]
        %vm1027 = vcmask 64512
        %v1029 = vsel %vm1027, %v1026, 0
        %1031 = vmatprep.subr.mxu0 0.0
        %1032 = vmatpush1.msra.mxu0 %v1025
        %1033 = vmatprep.subr.mxu0 0.0
        %1034 = vmatpush1.msra.mxu0 0.0
        %1035 = vmatprep.subr.mxu0 0.0
        %1036 = vmatpush1.msra.mxu0 0.0
        %1037 = vmatprep.subr.mxu0 0.0
        %1038 = vmatpush1.msra.mxu0 0.0
        %1039 = vmatprep.subr.mxu0 0.0
        %1040 = vmatpush1.msra.mxu0 0.0
        %1041 = vmatprep.subr.mxu0 0.0
        %1042 = vmatpush1.msra.mxu0 0.0
        %1043 = vmatprep.subr.mxu0 0.0
        %1044 = vmatpush1.msra.mxu0 0.0
        %1045 = vmatprep.subr.mxu0 0.0
        %1046 = vmatpush1.msra.mxu0 0.0
        %1047 = vmatprep.subr.mxu0 0.0
        %1048 = vmatpush1.msra.mxu0 0.0
        %1049 = vmatprep.subr.mxu0 0.0
        %1050 = vmatpush1.msra.mxu0 0.0
        %1051 = vmatprep.subr.mxu0 0.0
        %1052 = vmatpush1.msra.mxu0 0.0
        %1053 = vmatprep.subr.mxu0 0.0
        %1054 = vmatpush1.msra.mxu0 0.0
        %1055 = vmatprep.subr.mxu0 0.0
        %1056 = vmatpush1.msra.mxu0 0.0
        %1057 = vmatprep.subr.mxu0 0.0
        %1058 = vmatpush1.msra.mxu0 0.0
        %1059 = vmatprep.subr.mxu0 0.0
        %1060 = vmatpush1.msra.mxu0 0.0
        %1061 = vmatprep.subr.mxu0 0.0
        %1062 = vmatpush1.msra.mxu0 0.0
        %1063 = vmatprep.subr.mxu0 0.0
        %1064 = vmatpush1.msra.mxu0 0.0
        %1065 = vmatprep.subr.mxu0 0.0
        %1066 = vmatpush1.msra.mxu0 0.0
        %1067 = vmatprep.subr.mxu0 0.0
        %1068 = vmatpush1.msra.mxu0 0.0
        %1069 = vmatprep.subr.mxu0 0.0
        %1070 = vmatpush1.msra.mxu0 0.0
        %1071 = vmatprep.subr.mxu0 0.0
        %1072 = vmatpush1.msra.mxu0 0.0
        %1073 = vmatprep.subr.mxu0 0.0
        %1074 = vmatpush1.msra.mxu0 0.0
        %1075 = vmatprep.subr.mxu0 0.0
        %1076 = vmatpush1.msra.mxu0 0.0
        %1077 = vmatprep.subr.mxu0 0.0
        %1078 = vmatpush1.msra.mxu0 0.0
        %1079 = vmatprep.subr.mxu0 0.0
        %1080 = vmatpush1.msra.mxu0 0.0
        %1081 = vmatprep.subr.mxu0 0.0
        %1082 = vmatpush1.msra.mxu0 0.0
        %1083 = vmatprep.subr.mxu0 0.0
        %1084 = vmatpush1.msra.mxu0 0.0
        %1085 = vmatprep.subr.mxu0 0.0
        %1086 = vmatpush1.msra.mxu0 0.0
        %1087 = vmatprep.subr.mxu0 0.0
        %1088 = vmatpush1.msra.mxu0 0.0
        %1089 = vmatprep.subr.mxu0 0.0
        %1090 = vmatpush1.msra.mxu0 0.0
        %1091 = vmatprep.subr.mxu0 0.0
        %1092 = vmatpush1.msra.mxu0 0.0
        %1093 = vmatprep.subr.mxu0 0.0
        %1094 = vmatpush1.msra.mxu0 0.0
        %1095 = vmatprep.mubr.f32.mxu0 0.0
        %1096 = vmatmul.mubr.f32.gmra.mrb[0].mxu0 %v1029
        %v1097 = vpop.f32.mrb[0].mxu0
        %v1098 = vadd.f32 0.0, %v1097
        %v1099 = vpop.f32.mrb[0].mxu0
        %1100 = vdwg.mxu0
        %v1101 = vpack.c.bf16 %v1098, %v1098
        %v1102 = vld [vmem:[%s5] sm:$0xf]
        %v1103 = vld [vmem:[%s5 + $0x4] sm:$0xf]
        %v1104 = vld [vmem:[%s5 + $0x8] sm:$0xf]
        %v1105 = vld [vmem:[%s5 + $0xc] sm:$0xf]
        %v1106 = vld [vmem:[%s5 + $0x10] sm:$0xf]
        %v1107 = vld [vmem:[%s5 + $0x14] sm:$0xf]
        %v1108 = vld [vmem:[%s5 + $0x18] sm:$0xf]
        %v1109 = vld [vmem:[%s5 + $0x1c] sm:$0xf]
        %v1110 = vld [vmem:[%s5 + $0x20] sm:$0xf]
        %v1111 = vld [vmem:[%s5 + $0x24] sm:$0xf]
        %v1112 = vld [vmem:[%s5 + $0x28] sm:$0xf]
        %v1113 = vld [vmem:[%s5 + $0x2c] sm:$0xf]
        %v1114 = vld [vmem:[%s5 + $0x30] sm:$0xf]
        %v1115 = vld [vmem:[%s5 + $0x34] sm:$0xf]
        %v1116 = vld [vmem:[%s5 + $0x38] sm:$0xf]
        %v1117 = vld [vmem:[%s5 + $0x3c] sm:$0xf]
        %s1118 = scalar_lea.vmem %s4, 4
        %v1119 = vld [vmem:[%s1118] sm:$0xf]
        %v1121 = vsel %vm1027, %v1119, 0
        %1123 = vmatprep.subr.mxu0 0.0
        %1124 = vmatpush1.msra.mxu0 %v1025
        %1125 = vmatprep.subr.mxu0 0.0
        %1126 = vmatpush1.msra.mxu0 0.0
        %1127 = vmatprep.subr.mxu0 0.0
        %1128 = vmatpush1.msra.mxu0 0.0
        %1129 = vmatprep.subr.mxu0 0.0
        %1130 = vmatpush1.msra.mxu0 0.0
        %1131 = vmatprep.subr.mxu0 0.0
        %1132 = vmatpush1.msra.mxu0 0.0
        %1133 = vmatprep.subr.mxu0 0.0
        %1134 = vmatpush1.msra.mxu0 0.0
        %1135 = vmatprep.subr.mxu0 0.0
        %1136 = vmatpush1.msra.mxu0 0.0
        %1137 = vmatprep.subr.mxu0 0.0
        %1138 = vmatpush1.msra.mxu0 0.0
        %1139 = vmatprep.subr.mxu0 0.0
        %1140 = vmatpush1.msra.mxu0 0.0
        %1141 = vmatprep.subr.mxu0 0.0
        %1142 = vmatpush1.msra.mxu0 0.0
        %1143 = vmatprep.subr.mxu0 0.0
        %1144 = vmatpush1.msra.mxu0 0.0
        %1145 = vmatprep.subr.mxu0 0.0
        %1146 = vmatpush1.msra.mxu0 0.0
        %1147 = vmatprep.subr.mxu0 0.0
        %1148 = vmatpush1.msra.mxu0 0.0
        %1149 = vmatprep.subr.mxu0 0.0
        %1150 = vmatpush1.msra.mxu0 0.0
        %1151 = vmatprep.subr.mxu0 0.0
        %1152 = vmatpush1.msra.mxu0 0.0
        %1153 = vmatprep.subr.mxu0 0.0
        %1154 = vmatpush1.msra.mxu0 0.0
        %1155 = vmatprep.subr.mxu0 0.0
        %1156 = vmatpush1.msra.mxu0 0.0
        %1157 = vmatprep.subr.mxu0 0.0
        %1158 = vmatpush1.msra.mxu0 0.0
        %1159 = vmatprep.subr.mxu0 0.0
        %1160 = vmatpush1.msra.mxu0 0.0
        %1161 = vmatprep.subr.mxu0 0.0
        %1162 = vmatpush1.msra.mxu0 0.0
        %1163 = vmatprep.subr.mxu0 0.0
        %1164 = vmatpush1.msra.mxu0 0.0
        %1165 = vmatprep.subr.mxu0 0.0
        %1166 = vmatpush1.msra.mxu0 0.0
        %1167 = vmatprep.subr.mxu0 0.0
        %1168 = vmatpush1.msra.mxu0 0.0
        %1169 = vmatprep.subr.mxu0 0.0
        %1170 = vmatpush1.msra.mxu0 0.0
        %1171 = vmatprep.subr.mxu0 0.0
        %1172 = vmatpush1.msra.mxu0 0.0
        %1173 = vmatprep.subr.mxu0 0.0
        %1174 = vmatpush1.msra.mxu0 0.0
        %1175 = vmatprep.subr.mxu0 0.0
        %1176 = vmatpush1.msra.mxu0 0.0
        %1177 = vmatprep.subr.mxu0 0.0
        %1178 = vmatpush1.msra.mxu0 0.0
        %1179 = vmatprep.subr.mxu0 0.0
        %1180 = vmatpush1.msra.mxu0 0.0
        %1181 = vmatprep.subr.mxu0 0.0
        %1182 = vmatpush1.msra.mxu0 0.0
        %1183 = vmatprep.subr.mxu0 0.0
        %1184 = vmatpush1.msra.mxu0 0.0
        %1185 = vmatprep.subr.mxu0 0.0
        %1186 = vmatpush1.msra.mxu0 0.0
        %1187 = vmatprep.mubr.f32.mxu0 0.0
        %1188 = vmatmul.mubr.f32.gmra.mrb[0].mxu0 %v1121
        %v1189 = vpop.f32.mrb[0].mxu0
        %v1190 = vadd.f32 0.0, %v1189
        %v1191 = vpop.f32.mrb[0].mxu0
        %1192 = vdwg.mxu0
        %v1193 = vpack.c.bf16 %v1190, %v1190
        %s1194 = scalar_lea.vmem %s5, 64
        %v1195 = vld [vmem:[%s1194] sm:$0xf]
        %v1196 = vld [vmem:[%s1194 + $0x4] sm:$0xf]
        %v1197 = vld [vmem:[%s1194 + $0x8] sm:$0xf]
        %v1198 = vld [vmem:[%s1194 + $0xc] sm:$0xf]
        %v1199 = vld [vmem:[%s1194 + $0x10] sm:$0xf]
        %v1200 = vld [vmem:[%s1194 + $0x14] sm:$0xf]
        %v1201 = vld [vmem:[%s1194 + $0x18] sm:$0xf]
        %v1202 = vld [vmem:[%s1194 + $0x1c] sm:$0xf]
        %v1203 = vld [vmem:[%s1194 + $0x20] sm:$0xf]
        %v1204 = vld [vmem:[%s1194 + $0x24] sm:$0xf]
        %v1205 = vld [vmem:[%s1194 + $0x28] sm:$0xf]
        %v1206 = vld [vmem:[%s1194 + $0x2c] sm:$0xf]
        %v1207 = vld [vmem:[%s1194 + $0x30] sm:$0xf]
        %v1208 = vld [vmem:[%s1194 + $0x34] sm:$0xf]
        %v1209 = vld [vmem:[%s1194 + $0x38] sm:$0xf]
        %v1210 = vld [vmem:[%s1194 + $0x3c] sm:$0xf]
        %v1227 = vunpack.c.l.b16 %v1195
        %v1228 = vunpack.c.l.b16 %v1196
        %v1229 = vunpack.c.l.b16 %v1197
        %v1230 = vunpack.c.l.b16 %v1198
        %v1231 = vunpack.c.l.b16 %v1199
        %v1232 = vunpack.c.l.b16 %v1200
        %v1233 = vunpack.c.l.b16 %v1201
        %v1234 = vunpack.c.l.b16 %v1202
        %v1235 = vunpack.c.l.b16 %v1203
        %v1236 = vunpack.c.l.b16 %v1204
        %v1237 = vunpack.c.l.b16 %v1205
        %v1238 = vunpack.c.l.b16 %v1206
        %v1239 = vunpack.c.l.b16 %v1207
        %v1240 = vunpack.c.l.b16 %v1208
        %v1241 = vunpack.c.l.b16 %v1209
        %v1242 = vunpack.c.l.b16 %v1210
        %v1243 = vpack.c.b16 %v1228, %v1227
        %v1244 = vpack.c.b16 %v1230, %v1229
        %v1245 = vpack.c.b16 %v1232, %v1231
        %v1246 = vpack.c.b16 %v1234, %v1233
        %v1247 = vpack.c.b16 %v1236, %v1235
        %v1248 = vpack.c.b16 %v1238, %v1237
        %v1249 = vpack.c.b16 %v1240, %v1239
        %v1250 = vpack.c.b16 %v1242, %v1241
        %1259 = vmatprep.subr.bf16.mxu0 0
        %1260 = vmatpush1.bf16.msra.mxu0 %v1243
        %1261 = vmatprep.subr.bf16.mxu0 0
        %1262 = vmatpush1.bf16.msra.mxu0 %v1244
        %1263 = vmatprep.subr.bf16.mxu0 0
        %1264 = vmatpush1.bf16.msra.mxu0 %v1245
        %1265 = vmatprep.subr.bf16.mxu0 0
        %1266 = vmatpush1.bf16.msra.mxu0 %v1246
        %1267 = vmatprep.subr.bf16.mxu0 0
        %1268 = vmatpush1.bf16.msra.mxu0 %v1247
        %1269 = vmatprep.subr.bf16.mxu0 0
        %1270 = vmatpush1.bf16.msra.mxu0 %v1248
        %1271 = vmatprep.subr.bf16.mxu0 0
        %1272 = vmatpush1.bf16.msra.mxu0 %v1249
        %1273 = vmatprep.subr.bf16.mxu0 0
        %1274 = vmatpush1.bf16.msra.mxu0 %v1250
        %1275 = vmatprep.subr.bf16.mxu0 0
        %1276 = vmatpush1.bf16.msra.mxu0 0
        %1277 = vmatprep.subr.bf16.mxu0 0
        %1278 = vmatpush1.bf16.msra.mxu0 0
        %1279 = vmatprep.subr.bf16.mxu0 0
        %1280 = vmatpush1.bf16.msra.mxu0 0
        %1281 = vmatprep.subr.bf16.mxu0 0
        %1282 = vmatpush1.bf16.msra.mxu0 0
        %1283 = vmatprep.subr.bf16.mxu0 0
        %1284 = vmatpush1.bf16.msra.mxu0 0
        %1285 = vmatprep.subr.bf16.mxu0 0
        %1286 = vmatpush1.bf16.msra.mxu0 0
        %1287 = vmatprep.subr.bf16.mxu0 0
        %1288 = vmatpush1.bf16.msra.mxu0 0
        %1289 = vmatprep.subr.bf16.mxu0 0
        %1290 = vmatpush1.bf16.msra.mxu0 0
        %1291 = vmatprep.mubr.bf16.mxu0 0
        %1292 = vmatmul.mubr.bf16.gmra.mrb[0].mxu0 %v1193
        %v1293 = vpop.f32.mrb[0].mxu0
        %v1294 = vadd.f32 0.0, %v1293
        %v1295 = vpop.f32.mrb[0].mxu0
        %v1296 = vpop.f32.mrb[0].mxu0
        %v1297 = vpop.f32.mrb[0].mxu0
        %1298 = vdwg.mxu0
        %v1315 = vunpack.c.l.b16 %v1102
        %v1316 = vunpack.c.l.b16 %v1103
        %v1317 = vunpack.c.l.b16 %v1104
        %v1318 = vunpack.c.l.b16 %v1105
        %v1319 = vunpack.c.l.b16 %v1106
        %v1320 = vunpack.c.l.b16 %v1107
        %v1321 = vunpack.c.l.b16 %v1108
        %v1322 = vunpack.c.l.b16 %v1109
        %v1323 = vunpack.c.l.b16 %v1110
        %v1324 = vunpack.c.l.b16 %v1111
        %v1325 = vunpack.c.l.b16 %v1112
        %v1326 = vunpack.c.l.b16 %v1113
        %v1327 = vunpack.c.l.b16 %v1114
        %v1328 = vunpack.c.l.b16 %v1115
        %v1329 = vunpack.c.l.b16 %v1116
        %v1330 = vunpack.c.l.b16 %v1117
        %v1331 = vpack.c.b16 %v1316, %v1315
        %v1332 = vpack.c.b16 %v1318, %v1317
        %v1333 = vpack.c.b16 %v1320, %v1319
        %v1334 = vpack.c.b16 %v1322, %v1321
        %v1335 = vpack.c.b16 %v1324, %v1323
        %v1336 = vpack.c.b16 %v1326, %v1325
        %v1337 = vpack.c.b16 %v1328, %v1327
        %v1338 = vpack.c.b16 %v1330, %v1329
        %1347 = vmatprep.subr.bf16.mxu0 0
        %1348 = vmatpush1.bf16.msra.mxu0 %v1331
        %1349 = vmatprep.subr.bf16.mxu0 0
        %1350 = vmatpush1.bf16.msra.mxu0 %v1332
        %1351 = vmatprep.subr.bf16.mxu0 0
        %1352 = vmatpush1.bf16.msra.mxu0 %v1333
        %1353 = vmatprep.subr.bf16.mxu0 0
        %1354 = vmatpush1.bf16.msra.mxu0 %v1334
        %1355 = vmatprep.subr.bf16.mxu0 0
        %1356 = vmatpush1.bf16.msra.mxu0 %v1335
        %1357 = vmatprep.subr.bf16.mxu0 0
        %1358 = vmatpush1.bf16.msra.mxu0 %v1336
        %1359 = vmatprep.subr.bf16.mxu0 0
        %1360 = vmatpush1.bf16.msra.mxu0 %v1337
        %1361 = vmatprep.subr.bf16.mxu0 0
        %1362 = vmatpush1.bf16.msra.mxu0 %v1338
        %1363 = vmatprep.subr.bf16.mxu0 0
        %1364 = vmatpush1.bf16.msra.mxu0 0
        %1365 = vmatprep.subr.bf16.mxu0 0
        %1366 = vmatpush1.bf16.msra.mxu0 0
        %1367 = vmatprep.subr.bf16.mxu0 0
        %1368 = vmatpush1.bf16.msra.mxu0 0
        %1369 = vmatprep.subr.bf16.mxu0 0
        %1370 = vmatpush1.bf16.msra.mxu0 0
        %1371 = vmatprep.subr.bf16.mxu0 0
        %1372 = vmatpush1.bf16.msra.mxu0 0
        %1373 = vmatprep.subr.bf16.mxu0 0
        %1374 = vmatpush1.bf16.msra.mxu0 0
        %1375 = vmatprep.subr.bf16.mxu0 0
        %1376 = vmatpush1.bf16.msra.mxu0 0
        %1377 = vmatprep.subr.bf16.mxu0 0
        %1378 = vmatpush1.bf16.msra.mxu0 0
        %1379 = vmatprep.mubr.bf16.mxu0 0
        %1380 = vmatmul.mubr.bf16.gmra.mrb[0].mxu0 %v1101
        %v1381 = vpop.f32.mrb[0].mxu0
        %v1382 = vadd.f32 %v1294, %v1381
        %v1383 = vpop.f32.mrb[0].mxu0
        %v1384 = vpop.f32.mrb[0].mxu0
        %v1385 = vpop.f32.mrb[0].mxu0
        %1386 = vdwg.mxu0
        %s1387 = scalar_lea.vmem %s4, 8
        %v1388 = vld [vmem:[%s1387] sm:$0xf]
        %v1390 = vsel %vm1027, %v1388, 0
        %1392 = vmatprep.subr.mxu0 0.0
        %1393 = vmatpush1.msra.mxu0 %v1025
        %1394 = vmatprep.subr.mxu0 0.0
        %1395 = vmatpush1.msra.mxu0 0.0
        %1396 = vmatprep.subr.mxu0 0.0
        %1397 = vmatpush1.msra.mxu0 0.0
        %1398 = vmatprep.subr.mxu0 0.0
        %1399 = vmatpush1.msra.mxu0 0.0
        %1400 = vmatprep.subr.mxu0 0.0
        %1401 = vmatpush1.msra.mxu0 0.0
        %1402 = vmatprep.subr.mxu0 0.0
        %1403 = vmatpush1.msra.mxu0 0.0
        %1404 = vmatprep.subr.mxu0 0.0
        %1405 = vmatpush1.msra.mxu0 0.0
        %1406 = vmatprep.subr.mxu0 0.0
        %1407 = vmatpush1.msra.mxu0 0.0
        %1408 = vmatprep.subr.mxu0 0.0
        %1409 = vmatpush1.msra.mxu0 0.0
        %1410 = vmatprep.subr.mxu0 0.0
        %1411 = vmatpush1.msra.mxu0 0.0
        %1412 = vmatprep.subr.mxu0 0.0
        %1413 = vmatpush1.msra.mxu0 0.0
        %1414 = vmatprep.subr.mxu0 0.0
        %1415 = vmatpush1.msra.mxu0 0.0
        %1416 = vmatprep.subr.mxu0 0.0
        %1417 = vmatpush1.msra.mxu0 0.0
        %1418 = vmatprep.subr.mxu0 0.0
        %1419 = vmatpush1.msra.mxu0 0.0
        %1420 = vmatprep.subr.mxu0 0.0
        %1421 = vmatpush1.msra.mxu0 0.0
        %1422 = vmatprep.subr.mxu0 0.0
        %1423 = vmatpush1.msra.mxu0 0.0
        %1424 = vmatprep.subr.mxu0 0.0
        %1425 = vmatpush1.msra.mxu0 0.0
        %1426 = vmatprep.subr.mxu0 0.0
        %1427 = vmatpush1.msra.mxu0 0.0
        %1428 = vmatprep.subr.mxu0 0.0
        %1429 = vmatpush1.msra.mxu0 0.0
        %1430 = vmatprep.subr.mxu0 0.0
        %1431 = vmatpush1.msra.mxu0 0.0
        %1432 = vmatprep.subr.mxu0 0.0
        %1433 = vmatpush1.msra.mxu0 0.0
        %1434 = vmatprep.subr.mxu0 0.0
        %1435 = vmatpush1.msra.mxu0 0.0
        %1436 = vmatprep.subr.mxu0 0.0
        %1437 = vmatpush1.msra.mxu0 0.0
        %1438 = vmatprep.subr.mxu0 0.0
        %1439 = vmatpush1.msra.mxu0 0.0
        %1440 = vmatprep.subr.mxu0 0.0
        %1441 = vmatpush1.msra.mxu0 0.0
        %1442 = vmatprep.subr.mxu0 0.0
        %1443 = vmatpush1.msra.mxu0 0.0
        %1444 = vmatprep.subr.mxu0 0.0
        %1445 = vmatpush1.msra.mxu0 0.0
        %1446 = vmatprep.subr.mxu0 0.0
        %1447 = vmatpush1.msra.mxu0 0.0
        %1448 = vmatprep.subr.mxu0 0.0
        %1449 = vmatpush1.msra.mxu0 0.0
        %1450 = vmatprep.subr.mxu0 0.0
        %1451 = vmatpush1.msra.mxu0 0.0
        %1452 = vmatprep.subr.mxu0 0.0
        %1453 = vmatpush1.msra.mxu0 0.0
        %1454 = vmatprep.subr.mxu0 0.0
        %1455 = vmatpush1.msra.mxu0 0.0
        %1456 = vmatprep.mubr.f32.mxu0 0.0
        %1457 = vmatmul.mubr.f32.gmra.mrb[0].mxu0 %v1390
        %v1458 = vpop.f32.mrb[0].mxu0
        %v1459 = vadd.f32 0.0, %v1458
        %v1460 = vpop.f32.mrb[0].mxu0
        %1461 = vdwg.mxu0
        %v1462 = vpack.c.bf16 %v1459, %v1459
        %s1463 = scalar_lea.vmem %s5, 128
        %v1464 = vld [vmem:[%s1463] sm:$0xf]
        %v1465 = vld [vmem:[%s1463 + $0x4] sm:$0xf]
        %v1466 = vld [vmem:[%s1463 + $0x8] sm:$0xf]
        %v1467 = vld [vmem:[%s1463 + $0xc] sm:$0xf]
        %v1468 = vld [vmem:[%s1463 + $0x10] sm:$0xf]
        %v1469 = vld [vmem:[%s1463 + $0x14] sm:$0xf]
        %v1470 = vld [vmem:[%s1463 + $0x18] sm:$0xf]
        %v1471 = vld [vmem:[%s1463 + $0x1c] sm:$0xf]
        %v1472 = vld [vmem:[%s1463 + $0x20] sm:$0xf]
        %v1473 = vld [vmem:[%s1463 + $0x24] sm:$0xf]
        %v1474 = vld [vmem:[%s1463 + $0x28] sm:$0xf]
        %v1475 = vld [vmem:[%s1463 + $0x2c] sm:$0xf]
        %v1476 = vld [vmem:[%s1463 + $0x30] sm:$0xf]
        %v1477 = vld [vmem:[%s1463 + $0x34] sm:$0xf]
        %v1478 = vld [vmem:[%s1463 + $0x38] sm:$0xf]
        %v1479 = vld [vmem:[%s1463 + $0x3c] sm:$0xf]
        %v1496 = vunpack.c.l.b16 %v1464
        %v1497 = vunpack.c.l.b16 %v1465
        %v1498 = vunpack.c.l.b16 %v1466
        %v1499 = vunpack.c.l.b16 %v1467
        %v1500 = vunpack.c.l.b16 %v1468
        %v1501 = vunpack.c.l.b16 %v1469
        %v1502 = vunpack.c.l.b16 %v1470
        %v1503 = vunpack.c.l.b16 %v1471
        %v1504 = vunpack.c.l.b16 %v1472
        %v1505 = vunpack.c.l.b16 %v1473
        %v1506 = vunpack.c.l.b16 %v1474
        %v1507 = vunpack.c.l.b16 %v1475
        %v1508 = vunpack.c.l.b16 %v1476
        %v1509 = vunpack.c.l.b16 %v1477
        %v1510 = vunpack.c.l.b16 %v1478
        %v1511 = vunpack.c.l.b16 %v1479
        %v1512 = vpack.c.b16 %v1497, %v1496
        %v1513 = vpack.c.b16 %v1499, %v1498
        %v1514 = vpack.c.b16 %v1501, %v1500
        %v1515 = vpack.c.b16 %v1503, %v1502
        %v1516 = vpack.c.b16 %v1505, %v1504
        %v1517 = vpack.c.b16 %v1507, %v1506
        %v1518 = vpack.c.b16 %v1509, %v1508
        %v1519 = vpack.c.b16 %v1511, %v1510
        %1528 = vmatprep.subr.bf16.mxu0 0
        %1529 = vmatpush1.bf16.msra.mxu0 %v1512
        %1530 = vmatprep.subr.bf16.mxu0 0
        %1531 = vmatpush1.bf16.msra.mxu0 %v1513
        %1532 = vmatprep.subr.bf16.mxu0 0
        %1533 = vmatpush1.bf16.msra.mxu0 %v1514
        %1534 = vmatprep.subr.bf16.mxu0 0
        %1535 = vmatpush1.bf16.msra.mxu0 %v1515
        %1536 = vmatprep.subr.bf16.mxu0 0
        %1537 = vmatpush1.bf16.msra.mxu0 %v1516
        %1538 = vmatprep.subr.bf16.mxu0 0
        %1539 = vmatpush1.bf16.msra.mxu0 %v1517
        %1540 = vmatprep.subr.bf16.mxu0 0
        %1541 = vmatpush1.bf16.msra.mxu0 %v1518
        %1542 = vmatprep.subr.bf16.mxu0 0
        %1543 = vmatpush1.bf16.msra.mxu0 %v1519
        %1544 = vmatprep.subr.bf16.mxu0 0
        %1545 = vmatpush1.bf16.msra.mxu0 0
        %1546 = vmatprep.subr.bf16.mxu0 0
        %1547 = vmatpush1.bf16.msra.mxu0 0
        %1548 = vmatprep.subr.bf16.mxu0 0
        %1549 = vmatpush1.bf16.msra.mxu0 0
        %1550 = vmatprep.subr.bf16.mxu0 0
        %1551 = vmatpush1.bf16.msra.mxu0 0
        %1552 = vmatprep.subr.bf16.mxu0 0
        %1553 = vmatpush1.bf16.msra.mxu0 0
        %1554 = vmatprep.subr.bf16.mxu0 0
        %1555 = vmatpush1.bf16.msra.mxu0 0
        %1556 = vmatprep.subr.bf16.mxu0 0
        %1557 = vmatpush1.bf16.msra.mxu0 0
        %1558 = vmatprep.subr.bf16.mxu0 0
        %1559 = vmatpush1.bf16.msra.mxu0 0
        %1560 = vmatprep.mubr.bf16.mxu0 0
        %1561 = vmatmul.mubr.bf16.gmra.mrb[0].mxu0 %v1462
        %v1562 = vpop.f32.mrb[0].mxu0
        %v1563 = vadd.f32 0.0, %v1562
        %v1564 = vpop.f32.mrb[0].mxu0
        %v1565 = vpop.f32.mrb[0].mxu0
        %v1566 = vpop.f32.mrb[0].mxu0
        %1567 = vdwg.mxu0
        %v1568 = vadd.f32 %v1382, %v1563
        %v1569 = vld [vmem:[%s6] sm:$0x1]
        %v1571 = vlaneseq
        %v1572 = vshrl.u32 %v1571, 7
        %v1573 = vsub.s32 0, %v1572
        %v1574 = vrot.slane %v1569, %v1573
        %v1576 = vadd.f32 %v1568, %v1574
        %vm1577 = vcmp.ge.f32.partialorder %v1576, 0.0
        %v1578 = vmul.f32 %v1576, 0.2
        %v1579 = vsel %vm1577, %v1576, %v1578
        %s1580 = scalar_lea.vmem %s6, 1
        %v1581 = vld [vmem:[%s1580] sm:$0x1]
        %v1583 = vlaneseq
        %v1584 = vshrl.u32 %v1583, 7
        %v1585 = vsub.s32 0, %v1584
        %v1586 = vrot.slane %v1581, %v1585
        %v1588 = vmul.f32 %v1579, %v1586
        %s1589 = scalar_lea.vmem %s6, 2
        %v1590 = vld [vmem:[%s1589] sm:$0x1]
        %v1592 = vlaneseq
        %v1593 = vshrl.u32 %v1592, 7
        %v1594 = vsub.s32 0, %v1593
        %v1595 = vrot.slane %v1590, %v1594
        %v1597 = vadd.f32 %v1588, %v1595
        %v1598 = vld [vmem:[%s7] sm:$0x3]
        %vm1599 = vcmask 31744
        %v1601 = vsel %vm1599, %v1598, 0
        %vm1603 = vcmask 1043456
        %v1605 = vsel %vm1603, %v1597, 0
        %1607 = vmatprep.subr.mxu0 0.0
        %1608 = vmatpush1.msra.mxu0 %v1605
        %1609 = vmatprep.subr.mxu0 0.0
        %1610 = vmatpush1.msra.mxu0 0.0
        %1611 = vmatprep.subr.mxu0 0.0
        %1612 = vmatpush1.msra.mxu0 0.0
        %1613 = vmatprep.subr.mxu0 0.0
        %1614 = vmatpush1.msra.mxu0 0.0
        %1615 = vmatprep.subr.mxu0 0.0
        %1616 = vmatpush1.msra.mxu0 0.0
        %1617 = vmatprep.subr.mxu0 0.0
        %1618 = vmatpush1.msra.mxu0 0.0
        %1619 = vmatprep.subr.mxu0 0.0
        %1620 = vmatpush1.msra.mxu0 0.0
        %1621 = vmatprep.subr.mxu0 0.0
        %1622 = vmatpush1.msra.mxu0 0.0
        %1623 = vmatprep.subr.mxu0 0.0
        %1624 = vmatpush1.msra.mxu0 0.0
        %1625 = vmatprep.subr.mxu0 0.0
        %1626 = vmatpush1.msra.mxu0 0.0
        %1627 = vmatprep.subr.mxu0 0.0
        %1628 = vmatpush1.msra.mxu0 0.0
        %1629 = vmatprep.subr.mxu0 0.0
        %1630 = vmatpush1.msra.mxu0 0.0
        %1631 = vmatprep.subr.mxu0 0.0
        %1632 = vmatpush1.msra.mxu0 0.0
        %1633 = vmatprep.subr.mxu0 0.0
        %1634 = vmatpush1.msra.mxu0 0.0
        %1635 = vmatprep.subr.mxu0 0.0
        %1636 = vmatpush1.msra.mxu0 0.0
        %1637 = vmatprep.subr.mxu0 0.0
        %1638 = vmatpush1.msra.mxu0 0.0
        %1639 = vmatprep.subr.mxu0 0.0
        %1640 = vmatpush1.msra.mxu0 0.0
        %1641 = vmatprep.subr.mxu0 0.0
        %1642 = vmatpush1.msra.mxu0 0.0
        %1643 = vmatprep.subr.mxu0 0.0
        %1644 = vmatpush1.msra.mxu0 0.0
        %1645 = vmatprep.subr.mxu0 0.0
        %1646 = vmatpush1.msra.mxu0 0.0
        %1647 = vmatprep.subr.mxu0 0.0
        %1648 = vmatpush1.msra.mxu0 0.0
        %1649 = vmatprep.subr.mxu0 0.0
        %1650 = vmatpush1.msra.mxu0 0.0
        %1651 = vmatprep.subr.mxu0 0.0
        %1652 = vmatpush1.msra.mxu0 0.0
        %1653 = vmatprep.subr.mxu0 0.0
        %1654 = vmatpush1.msra.mxu0 0.0
        %1655 = vmatprep.subr.mxu0 0.0
        %1656 = vmatpush1.msra.mxu0 0.0
        %1657 = vmatprep.subr.mxu0 0.0
        %1658 = vmatpush1.msra.mxu0 0.0
        %1659 = vmatprep.subr.mxu0 0.0
        %1660 = vmatpush1.msra.mxu0 0.0
        %1661 = vmatprep.subr.mxu0 0.0
        %1662 = vmatpush1.msra.mxu0 0.0
        %1663 = vmatprep.subr.mxu0 0.0
        %1664 = vmatpush1.msra.mxu0 0.0
        %1665 = vmatprep.subr.mxu0 0.0
        %1666 = vmatpush1.msra.mxu0 0.0
        %1667 = vmatprep.subr.mxu0 0.0
        %1668 = vmatpush1.msra.mxu0 0.0
        %1669 = vmatprep.subr.mxu0 0.0
        %1670 = vmatpush1.msra.mxu0 0.0
        %1671 = vmatprep.mubr.f32.mxu0 0.0
        %1672 = vmatmul.mubr.f32.gmra.mrb[0].mxu0 %v1601
        %v1673 = vpop.f32.mrb[0].mxu0
        %v1674 = vadd.f32 0.0, %v1673
        %v1675 = vpop.f32.mrb[0].mxu0
        %1676 = vdwg.mxu0
        %v1677 = vpack.c.bf16 %v1674, %v1674
        %v1678 = vld [vmem:[%s8] sm:$0xf]
        %v1679 = vld [vmem:[%s8 + $0x4] sm:$0xf]
        %v1680 = vld [vmem:[%s8 + $0x8] sm:$0xf]
        %v1681 = vld [vmem:[%s8 + $0xc] sm:$0xf]
        %v1682 = vld [vmem:[%s8 + $0x10] sm:$0xf]
        %v1683 = vld [vmem:[%s8 + $0x14] sm:$0xf]
        %v1684 = vld [vmem:[%s8 + $0x18] sm:$0xf]
        %v1685 = vld [vmem:[%s8 + $0x1c] sm:$0xf]
        %v1686 = vld [vmem:[%s8 + $0x20] sm:$0xf]
        %v1687 = vld [vmem:[%s8 + $0x24] sm:$0xf]
        %v1688 = vld [vmem:[%s8 + $0x28] sm:$0xf]
        %v1689 = vld [vmem:[%s8 + $0x2c] sm:$0xf]
        %v1690 = vld [vmem:[%s8 + $0x30] sm:$0xf]
        %v1691 = vld [vmem:[%s8 + $0x34] sm:$0xf]
        %v1692 = vld [vmem:[%s8 + $0x38] sm:$0xf]
        %v1693 = vld [vmem:[%s8 + $0x3c] sm:$0xf]
        %s1694 = scalar_lea.vmem %s7, 2
        %v1695 = vld [vmem:[%s1694] sm:$0x3]
        %v1697 = vsel %vm1599, %v1695, 0
        %1699 = vmatprep.subr.mxu0 0.0
        %1700 = vmatpush1.msra.mxu0 %v1605
        %1701 = vmatprep.subr.mxu0 0.0
        %1702 = vmatpush1.msra.mxu0 0.0
        %1703 = vmatprep.subr.mxu0 0.0
        %1704 = vmatpush1.msra.mxu0 0.0
        %1705 = vmatprep.subr.mxu0 0.0
        %1706 = vmatpush1.msra.mxu0 0.0
        %1707 = vmatprep.subr.mxu0 0.0
        %1708 = vmatpush1.msra.mxu0 0.0
        %1709 = vmatprep.subr.mxu0 0.0
        %1710 = vmatpush1.msra.mxu0 0.0
        %1711 = vmatprep.subr.mxu0 0.0
        %1712 = vmatpush1.msra.mxu0 0.0
        %1713 = vmatprep.subr.mxu0 0.0
        %1714 = vmatpush1.msra.mxu0 0.0
        %1715 = vmatprep.subr.mxu0 0.0
        %1716 = vmatpush1.msra.mxu0 0.0
        %1717 = vmatprep.subr.mxu0 0.0
        %1718 = vmatpush1.msra.mxu0 0.0
        %1719 = vmatprep.subr.mxu0 0.0
        %1720 = vmatpush1.msra.mxu0 0.0
        %1721 = vmatprep.subr.mxu0 0.0
        %1722 = vmatpush1.msra.mxu0 0.0
        %1723 = vmatprep.subr.mxu0 0.0
        %1724 = vmatpush1.msra.mxu0 0.0
        %1725 = vmatprep.subr.mxu0 0.0
        %1726 = vmatpush1.msra.mxu0 0.0
        %1727 = vmatprep.subr.mxu0 0.0
        %1728 = vmatpush1.msra.mxu0 0.0
        %1729 = vmatprep.subr.mxu0 0.0
        %1730 = vmatpush1.msra.mxu0 0.0
        %1731 = vmatprep.subr.mxu0 0.0
        %1732 = vmatpush1.msra.mxu0 0.0
        %1733 = vmatprep.subr.mxu0 0.0
        %1734 = vmatpush1.msra.mxu0 0.0
        %1735 = vmatprep.subr.mxu0 0.0
        %1736 = vmatpush1.msra.mxu0 0.0
        %1737 = vmatprep.subr.mxu0 0.0
        %1738 = vmatpush1.msra.mxu0 0.0
        %1739 = vmatprep.subr.mxu0 0.0
        %1740 = vmatpush1.msra.mxu0 0.0
        %1741 = vmatprep.subr.mxu0 0.0
        %1742 = vmatpush1.msra.mxu0 0.0
        %1743 = vmatprep.subr.mxu0 0.0
        %1744 = vmatpush1.msra.mxu0 0.0
        %1745 = vmatprep.subr.mxu0 0.0
        %1746 = vmatpush1.msra.mxu0 0.0
        %1747 = vmatprep.subr.mxu0 0.0
        %1748 = vmatpush1.msra.mxu0 0.0
        %1749 = vmatprep.subr.mxu0 0.0
        %1750 = vmatpush1.msra.mxu0 0.0
        %1751 = vmatprep.subr.mxu0 0.0
        %1752 = vmatpush1.msra.mxu0 0.0
        %1753 = vmatprep.subr.mxu0 0.0
        %1754 = vmatpush1.msra.mxu0 0.0
        %1755 = vmatprep.subr.mxu0 0.0
        %1756 = vmatpush1.msra.mxu0 0.0
        %1757 = vmatprep.subr.mxu0 0.0
        %1758 = vmatpush1.msra.mxu0 0.0
        %1759 = vmatprep.subr.mxu0 0.0
        %1760 = vmatpush1.msra.mxu0 0.0
        %1761 = vmatprep.subr.mxu0 0.0
        %1762 = vmatpush1.msra.mxu0 0.0
        %1763 = vmatprep.mubr.f32.mxu0 0.0
        %1764 = vmatmul.mubr.f32.gmra.mrb[0].mxu0 %v1697
        %v1765 = vpop.f32.mrb[0].mxu0
        %v1766 = vadd.f32 0.0, %v1765
        %v1767 = vpop.f32.mrb[0].mxu0
        %1768 = vdwg.mxu0
        %v1769 = vpack.c.bf16 %v1766, %v1766
        %s1770 = scalar_lea.vmem %s8, 64
        %v1771 = vld [vmem:[%s1770] sm:$0xf]
        %v1772 = vld [vmem:[%s1770 + $0x4] sm:$0xf]
        %v1773 = vld [vmem:[%s1770 + $0x8] sm:$0xf]
        %v1774 = vld [vmem:[%s1770 + $0xc] sm:$0xf]
        %v1775 = vld [vmem:[%s1770 + $0x10] sm:$0xf]
        %v1776 = vld [vmem:[%s1770 + $0x14] sm:$0xf]
        %v1777 = vld [vmem:[%s1770 + $0x18] sm:$0xf]
        %v1778 = vld [vmem:[%s1770 + $0x1c] sm:$0xf]
        %v1779 = vld [vmem:[%s1770 + $0x20] sm:$0xf]
        %v1780 = vld [vmem:[%s1770 + $0x24] sm:$0xf]
        %v1781 = vld [vmem:[%s1770 + $0x28] sm:$0xf]
        %v1782 = vld [vmem:[%s1770 + $0x2c] sm:$0xf]
        %v1783 = vld [vmem:[%s1770 + $0x30] sm:$0xf]
        %v1784 = vld [vmem:[%s1770 + $0x34] sm:$0xf]
        %v1785 = vld [vmem:[%s1770 + $0x38] sm:$0xf]
        %v1786 = vld [vmem:[%s1770 + $0x3c] sm:$0xf]
        %v1803 = vunpack.c.l.b16 %v1771
        %v1804 = vunpack.c.l.b16 %v1772
        %v1805 = vunpack.c.l.b16 %v1773
        %v1806 = vunpack.c.l.b16 %v1774
        %v1807 = vunpack.c.l.b16 %v1775
        %v1808 = vunpack.c.l.b16 %v1776
        %v1809 = vunpack.c.l.b16 %v1777
        %v1810 = vunpack.c.l.b16 %v1778
        %v1811 = vunpack.c.l.b16 %v1779
        %v1812 = vunpack.c.l.b16 %v1780
        %v1813 = vunpack.c.l.b16 %v1781
        %v1814 = vunpack.c.l.b16 %v1782
        %v1815 = vunpack.c.l.b16 %v1783
        %v1816 = vunpack.c.l.b16 %v1784
        %v1817 = vunpack.c.l.b16 %v1785
        %v1818 = vunpack.c.l.b16 %v1786
        %v1819 = vpack.c.b16 %v1804, %v1803
        %v1820 = vpack.c.b16 %v1806, %v1805
        %v1821 = vpack.c.b16 %v1808, %v1807
        %v1822 = vpack.c.b16 %v1810, %v1809
        %v1823 = vpack.c.b16 %v1812, %v1811
        %v1824 = vpack.c.b16 %v1814, %v1813
        %v1825 = vpack.c.b16 %v1816, %v1815
        %v1826 = vpack.c.b16 %v1818, %v1817
        %1835 = vmatprep.subr.bf16.mxu0 0
        %1836 = vmatpush1.bf16.msra.mxu0 %v1819
        %1837 = vmatprep.subr.bf16.mxu0 0
        %1838 = vmatpush1.bf16.msra.mxu0 %v1820
        %1839 = vmatprep.subr.bf16.mxu0 0
        %1840 = vmatpush1.bf16.msra.mxu0 %v1821
        %1841 = vmatprep.subr.bf16.mxu0 0
        %1842 = vmatpush1.bf16.msra.mxu0 %v1822
        %1843 = vmatprep.subr.bf16.mxu0 0
        %1844 = vmatpush1.bf16.msra.mxu0 %v1823
        %1845 = vmatprep.subr.bf16.mxu0 0
        %1846 = vmatpush1.bf16.msra.mxu0 %v1824
        %1847 = vmatprep.subr.bf16.mxu0 0
        %1848 = vmatpush1.bf16.msra.mxu0 %v1825
        %1849 = vmatprep.subr.bf16.mxu0 0
        %1850 = vmatpush1.bf16.msra.mxu0 %v1826
        %1851 = vmatprep.subr.bf16.mxu0 0
        %1852 = vmatpush1.bf16.msra.mxu0 0
        %1853 = vmatprep.subr.bf16.mxu0 0
        %1854 = vmatpush1.bf16.msra.mxu0 0
        %1855 = vmatprep.subr.bf16.mxu0 0
        %1856 = vmatpush1.bf16.msra.mxu0 0
        %1857 = vmatprep.subr.bf16.mxu0 0
        %1858 = vmatpush1.bf16.msra.mxu0 0
        %1859 = vmatprep.subr.bf16.mxu0 0
        %1860 = vmatpush1.bf16.msra.mxu0 0
        %1861 = vmatprep.subr.bf16.mxu0 0
        %1862 = vmatpush1.bf16.msra.mxu0 0
        %1863 = vmatprep.subr.bf16.mxu0 0
        %1864 = vmatpush1.bf16.msra.mxu0 0
        %1865 = vmatprep.subr.bf16.mxu0 0
        %1866 = vmatpush1.bf16.msra.mxu0 0
        %1867 = vmatprep.mubr.bf16.mxu0 0
        %1868 = vmatmul.mubr.bf16.gmra.mrb[0].mxu0 %v1769
        %v1869 = vpop.f32.mrb[0].mxu0
        %v1870 = vadd.f32 0.0, %v1869
        %v1871 = vpop.f32.mrb[0].mxu0
        %v1872 = vpop.f32.mrb[0].mxu0
        %v1873 = vpop.f32.mrb[0].mxu0
        %1874 = vdwg.mxu0
        %v1891 = vunpack.c.l.b16 %v1678
        %v1892 = vunpack.c.l.b16 %v1679
        %v1893 = vunpack.c.l.b16 %v1680
        %v1894 = vunpack.c.l.b16 %v1681
        %v1895 = vunpack.c.l.b16 %v1682
        %v1896 = vunpack.c.l.b16 %v1683
        %v1897 = vunpack.c.l.b16 %v1684
        %v1898 = vunpack.c.l.b16 %v1685
        %v1899 = vunpack.c.l.b16 %v1686
        %v1900 = vunpack.c.l.b16 %v1687
        %v1901 = vunpack.c.l.b16 %v1688
        %v1902 = vunpack.c.l.b16 %v1689
        %v1903 = vunpack.c.l.b16 %v1690
        %v1904 = vunpack.c.l.b16 %v1691
        %v1905 = vunpack.c.l.b16 %v1692
        %v1906 = vunpack.c.l.b16 %v1693
        %v1907 = vpack.c.b16 %v1892, %v1891
        %v1908 = vpack.c.b16 %v1894, %v1893
        %v1909 = vpack.c.b16 %v1896, %v1895
        %v1910 = vpack.c.b16 %v1898, %v1897
        %v1911 = vpack.c.b16 %v1900, %v1899
        %v1912 = vpack.c.b16 %v1902, %v1901
        %v1913 = vpack.c.b16 %v1904, %v1903
        %v1914 = vpack.c.b16 %v1906, %v1905
        %1923 = vmatprep.subr.bf16.mxu0 0
        %1924 = vmatpush1.bf16.msra.mxu0 %v1907
        %1925 = vmatprep.subr.bf16.mxu0 0
        %1926 = vmatpush1.bf16.msra.mxu0 %v1908
        %1927 = vmatprep.subr.bf16.mxu0 0
        %1928 = vmatpush1.bf16.msra.mxu0 %v1909
        %1929 = vmatprep.subr.bf16.mxu0 0
        %1930 = vmatpush1.bf16.msra.mxu0 %v1910
        %1931 = vmatprep.subr.bf16.mxu0 0
        %1932 = vmatpush1.bf16.msra.mxu0 %v1911
        %1933 = vmatprep.subr.bf16.mxu0 0
        %1934 = vmatpush1.bf16.msra.mxu0 %v1912
        %1935 = vmatprep.subr.bf16.mxu0 0
        %1936 = vmatpush1.bf16.msra.mxu0 %v1913
        %1937 = vmatprep.subr.bf16.mxu0 0
        %1938 = vmatpush1.bf16.msra.mxu0 %v1914
        %1939 = vmatprep.subr.bf16.mxu0 0
        %1940 = vmatpush1.bf16.msra.mxu0 0
        %1941 = vmatprep.subr.bf16.mxu0 0
        %1942 = vmatpush1.bf16.msra.mxu0 0
        %1943 = vmatprep.subr.bf16.mxu0 0
        %1944 = vmatpush1.bf16.msra.mxu0 0
        %1945 = vmatprep.subr.bf16.mxu0 0
        %1946 = vmatpush1.bf16.msra.mxu0 0
        %1947 = vmatprep.subr.bf16.mxu0 0
        %1948 = vmatpush1.bf16.msra.mxu0 0
        %1949 = vmatprep.subr.bf16.mxu0 0
        %1950 = vmatpush1.bf16.msra.mxu0 0
        %1951 = vmatprep.subr.bf16.mxu0 0
        %1952 = vmatpush1.bf16.msra.mxu0 0
        %1953 = vmatprep.subr.bf16.mxu0 0
        %1954 = vmatpush1.bf16.msra.mxu0 0
        %1955 = vmatprep.mubr.bf16.mxu0 0
        %1956 = vmatmul.mubr.bf16.gmra.mrb[0].mxu0 %v1677
        %v1957 = vpop.f32.mrb[0].mxu0
        %v1958 = vadd.f32 %v1870, %v1957
        %v1959 = vpop.f32.mrb[0].mxu0
        %v1960 = vpop.f32.mrb[0].mxu0
        %v1961 = vpop.f32.mrb[0].mxu0
        %1962 = vdwg.mxu0
        %s1963 = scalar_lea.vmem %s7, 4
        %v1964 = vld [vmem:[%s1963] sm:$0x3]
        %v1966 = vsel %vm1599, %v1964, 0
        %1968 = vmatprep.subr.mxu0 0.0
        %1969 = vmatpush1.msra.mxu0 %v1605
        %1970 = vmatprep.subr.mxu0 0.0
        %1971 = vmatpush1.msra.mxu0 0.0
        %1972 = vmatprep.subr.mxu0 0.0
        %1973 = vmatpush1.msra.mxu0 0.0
        %1974 = vmatprep.subr.mxu0 0.0
        %1975 = vmatpush1.msra.mxu0 0.0
        %1976 = vmatprep.subr.mxu0 0.0
        %1977 = vmatpush1.msra.mxu0 0.0
        %1978 = vmatprep.subr.mxu0 0.0
        %1979 = vmatpush1.msra.mxu0 0.0
        %1980 = vmatprep.subr.mxu0 0.0
        %1981 = vmatpush1.msra.mxu0 0.0
        %1982 = vmatprep.subr.mxu0 0.0
        %1983 = vmatpush1.msra.mxu0 0.0
        %1984 = vmatprep.subr.mxu0 0.0
        %1985 = vmatpush1.msra.mxu0 0.0
        %1986 = vmatprep.subr.mxu0 0.0
        %1987 = vmatpush1.msra.mxu0 0.0
        %1988 = vmatprep.subr.mxu0 0.0
        %1989 = vmatpush1.msra.mxu0 0.0
        %1990 = vmatprep.subr.mxu0 0.0
        %1991 = vmatpush1.msra.mxu0 0.0
        %1992 = vmatprep.subr.mxu0 0.0
        %1993 = vmatpush1.msra.mxu0 0.0
        %1994 = vmatprep.subr.mxu0 0.0
        %1995 = vmatpush1.msra.mxu0 0.0
        %1996 = vmatprep.subr.mxu0 0.0
        %1997 = vmatpush1.msra.mxu0 0.0
        %1998 = vmatprep.subr.mxu0 0.0
        %1999 = vmatpush1.msra.mxu0 0.0
        %2000 = vmatprep.subr.mxu0 0.0
        %2001 = vmatpush1.msra.mxu0 0.0
        %2002 = vmatprep.subr.mxu0 0.0
        %2003 = vmatpush1.msra.mxu0 0.0
        %2004 = vmatprep.subr.mxu0 0.0
        %2005 = vmatpush1.msra.mxu0 0.0
        %2006 = vmatprep.subr.mxu0 0.0
        %2007 = vmatpush1.msra.mxu0 0.0
        %2008 = vmatprep.subr.mxu0 0.0
        %2009 = vmatpush1.msra.mxu0 0.0
        %2010 = vmatprep.subr.mxu0 0.0
        %2011 = vmatpush1.msra.mxu0 0.0
        %2012 = vmatprep.subr.mxu0 0.0
        %2013 = vmatpush1.msra.mxu0 0.0
        %2014 = vmatprep.subr.mxu0 0.0
        %2015 = vmatpush1.msra.mxu0 0.0
        %2016 = vmatprep.subr.mxu0 0.0
        %2017 = vmatpush1.msra.mxu0 0.0
        %2018 = vmatprep.subr.mxu0 0.0
        %2019 = vmatpush1.msra.mxu0 0.0
        %2020 = vmatprep.subr.mxu0 0.0
        %2021 = vmatpush1.msra.mxu0 0.0
        %2022 = vmatprep.subr.mxu0 0.0
        %2023 = vmatpush1.msra.mxu0 0.0
        %2024 = vmatprep.subr.mxu0 0.0
        %2025 = vmatpush1.msra.mxu0 0.0
        %2026 = vmatprep.subr.mxu0 0.0
        %2027 = vmatpush1.msra.mxu0 0.0
        %2028 = vmatprep.subr.mxu0 0.0
        %2029 = vmatpush1.msra.mxu0 0.0
        %2030 = vmatprep.subr.mxu0 0.0
        %2031 = vmatpush1.msra.mxu0 0.0
        %2032 = vmatprep.mubr.f32.mxu0 0.0
        %2033 = vmatmul.mubr.f32.gmra.mrb[0].mxu0 %v1966
        %v2034 = vpop.f32.mrb[0].mxu0
        %v2035 = vadd.f32 0.0, %v2034
        %v2036 = vpop.f32.mrb[0].mxu0
        %2037 = vdwg.mxu0
        %v2038 = vpack.c.bf16 %v2035, %v2035
        %s2039 = scalar_lea.vmem %s8, 128
        %v2040 = vld [vmem:[%s2039] sm:$0xf]
        %v2041 = vld [vmem:[%s2039 + $0x4] sm:$0xf]
        %v2042 = vld [vmem:[%s2039 + $0x8] sm:$0xf]
        %v2043 = vld [vmem:[%s2039 + $0xc] sm:$0xf]
        %v2044 = vld [vmem:[%s2039 + $0x10] sm:$0xf]
        %v2045 = vld [vmem:[%s2039 + $0x14] sm:$0xf]
        %v2046 = vld [vmem:[%s2039 + $0x18] sm:$0xf]
        %v2047 = vld [vmem:[%s2039 + $0x1c] sm:$0xf]
        %v2048 = vld [vmem:[%s2039 + $0x20] sm:$0xf]
        %v2049 = vld [vmem:[%s2039 + $0x24] sm:$0xf]
        %v2050 = vld [vmem:[%s2039 + $0x28] sm:$0xf]
        %v2051 = vld [vmem:[%s2039 + $0x2c] sm:$0xf]
        %v2052 = vld [vmem:[%s2039 + $0x30] sm:$0xf]
        %v2053 = vld [vmem:[%s2039 + $0x34] sm:$0xf]
        %v2054 = vld [vmem:[%s2039 + $0x38] sm:$0xf]
        %v2055 = vld [vmem:[%s2039 + $0x3c] sm:$0xf]
        %v2072 = vunpack.c.l.b16 %v2040
        %v2073 = vunpack.c.l.b16 %v2041
        %v2074 = vunpack.c.l.b16 %v2042
        %v2075 = vunpack.c.l.b16 %v2043
        %v2076 = vunpack.c.l.b16 %v2044
        %v2077 = vunpack.c.l.b16 %v2045
        %v2078 = vunpack.c.l.b16 %v2046
        %v2079 = vunpack.c.l.b16 %v2047
        %v2080 = vunpack.c.l.b16 %v2048
        %v2081 = vunpack.c.l.b16 %v2049
        %v2082 = vunpack.c.l.b16 %v2050
        %v2083 = vunpack.c.l.b16 %v2051
        %v2084 = vunpack.c.l.b16 %v2052
        %v2085 = vunpack.c.l.b16 %v2053
        %v2086 = vunpack.c.l.b16 %v2054
        %v2087 = vunpack.c.l.b16 %v2055
        %v2088 = vpack.c.b16 %v2073, %v2072
        %v2089 = vpack.c.b16 %v2075, %v2074
        %v2090 = vpack.c.b16 %v2077, %v2076
        %v2091 = vpack.c.b16 %v2079, %v2078
        %v2092 = vpack.c.b16 %v2081, %v2080
        %v2093 = vpack.c.b16 %v2083, %v2082
        %v2094 = vpack.c.b16 %v2085, %v2084
        %v2095 = vpack.c.b16 %v2087, %v2086
        %2104 = vmatprep.subr.bf16.mxu0 0
        %2105 = vmatpush1.bf16.msra.mxu0 %v2088
        %2106 = vmatprep.subr.bf16.mxu0 0
        %2107 = vmatpush1.bf16.msra.mxu0 %v2089
        %2108 = vmatprep.subr.bf16.mxu0 0
        %2109 = vmatpush1.bf16.msra.mxu0 %v2090
        %2110 = vmatprep.subr.bf16.mxu0 0
        %2111 = vmatpush1.bf16.msra.mxu0 %v2091
        %2112 = vmatprep.subr.bf16.mxu0 0
        %2113 = vmatpush1.bf16.msra.mxu0 %v2092
        %2114 = vmatprep.subr.bf16.mxu0 0
        %2115 = vmatpush1.bf16.msra.mxu0 %v2093
        %2116 = vmatprep.subr.bf16.mxu0 0
        %2117 = vmatpush1.bf16.msra.mxu0 %v2094
        %2118 = vmatprep.subr.bf16.mxu0 0
        %2119 = vmatpush1.bf16.msra.mxu0 %v2095
        %2120 = vmatprep.subr.bf16.mxu0 0
        %2121 = vmatpush1.bf16.msra.mxu0 0
        %2122 = vmatprep.subr.bf16.mxu0 0
        %2123 = vmatpush1.bf16.msra.mxu0 0
        %2124 = vmatprep.subr.bf16.mxu0 0
        %2125 = vmatpush1.bf16.msra.mxu0 0
        %2126 = vmatprep.subr.bf16.mxu0 0
        %2127 = vmatpush1.bf16.msra.mxu0 0
        %2128 = vmatprep.subr.bf16.mxu0 0
        %2129 = vmatpush1.bf16.msra.mxu0 0
        %2130 = vmatprep.subr.bf16.mxu0 0
        %2131 = vmatpush1.bf16.msra.mxu0 0
        %2132 = vmatprep.subr.bf16.mxu0 0
        %2133 = vmatpush1.bf16.msra.mxu0 0
        %2134 = vmatprep.subr.bf16.mxu0 0
        %2135 = vmatpush1.bf16.msra.mxu0 0
        %2136 = vmatprep.mubr.bf16.mxu0 0
        %2137 = vmatmul.mubr.bf16.gmra.mrb[0].mxu0 %v2038
        %v2138 = vpop.f32.mrb[0].mxu0
        %v2139 = vadd.f32 0.0, %v2138
        %v2140 = vpop.f32.mrb[0].mxu0
        %v2141 = vpop.f32.mrb[0].mxu0
        %v2142 = vpop.f32.mrb[0].mxu0
        %2143 = vdwg.mxu0
        %v2144 = vadd.f32 %v1958, %v2139
        %v2145 = vld [vmem:[%s9] sm:$0x1]
        %v2147 = vlaneseq
        %v2148 = vshrl.u32 %v2147, 7
        %v2149 = vsub.s32 0, %v2148
        %v2150 = vrot.slane %v2145, %v2149
        %v2152 = vadd.f32 %v2144, %v2150
        %vm2153 = vcmp.ge.f32.partialorder %v2152, 0.0
        %v2154 = vmul.f32 %v2152, 0.2
        %v2155 = vsel %vm2153, %v2152, %v2154
        %s2156 = scalar_lea.vmem %s9, 1
        %v2157 = vld [vmem:[%s2156] sm:$0x1]
        %v2159 = vlaneseq
        %v2160 = vshrl.u32 %v2159, 7
        %v2161 = vsub.s32 0, %v2160
        %v2162 = vrot.slane %v2157, %v2161
        %v2164 = vmul.f32 %v2155, %v2162
        %s2165 = scalar_lea.vmem %s9, 2
        %v2166 = vld [vmem:[%s2165] sm:$0x1]
        %v2168 = vlaneseq
        %v2169 = vshrl.u32 %v2168, 7
        %v2170 = vsub.s32 0, %v2169
        %v2171 = vrot.slane %v2166, %v2170
        %v2173 = vadd.f32 %v2164, %v2171
        %v2174 = vld [vmem:[%s10] sm:$0x1]
        %vm2175 = vcmask 15360
        %v2177 = vsel %vm2175, %v2174, 0
        %vm2179 = vcmask 1041408
        %v2181 = vsel %vm2179, %v2173, 0
        %2183 = vmatprep.subr.mxu0 0.0
        %2184 = vmatpush1.msra.mxu0 %v2181
        %2185 = vmatprep.subr.mxu0 0.0
        %2186 = vmatpush1.msra.mxu0 0.0
        %2187 = vmatprep.subr.mxu0 0.0
        %2188 = vmatpush1.msra.mxu0 0.0
        %2189 = vmatprep.subr.mxu0 0.0
        %2190 = vmatpush1.msra.mxu0 0.0
        %2191 = vmatprep.subr.mxu0 0.0
        %2192 = vmatpush1.msra.mxu0 0.0
        %2193 = vmatprep.subr.mxu0 0.0
        %2194 = vmatpush1.msra.mxu0 0.0
        %2195 = vmatprep.subr.mxu0 0.0
        %2196 = vmatpush1.msra.mxu0 0.0
        %2197 = vmatprep.subr.mxu0 0.0
        %2198 = vmatpush1.msra.mxu0 0.0
        %2199 = vmatprep.subr.mxu0 0.0
        %2200 = vmatpush1.msra.mxu0 0.0
        %2201 = vmatprep.subr.mxu0 0.0
        %2202 = vmatpush1.msra.mxu0 0.0
        %2203 = vmatprep.subr.mxu0 0.0
        %2204 = vmatpush1.msra.mxu0 0.0
        %2205 = vmatprep.subr.mxu0 0.0
        %2206 = vmatpush1.msra.mxu0 0.0
        %2207 = vmatprep.subr.mxu0 0.0
        %2208 = vmatpush1.msra.mxu0 0.0
        %2209 = vmatprep.subr.mxu0 0.0
        %2210 = vmatpush1.msra.mxu0 0.0
        %2211 = vmatprep.subr.mxu0 0.0
        %2212 = vmatpush1.msra.mxu0 0.0
        %2213 = vmatprep.subr.mxu0 0.0
        %2214 = vmatpush1.msra.mxu0 0.0
        %2215 = vmatprep.subr.mxu0 0.0
        %2216 = vmatpush1.msra.mxu0 0.0
        %2217 = vmatprep.subr.mxu0 0.0
        %2218 = vmatpush1.msra.mxu0 0.0
        %2219 = vmatprep.subr.mxu0 0.0
        %2220 = vmatpush1.msra.mxu0 0.0
        %2221 = vmatprep.subr.mxu0 0.0
        %2222 = vmatpush1.msra.mxu0 0.0
        %2223 = vmatprep.subr.mxu0 0.0
        %2224 = vmatpush1.msra.mxu0 0.0
        %2225 = vmatprep.subr.mxu0 0.0
        %2226 = vmatpush1.msra.mxu0 0.0
        %2227 = vmatprep.subr.mxu0 0.0
        %2228 = vmatpush1.msra.mxu0 0.0
        %2229 = vmatprep.subr.mxu0 0.0
        %2230 = vmatpush1.msra.mxu0 0.0
        %2231 = vmatprep.subr.mxu0 0.0
        %2232 = vmatpush1.msra.mxu0 0.0
        %2233 = vmatprep.subr.mxu0 0.0
        %2234 = vmatpush1.msra.mxu0 0.0
        %2235 = vmatprep.subr.mxu0 0.0
        %2236 = vmatpush1.msra.mxu0 0.0
        %2237 = vmatprep.subr.mxu0 0.0
        %2238 = vmatpush1.msra.mxu0 0.0
        %2239 = vmatprep.subr.mxu0 0.0
        %2240 = vmatpush1.msra.mxu0 0.0
        %2241 = vmatprep.subr.mxu0 0.0
        %2242 = vmatpush1.msra.mxu0 0.0
        %2243 = vmatprep.subr.mxu0 0.0
        %2244 = vmatpush1.msra.mxu0 0.0
        %2245 = vmatprep.subr.mxu0 0.0
        %2246 = vmatpush1.msra.mxu0 0.0
        %2247 = vmatprep.mubr.f32.mxu0 0.0
        %2248 = vmatmul.mubr.f32.gmra.mrb[0].mxu0 %v2177
        %v2249 = vpop.f32.mrb[0].mxu0
        %v2250 = vadd.f32 0.0, %v2249
        %v2251 = vpop.f32.mrb[0].mxu0
        %2252 = vdwg.mxu0
        %v2253 = vpack.c.bf16 %v2250, %v2250
        %v2254 = vld [vmem:[#allocation5] sm:$0xf]
        %v2255 = vld [vmem:[#allocation5 + $0x4] sm:$0xf]
        %v2256 = vld [vmem:[#allocation5 + $0x8] sm:$0xf]
        %v2257 = vld [vmem:[#allocation5 + $0xc] sm:$0xf]
        %v2258 = vld [vmem:[#allocation5 + $0x10] sm:$0xf]
        %v2259 = vld [vmem:[#allocation5 + $0x14] sm:$0xf]
        %v2260 = vld [vmem:[#allocation5 + $0x18] sm:$0xf]
        %v2261 = vld [vmem:[#allocation5 + $0x1c] sm:$0xf]
        %v2262 = vld [vmem:[#allocation5 + $0x20] sm:$0xf]
        %v2263 = vld [vmem:[#allocation5 + $0x24] sm:$0xf]
        %v2264 = vld [vmem:[#allocation5 + $0x28] sm:$0xf]
        %v2265 = vld [vmem:[#allocation5 + $0x2c] sm:$0xf]
        %v2266 = vld [vmem:[#allocation5 + $0x30] sm:$0xf]
        %v2267 = vld [vmem:[#allocation5 + $0x34] sm:$0xf]
        %v2268 = vld [vmem:[#allocation5 + $0x38] sm:$0xf]
        %v2269 = vld [vmem:[#allocation5 + $0x3c] sm:$0xf]
        %s2270 = scalar_lea.vmem %s10, 1
        %v2271 = vld [vmem:[%s2270] sm:$0x1]
        %v2273 = vsel %vm2175, %v2271, 0
        %2275 = vmatprep.subr.mxu0 0.0
        %2276 = vmatpush1.msra.mxu0 %v2181
        %2277 = vmatprep.subr.mxu0 0.0
        %2278 = vmatpush1.msra.mxu0 0.0
        %2279 = vmatprep.subr.mxu0 0.0
        %2280 = vmatpush1.msra.mxu0 0.0
        %2281 = vmatprep.subr.mxu0 0.0
        %2282 = vmatpush1.msra.mxu0 0.0
        %2283 = vmatprep.subr.mxu0 0.0
        %2284 = vmatpush1.msra.mxu0 0.0
        %2285 = vmatprep.subr.mxu0 0.0
        %2286 = vmatpush1.msra.mxu0 0.0
        %2287 = vmatprep.subr.mxu0 0.0
        %2288 = vmatpush1.msra.mxu0 0.0
        %2289 = vmatprep.subr.mxu0 0.0
        %2290 = vmatpush1.msra.mxu0 0.0
        %2291 = vmatprep.subr.mxu0 0.0
        %2292 = vmatpush1.msra.mxu0 0.0
        %2293 = vmatprep.subr.mxu0 0.0
        %2294 = vmatpush1.msra.mxu0 0.0
        %2295 = vmatprep.subr.mxu0 0.0
        %2296 = vmatpush1.msra.mxu0 0.0
        %2297 = vmatprep.subr.mxu0 0.0
        %2298 = vmatpush1.msra.mxu0 0.0
        %2299 = vmatprep.subr.mxu0 0.0
        %2300 = vmatpush1.msra.mxu0 0.0
        %2301 = vmatprep.subr.mxu0 0.0
        %2302 = vmatpush1.msra.mxu0 0.0
        %2303 = vmatprep.subr.mxu0 0.0
        %2304 = vmatpush1.msra.mxu0 0.0
        %2305 = vmatprep.subr.mxu0 0.0
        %2306 = vmatpush1.msra.mxu0 0.0
        %2307 = vmatprep.subr.mxu0 0.0
        %2308 = vmatpush1.msra.mxu0 0.0
        %2309 = vmatprep.subr.mxu0 0.0
        %2310 = vmatpush1.msra.mxu0 0.0
        %2311 = vmatprep.subr.mxu0 0.0
        %2312 = vmatpush1.msra.mxu0 0.0
        %2313 = vmatprep.subr.mxu0 0.0
        %2314 = vmatpush1.msra.mxu0 0.0
        %2315 = vmatprep.subr.mxu0 0.0
        %2316 = vmatpush1.msra.mxu0 0.0
        %2317 = vmatprep.subr.mxu0 0.0
        %2318 = vmatpush1.msra.mxu0 0.0
        %2319 = vmatprep.subr.mxu0 0.0
        %2320 = vmatpush1.msra.mxu0 0.0
        %2321 = vmatprep.subr.mxu0 0.0
        %2322 = vmatpush1.msra.mxu0 0.0
        %2323 = vmatprep.subr.mxu0 0.0
        %2324 = vmatpush1.msra.mxu0 0.0
        %2325 = vmatprep.subr.mxu0 0.0
        %2326 = vmatpush1.msra.mxu0 0.0
        %2327 = vmatprep.subr.mxu0 0.0
        %2328 = vmatpush1.msra.mxu0 0.0
        %2329 = vmatprep.subr.mxu0 0.0
        %2330 = vmatpush1.msra.mxu0 0.0
        %2331 = vmatprep.subr.mxu0 0.0
        %2332 = vmatpush1.msra.mxu0 0.0
        %2333 = vmatprep.subr.mxu0 0.0
        %2334 = vmatpush1.msra.mxu0 0.0
        %2335 = vmatprep.subr.mxu0 0.0
        %2336 = vmatpush1.msra.mxu0 0.0
        %2337 = vmatprep.subr.mxu0 0.0
        %2338 = vmatpush1.msra.mxu0 0.0
        %2339 = vmatprep.mubr.f32.mxu0 0.0
        %2340 = vmatmul.mubr.f32.gmra.mrb[0].mxu0 %v2273
        %v2341 = vpop.f32.mrb[0].mxu0
        %v2342 = vadd.f32 0.0, %v2341
        %v2343 = vpop.f32.mrb[0].mxu0
        %2344 = vdwg.mxu0
        %v2345 = vpack.c.bf16 %v2342, %v2342
        %s2346 = scalar_lea.vmem [#allocation5], 64
        %v2347 = vld [vmem:[%s2346] sm:$0xf]
        %v2348 = vld [vmem:[%s2346 + $0x4] sm:$0xf]
        %v2349 = vld [vmem:[%s2346 + $0x8] sm:$0xf]
        %v2350 = vld [vmem:[%s2346 + $0xc] sm:$0xf]
        %v2351 = vld [vmem:[%s2346 + $0x10] sm:$0xf]
        %v2352 = vld [vmem:[%s2346 + $0x14] sm:$0xf]
        %v2353 = vld [vmem:[%s2346 + $0x18] sm:$0xf]
        %v2354 = vld [vmem:[%s2346 + $0x1c] sm:$0xf]
        %v2355 = vld [vmem:[%s2346 + $0x20] sm:$0xf]
        %v2356 = vld [vmem:[%s2346 + $0x24] sm:$0xf]
        %v2357 = vld [vmem:[%s2346 + $0x28] sm:$0xf]
        %v2358 = vld [vmem:[%s2346 + $0x2c] sm:$0xf]
        %v2359 = vld [vmem:[%s2346 + $0x30] sm:$0xf]
        %v2360 = vld [vmem:[%s2346 + $0x34] sm:$0xf]
        %v2361 = vld [vmem:[%s2346 + $0x38] sm:$0xf]
        %v2362 = vld [vmem:[%s2346 + $0x3c] sm:$0xf]
        %v2379 = vunpack.c.l.b16 %v2347
        %v2380 = vunpack.c.l.b16 %v2348
        %v2381 = vunpack.c.l.b16 %v2349
        %v2382 = vunpack.c.l.b16 %v2350
        %v2383 = vunpack.c.l.b16 %v2351
        %v2384 = vunpack.c.l.b16 %v2352
        %v2385 = vunpack.c.l.b16 %v2353
        %v2386 = vunpack.c.l.b16 %v2354
        %v2387 = vunpack.c.l.b16 %v2355
        %v2388 = vunpack.c.l.b16 %v2356
        %v2389 = vunpack.c.l.b16 %v2357
        %v2390 = vunpack.c.l.b16 %v2358
        %v2391 = vunpack.c.l.b16 %v2359
        %v2392 = vunpack.c.l.b16 %v2360
        %v2393 = vunpack.c.l.b16 %v2361
        %v2394 = vunpack.c.l.b16 %v2362
        %v2395 = vpack.c.b16 %v2380, %v2379
        %v2396 = vpack.c.b16 %v2382, %v2381
        %v2397 = vpack.c.b16 %v2384, %v2383
        %v2398 = vpack.c.b16 %v2386, %v2385
        %v2399 = vpack.c.b16 %v2388, %v2387
        %v2400 = vpack.c.b16 %v2390, %v2389
        %v2401 = vpack.c.b16 %v2392, %v2391
        %v2402 = vpack.c.b16 %v2394, %v2393
        %2411 = vmatprep.subr.bf16.mxu0 0
        %2412 = vmatpush1.bf16.msra.mxu0 %v2395
        %2413 = vmatprep.subr.bf16.mxu0 0
        %2414 = vmatpush1.bf16.msra.mxu0 %v2396
        %2415 = vmatprep.subr.bf16.mxu0 0
        %2416 = vmatpush1.bf16.msra.mxu0 %v2397
        %2417 = vmatprep.subr.bf16.mxu0 0
        %2418 = vmatpush1.bf16.msra.mxu0 %v2398
        %2419 = vmatprep.subr.bf16.mxu0 0
        %2420 = vmatpush1.bf16.msra.mxu0 %v2399
        %2421 = vmatprep.subr.bf16.mxu0 0
        %2422 = vmatpush1.bf16.msra.mxu0 %v2400
        %2423 = vmatprep.subr.bf16.mxu0 0
        %2424 = vmatpush1.bf16.msra.mxu0 %v2401
        %2425 = vmatprep.subr.bf16.mxu0 0
        %2426 = vmatpush1.bf16.msra.mxu0 %v2402
        %2427 = vmatprep.subr.bf16.mxu0 0
        %2428 = vmatpush1.bf16.msra.mxu0 0
        %2429 = vmatprep.subr.bf16.mxu0 0
        %2430 = vmatpush1.bf16.msra.mxu0 0
        %2431 = vmatprep.subr.bf16.mxu0 0
        %2432 = vmatpush1.bf16.msra.mxu0 0
        %2433 = vmatprep.subr.bf16.mxu0 0
        %2434 = vmatpush1.bf16.msra.mxu0 0
        %2435 = vmatprep.subr.bf16.mxu0 0
        %2436 = vmatpush1.bf16.msra.mxu0 0
        %2437 = vmatprep.subr.bf16.mxu0 0
        %2438 = vmatpush1.bf16.msra.mxu0 0
        %2439 = vmatprep.subr.bf16.mxu0 0
        %2440 = vmatpush1.bf16.msra.mxu0 0
        %2441 = vmatprep.subr.bf16.mxu0 0
        %2442 = vmatpush1.bf16.msra.mxu0 0
        %2443 = vmatprep.mubr.bf16.mxu0 0
        %2444 = vmatmul.mubr.bf16.gmra.mrb[0].mxu0 %v2345
        %v2445 = vpop.f32.mrb[0].mxu0
        %v2446 = vadd.f32 0.0, %v2445
        %v2447 = vpop.f32.mrb[0].mxu0
        %v2448 = vpop.f32.mrb[0].mxu0
        %v2449 = vpop.f32.mrb[0].mxu0
        %2450 = vdwg.mxu0
        %v2467 = vunpack.c.l.b16 %v2254
        %v2468 = vunpack.c.l.b16 %v2255
        %v2469 = vunpack.c.l.b16 %v2256
        %v2470 = vunpack.c.l.b16 %v2257
        %v2471 = vunpack.c.l.b16 %v2258
        %v2472 = vunpack.c.l.b16 %v2259
        %v2473 = vunpack.c.l.b16 %v2260
        %v2474 = vunpack.c.l.b16 %v2261
        %v2475 = vunpack.c.l.b16 %v2262
        %v2476 = vunpack.c.l.b16 %v2263
        %v2477 = vunpack.c.l.b16 %v2264
        %v2478 = vunpack.c.l.b16 %v2265
        %v2479 = vunpack.c.l.b16 %v2266
        %v2480 = vunpack.c.l.b16 %v2267
        %v2481 = vunpack.c.l.b16 %v2268
        %v2482 = vunpack.c.l.b16 %v2269
        %v2483 = vpack.c.b16 %v2468, %v2467
        %v2484 = vpack.c.b16 %v2470, %v2469
        %v2485 = vpack.c.b16 %v2472, %v2471
        %v2486 = vpack.c.b16 %v2474, %v2473
        %v2487 = vpack.c.b16 %v2476, %v2475
        %v2488 = vpack.c.b16 %v2478, %v2477
        %v2489 = vpack.c.b16 %v2480, %v2479
        %v2490 = vpack.c.b16 %v2482, %v2481
        %2499 = vmatprep.subr.bf16.mxu0 0
        %2500 = vmatpush1.bf16.msra.mxu0 %v2483
        %2501 = vmatprep.subr.bf16.mxu0 0
        %2502 = vmatpush1.bf16.msra.mxu0 %v2484
        %2503 = vmatprep.subr.bf16.mxu0 0
        %2504 = vmatpush1.bf16.msra.mxu0 %v2485
        %2505 = vmatprep.subr.bf16.mxu0 0
        %2506 = vmatpush1.bf16.msra.mxu0 %v2486
        %2507 = vmatprep.subr.bf16.mxu0 0
        %2508 = vmatpush1.bf16.msra.mxu0 %v2487
        %2509 = vmatprep.subr.bf16.mxu0 0
        %2510 = vmatpush1.bf16.msra.mxu0 %v2488
        %2511 = vmatprep.subr.bf16.mxu0 0
        %2512 = vmatpush1.bf16.msra.mxu0 %v2489
        %2513 = vmatprep.subr.bf16.mxu0 0
        %2514 = vmatpush1.bf16.msra.mxu0 %v2490
        %2515 = vmatprep.subr.bf16.mxu0 0
        %2516 = vmatpush1.bf16.msra.mxu0 0
        %2517 = vmatprep.subr.bf16.mxu0 0
        %2518 = vmatpush1.bf16.msra.mxu0 0
        %2519 = vmatprep.subr.bf16.mxu0 0
        %2520 = vmatpush1.bf16.msra.mxu0 0
        %2521 = vmatprep.subr.bf16.mxu0 0
        %2522 = vmatpush1.bf16.msra.mxu0 0
        %2523 = vmatprep.subr.bf16.mxu0 0
        %2524 = vmatpush1.bf16.msra.mxu0 0
        %2525 = vmatprep.subr.bf16.mxu0 0
        %2526 = vmatpush1.bf16.msra.mxu0 0
        %2527 = vmatprep.subr.bf16.mxu0 0
        %2528 = vmatpush1.bf16.msra.mxu0 0
        %2529 = vmatprep.subr.bf16.mxu0 0
        %2530 = vmatpush1.bf16.msra.mxu0 0
        %2531 = vmatprep.mubr.bf16.mxu0 0
        %2532 = vmatmul.mubr.bf16.gmra.mrb[0].mxu0 %v2253
        %v2533 = vpop.f32.mrb[0].mxu0
        %v2534 = vadd.f32 %v2446, %v2533
        %v2535 = vpop.f32.mrb[0].mxu0
        %v2536 = vpop.f32.mrb[0].mxu0
        %v2537 = vpop.f32.mrb[0].mxu0
        %2538 = vdwg.mxu0
        %s2539 = scalar_lea.vmem %s10, 2
        %v2540 = vld [vmem:[%s2539] sm:$0x1]
        %v2542 = vsel %vm2175, %v2540, 0
        %2544 = vmatprep.subr.mxu0 0.0
        %2545 = vmatpush1.msra.mxu0 %v2181
        %2546 = vmatprep.subr.mxu0 0.0
        %2547 = vmatpush1.msra.mxu0 0.0
        %2548 = vmatprep.subr.mxu0 0.0
        %2549 = vmatpush1.msra.mxu0 0.0
        %2550 = vmatprep.subr.mxu0 0.0
        %2551 = vmatpush1.msra.mxu0 0.0
        %2552 = vmatprep.subr.mxu0 0.0
        %2553 = vmatpush1.msra.mxu0 0.0
        %2554 = vmatprep.subr.mxu0 0.0
        %2555 = vmatpush1.msra.mxu0 0.0
        %2556 = vmatprep.subr.mxu0 0.0
        %2557 = vmatpush1.msra.mxu0 0.0
        %2558 = vmatprep.subr.mxu0 0.0
        %2559 = vmatpush1.msra.mxu0 0.0
        %2560 = vmatprep.subr.mxu0 0.0
        %2561 = vmatpush1.msra.mxu0 0.0
        %2562 = vmatprep.subr.mxu0 0.0
        %2563 = vmatpush1.msra.mxu0 0.0
        %2564 = vmatprep.subr.mxu0 0.0
        %2565 = vmatpush1.msra.mxu0 0.0
        %2566 = vmatprep.subr.mxu0 0.0
        %2567 = vmatpush1.msra.mxu0 0.0
        %2568 = vmatprep.subr.mxu0 0.0
        %2569 = vmatpush1.msra.mxu0 0.0
        %2570 = vmatprep.subr.mxu0 0.0
        %2571 = vmatpush1.msra.mxu0 0.0
        %2572 = vmatprep.subr.mxu0 0.0
        %2573 = vmatpush1.msra.mxu0 0.0
        %2574 = vmatprep.subr.mxu0 0.0
        %2575 = vmatpush1.msra.mxu0 0.0
        %2576 = vmatprep.subr.mxu0 0.0
        %2577 = vmatpush1.msra.mxu0 0.0
        %2578 = vmatprep.subr.mxu0 0.0
        %2579 = vmatpush1.msra.mxu0 0.0
        %2580 = vmatprep.subr.mxu0 0.0
        %2581 = vmatpush1.msra.mxu0 0.0
        %2582 = vmatprep.subr.mxu0 0.0
        %2583 = vmatpush1.msra.mxu0 0.0
        %2584 = vmatprep.subr.mxu0 0.0
        %2585 = vmatpush1.msra.mxu0 0.0
        %2586 = vmatprep.subr.mxu0 0.0
        %2587 = vmatpush1.msra.mxu0 0.0
        %2588 = vmatprep.subr.mxu0 0.0
        %2589 = vmatpush1.msra.mxu0 0.0
        %2590 = vmatprep.subr.mxu0 0.0
        %2591 = vmatpush1.msra.mxu0 0.0
        %2592 = vmatprep.subr.mxu0 0.0
        %2593 = vmatpush1.msra.mxu0 0.0
        %2594 = vmatprep.subr.mxu0 0.0
        %2595 = vmatpush1.msra.mxu0 0.0
        %2596 = vmatprep.subr.mxu0 0.0
        %2597 = vmatpush1.msra.mxu0 0.0
        %2598 = vmatprep.subr.mxu0 0.0
        %2599 = vmatpush1.msra.mxu0 0.0
        %2600 = vmatprep.subr.mxu0 0.0
        %2601 = vmatpush1.msra.mxu0 0.0
        %2602 = vmatprep.subr.mxu0 0.0
        %2603 = vmatpush1.msra.mxu0 0.0
        %2604 = vmatprep.subr.mxu0 0.0
        %2605 = vmatpush1.msra.mxu0 0.0
        %2606 = vmatprep.subr.mxu0 0.0
        %2607 = vmatpush1.msra.mxu0 0.0
        %2608 = vmatprep.mubr.f32.mxu0 0.0
        %2609 = vmatmul.mubr.f32.gmra.mrb[0].mxu0 %v2542
        %v2610 = vpop.f32.mrb[0].mxu0
        %v2611 = vadd.f32 0.0, %v2610
        %v2612 = vpop.f32.mrb[0].mxu0
        %2613 = vdwg.mxu0
        %v2614 = vpack.c.bf16 %v2611, %v2611
        %s2615 = scalar_lea.vmem [#allocation5], 128
        %v2616 = vld [vmem:[%s2615] sm:$0xf]
        %v2617 = vld [vmem:[%s2615 + $0x4] sm:$0xf]
        %v2618 = vld [vmem:[%s2615 + $0x8] sm:$0xf]
        %v2619 = vld [vmem:[%s2615 + $0xc] sm:$0xf]
        %v2620 = vld [vmem:[%s2615 + $0x10] sm:$0xf]
        %v2621 = vld [vmem:[%s2615 + $0x14] sm:$0xf]
        %v2622 = vld [vmem:[%s2615 + $0x18] sm:$0xf]
        %v2623 = vld [vmem:[%s2615 + $0x1c] sm:$0xf]
        %v2624 = vld [vmem:[%s2615 + $0x20] sm:$0xf]
        %v2625 = vld [vmem:[%s2615 + $0x24] sm:$0xf]
        %v2626 = vld [vmem:[%s2615 + $0x28] sm:$0xf]
        %v2627 = vld [vmem:[%s2615 + $0x2c] sm:$0xf]
        %v2628 = vld [vmem:[%s2615 + $0x30] sm:$0xf]
        %v2629 = vld [vmem:[%s2615 + $0x34] sm:$0xf]
        %v2630 = vld [vmem:[%s2615 + $0x38] sm:$0xf]
        %v2631 = vld [vmem:[%s2615 + $0x3c] sm:$0xf]
        %v2648 = vunpack.c.l.b16 %v2616
        %v2649 = vunpack.c.l.b16 %v2617
        %v2650 = vunpack.c.l.b16 %v2618
        %v2651 = vunpack.c.l.b16 %v2619
        %v2652 = vunpack.c.l.b16 %v2620
        %v2653 = vunpack.c.l.b16 %v2621
        %v2654 = vunpack.c.l.b16 %v2622
        %v2655 = vunpack.c.l.b16 %v2623
        %v2656 = vunpack.c.l.b16 %v2624
        %v2657 = vunpack.c.l.b16 %v2625
        %v2658 = vunpack.c.l.b16 %v2626
        %v2659 = vunpack.c.l.b16 %v2627
        %v2660 = vunpack.c.l.b16 %v2628
        %v2661 = vunpack.c.l.b16 %v2629
        %v2662 = vunpack.c.l.b16 %v2630
        %v2663 = vunpack.c.l.b16 %v2631
        %v2664 = vpack.c.b16 %v2649, %v2648
        %v2665 = vpack.c.b16 %v2651, %v2650
        %v2666 = vpack.c.b16 %v2653, %v2652
        %v2667 = vpack.c.b16 %v2655, %v2654
        %v2668 = vpack.c.b16 %v2657, %v2656
        %v2669 = vpack.c.b16 %v2659, %v2658
        %v2670 = vpack.c.b16 %v2661, %v2660
        %v2671 = vpack.c.b16 %v2663, %v2662
        %2680 = vmatprep.subr.bf16.mxu0 0
        %2681 = vmatpush1.bf16.msra.mxu0 %v2664
        %2682 = vmatprep.subr.bf16.mxu0 0
        %2683 = vmatpush1.bf16.msra.mxu0 %v2665
        %2684 = vmatprep.subr.bf16.mxu0 0
        %2685 = vmatpush1.bf16.msra.mxu0 %v2666
        %2686 = vmatprep.subr.bf16.mxu0 0
        %2687 = vmatpush1.bf16.msra.mxu0 %v2667
        %2688 = vmatprep.subr.bf16.mxu0 0
        %2689 = vmatpush1.bf16.msra.mxu0 %v2668
        %2690 = vmatprep.subr.bf16.mxu0 0
        %2691 = vmatpush1.bf16.msra.mxu0 %v2669
        %2692 = vmatprep.subr.bf16.mxu0 0
        %2693 = vmatpush1.bf16.msra.mxu0 %v2670
        %2694 = vmatprep.subr.bf16.mxu0 0
        %2695 = vmatpush1.bf16.msra.mxu0 %v2671
        %2696 = vmatprep.subr.bf16.mxu0 0
        %2697 = vmatpush1.bf16.msra.mxu0 0
        %2698 = vmatprep.subr.bf16.mxu0 0
        %2699 = vmatpush1.bf16.msra.mxu0 0
        %2700 = vmatprep.subr.bf16.mxu0 0
        %2701 = vmatpush1.bf16.msra.mxu0 0
        %2702 = vmatprep.subr.bf16.mxu0 0
        %2703 = vmatpush1.bf16.msra.mxu0 0
        %2704 = vmatprep.subr.bf16.mxu0 0
        %2705 = vmatpush1.bf16.msra.mxu0 0
        %2706 = vmatprep.subr.bf16.mxu0 0
        %2707 = vmatpush1.bf16.msra.mxu0 0
        %2708 = vmatprep.subr.bf16.mxu0 0
        %2709 = vmatpush1.bf16.msra.mxu0 0
        %2710 = vmatprep.subr.bf16.mxu0 0
        %2711 = vmatpush1.bf16.msra.mxu0 0
        %2712 = vmatprep.mubr.bf16.mxu0 0
        %2713 = vmatmul.mubr.bf16.gmra.mrb[0].mxu0 %v2614
        %v2714 = vpop.f32.mrb[0].mxu0
        %v2715 = vadd.f32 0.0, %v2714
        %v2716 = vpop.f32.mrb[0].mxu0
        %v2717 = vpop.f32.mrb[0].mxu0
        %v2718 = vpop.f32.mrb[0].mxu0
        %2719 = vdwg.mxu0
        %v2720 = vadd.f32 %v2534, %v2715
        %v2721 = vld [vmem:[#allocation7] sm:$0x1]
        %v2722 = vadd.f32 %v2720, %v2721
        %vm2723 = vcmp.ge.f32.partialorder %v2722, 0.0
        %v2724 = vmul.f32 %v2722, 0.2
        %v2725 = vsel %vm2723, %v2722, %v2724
        %s2726 = scalar_lea.vmem [#allocation7], 1
        %v2727 = vld [vmem:[%s2726] sm:$0x1]
        %v2728 = vmul.f32 %v2725, %v2727
        %s2729 = scalar_lea.vmem [#allocation7], 2
        %v2730 = vld [vmem:[%s2729] sm:$0x1]
        %v2731 = vadd.f32 %v2728, %v2730
        %v2732 = vld [vmem:[%s13] sm:$0x1]
        %v2733 = vmul.f32 %v2731, %v2732
        %vm2734 = vcmask 1040384
        %v2735 = vsel %vm2734, %v2733, 0.0
        %2736 = vadd.xlane.f32.xlu0 %v2735
        %v2737 = vpop.xlane.xlu0 %2736
        %v2738 = vadd.f32 %v2737, 0.0
        %v2739 = vld [vmem:[#allocation2] sm:$0x1]
        %v2740 = vadd.f32 %v2738, %v2739
        %v2741 = vsub.f32 0.0, %v2740
        %v2742 = vmul.f32 %v2741, 1.442695
        %v2743 = vpow.pop %v2742
        %v2744 = vadd.f32 %v2743, 1.0
        %v2745 = vrcp.pop %v2744
        %v2746 = vmul.f32 1.0, %v2745
        %vm2747 = vcmask 0
        %2748 = vst.msk [vmem:[%s536] sm:$0x1] %vm2747, %v2746
        %p2749 = scmp.lt.s32.totalorder %s30, 1
        %s2750 = scalar_select %p2749, %s30, 1
        %s2751 = scalar_lea.vmem %s15, %s2750
        // Predicated region
        $region93: #{discriminator_forward.1} parent=79 // pred_check
          %p2752 = pneg %p368
        $region94: #{discriminator_forward.1} parent=79 // pred_check_branch
          %2754 = sbr.rel (%p2752) target = $region96
        $region95: #{discriminator_forward.1} parent=79 // pred_region
          _
        $region96: #{discriminator_forward.1} parent=79 // pred_fallthru
          _
      $region80: #{discriminator_forward.1} parent=5 // pred_fallthru
        _
      %p2755 = scmp.le.s32.totalorder 2, %s25
      // Predicated region
      $region97: #{discriminator_forward.1} parent=5 // pred_check
        %p2756 = pneg %p2755
      $region98: #{discriminator_forward.1} parent=5 // pred_check_branch
        %2758 = sbr.rel (%p2756) target = $region100
      $region99: #{discriminator_forward.1} parent=5 // pred_region
        %s2759 = ssub.s32 %s25, 2
        // Predicated region
        $region101: #{discriminator_forward.1} parent=99 // pred_check
          %p2760 = pneg %p374
        $region102: #{discriminator_forward.1} parent=99 // pred_check_branch
          %2762 = sbr.rel (%p2760) target = $region104
        $region103: #{discriminator_forward.1} parent=99 // pred_region
          %p2763 = scmp.lt.s32.totalorder %s31, 1
          %s2764 = scalar_select %p2763, %s31, 1
          %s2765 = scalar_lea.vmem %s15, %s2764
        $region104: #{discriminator_forward.1} parent=99 // pred_fallthru
          _
      $region100: #{discriminator_forward.1} parent=5 // pred_fallthru
        _
    $region6: #{discriminator_forward.1} parent=1 // loop_footer
      %s29 = sadd.s32 1, %s25
    $region7: #{discriminator_forward.1} parent=1 // loop_footer_branch
      %24 = sbr.rel target = $region3
    $region8: #{discriminator_forward.1} parent=1 // loop_exit
      _
    %2766 = vsyncpa [#allocation4], 1
    %s2767 = scalar_lea.sflag [#allocation4], 1
    %2768 = vsyncpa %s2767, 1
    %2769 = vsyncpa [#allocation6], 1

</llo_original>
